<compile_context>
chip_gen: v7x
topology: tpu7x:2x2x1
jax: 0.10.0
libtpu: 0.0.40
codegen_flags: <defaults>
</compile_context>

<pallas_src>
import functools

import jax
import jax.numpy as jnp
from jax.experimental import pallas as pl
from jax.experimental.pallas import tpu as pltpu

LEAKY_SLOPE = 0.01   # nn.LeakyReLU default
GAT_SLOPE = 0.2      # GATConv internal LeakyReLU default
NEG_BIG = -1e30      # "no edge" attention bias


# ---------------------------------------------------------------------------
# Fused kernel: whole BotGAT_GCN_Ensemble forward
# ---------------------------------------------------------------------------
def _fused_kernel(
    # graph data
    feats_ref, att_bias_ref, adj_gcn_ref,
    # fused (both-branch) dense layers
    wproj_ref, bproj_ref, win_ref, bin_ref,
    # GAT layers (att_dst folded into augmented weight)
    wgat1_ref, asrc1_ref, mask1_ref, bgat1_ref,
    wgat2_ref, asrc2_ref, mask2_ref, bgat2_ref,
    # GCN layers
    wgcn1_ref, bgcn1_ref, wgcn2_ref, bgcn2_ref,
    # fused output dense + ensemble head (transposed)
    wout_ref, bout_ref, wens_ref, bens_ref,
    # output: [8, out_cols] — rows 0-1 GAT logits, rows 2-3 GCN logits
    o_ref,
    *, n_nodes, hidden, heads1, ch1, heads2, ch2, out_cols,
):
    f32 = jnp.float32
    bf16 = jnp.bfloat16

    feats = feats_ref[...]          # bf16 [N, Fpad]
    att_bias = att_bias_ref[...]    # f32  [N, N]  log(edge multiplicity) / -1e30
    adj_gcn = adj_gcn_ref[...]      # bf16 [N, N]  sym-normalized adjacency

    def dense(x, w_ref, b_ref):
        # y = leaky_relu(x @ W + b); bf16 MXU operands, f32 accumulation.
        y = jnp.dot(x.astype(bf16), w_ref[...], preferred_element_type=f32)
        y = y + b_ref[...]
        return jnp.where(y > 0, y, LEAKY_SLOPE * y)

    def gcn_conv(x, w_ref, b_ref):
        xw = jnp.dot(x.astype(bf16), w_ref[...], preferred_element_type=f32)
        agg = jnp.dot(adj_gcn, xw.astype(bf16), preferred_element_type=f32)
        return agg + b_ref[...]

    def gat_conv(x, waug_ref, asrc_ref, mask_ref, b_ref, heads, ch):
        hc = heads * ch
        # One augmented matmul gives both the per-head features and a_dst scores.
        xp_aug = jnp.dot(x.astype(bf16), waug_ref[...],
                         preferred_element_type=f32)          # [N, HC + H]
        xp = xp_aug[:, :hc]                                    # [N, HC]
        a_dst = xp_aug[:, hc:hc + heads]                       # [N, H]
        xp_b = xp.astype(bf16)
        # a_src in row orientation via an NT matmul (no transpose needed).
        a_src_t = jax.lax.dot_general(
            asrc_ref[...], xp_b, (((1,), (1,)), ((), ())),
            preferred_element_type=f32)                        # [H, N]
        out = None
        # TODO(synk): switch to lax.fori_loop once N grows past ~128 to bound
        # the live [N,N] temporaries (vreg pressure / spill traffic).
        for h in range(heads):                                 # static unroll
            z = a_dst[:, h:h + 1] + a_src_t[h:h + 1, :]        # [N, N]
            z = jnp.where(z > 0, z, GAT_SLOPE * z)             # LeakyReLU(0.2)
            z = z + att_bias                                   # mask + multiplicity in one add
            m = jnp.max(z, axis=1, keepdims=True)
            p = jnp.exp(z - m)
            alpha = p * pl.reciprocal(jnp.sum(p, axis=1, keepdims=True),
                                      approx=False)
            vals = (xp * mask_ref[h:h + 1, :]).astype(bf16)    # keep head-h columns
            msg = jnp.dot(alpha.astype(bf16), vals, preferred_element_type=f32)
            out = msg if out is None else out + msg
        return out + b_ref[...]

    # ---- fused per-feature projection + input layer (both branches at once) ----
    x = dense(feats, wproj_ref, bproj_ref)    # [N, 2H]: lanes 0..H-1 GAT, H..2H-1 GCN
    x = dense(x, win_ref, bin_ref)            # block-diagonal -> branches stay separate

    xg = x[:, :hidden]
    xc = x[:, hidden:]

    # ---- GAT branch ----
    xg = gat_conv(xg, wgat1_ref, asrc1_ref, mask1_ref, bgat1_ref, heads1, ch1)
    xg = gat_conv(xg, wgat2_ref, asrc2_ref, mask2_ref, bgat2_ref, heads2, ch2)

    # ---- GCN branch ----
    xc = gcn_conv(xc, wgcn1_ref, bgcn1_ref)
    xc = gcn_conv(xc, wgcn2_ref, bgcn2_ref)

    # ---- fused output layer (block-diagonal) ----
    x = dense(jnp.concatenate([xg, xc], axis=1), wout_ref, bout_ref)   # [N, 2H]

    # ---- ensemble head: one transposed dot, lane-dense full-block store ----
    if out_cols > n_nodes:
        x = jnp.concatenate(
            [x, jnp.zeros((out_cols - n_nodes, x.shape[1]), f32)], axis=0)
    logits_t = jax.lax.dot_general(
        wens_ref[...], x.astype(bf16), (((1,), (1,)), ((), ())),
        preferred_element_type=f32) + bens_ref[...]                    # [8, out_cols]
    o_ref[...] = logits_t


# ---------------------------------------------------------------------------
# Host glue: dense graph matrices from edge_index (PyG conventions)
# ---------------------------------------------------------------------------
def build_graph_matrices(edge_index, num_nodes):
    src = edge_index[0]
    dst = edge_index[1]
    eye = jnp.eye(num_nodes, dtype=jnp.float32)
    a = jnp.zeros((num_nodes, num_nodes), jnp.float32).at[dst, src].add(1.0)
    self_cnt = jnp.diagonal(a)               # existing self-loop multiplicity
    a_off = a * (1.0 - eye)

    # GAT (PyG default): remove self loops, add exactly one per node; fold the
    # edge-multiplicity softmax weight into a log-bias (NEG_BIG == no edge).
    a_gat = a_off + eye
    att_bias = jnp.where(a_gat > 0, jnp.log(jnp.where(a_gat > 0, a_gat, 1.0)),
                         NEG_BIG)

    # GCN: add_remaining_self_loops keeps existing self-loop multiplicity and
    # adds weight-1 loops only where missing; then D^-1/2 A_hat D^-1/2.
    a_gcn = a_off + jnp.diag(jnp.where(self_cnt > 0, self_cnt, 1.0))
    deg = a_gcn.sum(axis=1)
    dinv = jax.lax.rsqrt(deg)
    adj_gcn = a_gcn * dinv[:, None] * dinv[None, :]
    return att_bias, adj_gcn


# ---------------------------------------------------------------------------
# Synthetic parameter construction (deterministic), pre-fused for the kernel
# ---------------------------------------------------------------------------
def init_params(key, hidden_dim, des_size=768, tweet_size=768,
                num_prop_size=5, cat_prop_size=3):
    h = hidden_dim
    h4 = h // 4
    feat_sizes = (des_size, tweet_size, num_prop_size, cat_prop_size)
    f_total = sum(feat_sizes)
    f_pad = ((f_total + 127) // 128) * 128
    keys = iter(jax.random.split(key, 64))

    def nrm(shape, scale):
        return jax.random.normal(next(keys), shape, jnp.float32) * scale

    def branch_proj():
        # Four Linear(f_i, h/4) layers fused into one block-diagonal [f_pad, h].
        w = jnp.zeros((f_pad, h), jnp.float32)
        row = 0
        for i, f in enumerate(feat_sizes):
            w = w.at[row:row + f, i * h4:(i + 1) * h4].set(nrm((f, h4), 0.05))
            row += f
        return w, nrm((1, h), 0.01)

    # both branches' projections fused along the output axis -> [f_pad, 2h]
    wp_g, bp_g = branch_proj()
    wp_c, bp_c = branch_proj()
    wproj = jnp.concatenate([wp_g, wp_c], axis=1).astype(jnp.bfloat16)
    bproj = jnp.concatenate([bp_g, bp_c], axis=1)

    def blockdiag_pair():
        # blockdiag(W_gat, W_gcn): one [2h, 2h] matmul serves both branches.
        w = jnp.zeros((2 * h, 2 * h), jnp.float32)
        w = w.at[:h, :h].set(nrm((h, h), 0.1))
        w = w.at[h:, h:].set(nrm((h, h), 0.1))
        b = jnp.concatenate([nrm((1, h), 0.01), nrm((1, h), 0.01)], axis=1)
        return w.astype(jnp.bfloat16), b

    win_blk, bin_blk = blockdiag_pair()     # linear_relu_input(_gcn)
    wout_blk, bout_blk = blockdiag_pair()   # linear_relu_output1(_gcn)

    def gat_params(heads, ch):
        hc = heads * ch
        w = nrm((h, hc), 0.1)
        a_src = nrm((heads, ch), 0.1)
        a_dst = nrm((heads, ch), 0.1)
        a_dst_mat = jnp.zeros((hc, heads), jnp.float32)   # col h = head-h att_dst
        asrc_sel = jnp.zeros((heads, hc), jnp.float32)    # row h = head-h att_src
        mask = jnp.zeros((heads, hc), jnp.float32)        # head-column selector
        for i in range(heads):
            a_dst_mat = a_dst_mat.at[i * ch:(i + 1) * ch, i].set(a_dst[i])
            asrc_sel = asrc_sel.at[i, i * ch:(i + 1) * ch].set(a_src[i])
            mask = mask.at[i, i * ch:(i + 1) * ch].set(1.0)
        # fold att_dst into the layer matmul: augmented columns W @ A_dst
        w_aug = jnp.concatenate([w, w @ a_dst_mat], axis=1).astype(jnp.bfloat16)
        return w_aug, asrc_sel.astype(jnp.bfloat16), mask, nrm((1, hc), 0.01)

    def lin():
        return nrm((h, h), 0.1).astype(jnp.bfloat16), nrm((1, h), 0.01)

    def ens_params():
        # Transposed ensemble head: rows 0-1 read the GAT lanes, rows 2-3 the
        # GCN lanes, so one NT dot yields both branches' logits as [8, N].
        w = nrm((h, 2), 0.1)
        b = nrm((1, 2), 0.01)
        wt = jnp.zeros((8, 2 * h), jnp.float32)
        wt = wt.at[0:2, :h].set(w.T)
        wt = wt.at[2:4, h:].set(w.T)
        bt = jnp.zeros((8, 1), jnp.float32)
        bt = bt.at[0:2, 0].set(b[0])
        bt = bt.at[2:4, 0].set(b[0])
        return wt.astype(jnp.bfloat16), bt

    return {
        "proj": (wproj, bproj),
        "in": (win_blk, bin_blk),
        "gat1": gat_params(4, h4),            # GATConv(hidden, hidden//4, heads=4)
        "gat2": gat_params(1, h),             # GATConv(hidden, hidden)
        "gcn1": lin(),
        "gcn2": lin(),
        "out": (wout_blk, bout_blk),
        "ens": ens_params(),
    }


# ---------------------------------------------------------------------------
# Forward
# ---------------------------------------------------------------------------
def botgat_gcn_ensemble_forward(params, des, tweet, num_prop, cat_prop,
                                edge_index, edge_type=None):
    del edge_type  # unused by the reference forward
    n = des.shape[0]
    hidden = params["gcn1"][0].shape[0]
    heads1, ch1 = 4, hidden // 4
    heads2, ch2 = 1, hidden
    out_cols = ((n + 127) // 128) * 128

    # Concatenate raw features once; zero-pad to a 128-lane multiple (bf16 MXU feed).
    feats = jnp.concatenate([des, tweet, num_prop, cat_prop], axis=1)
    f_pad = params["proj"][0].shape[0]
    feats = jnp.pad(feats, ((0, 0), (0, f_pad - feats.shape[1]))).astype(jnp.bfloat16)

    att_bias, adj_gcn = build_graph_matrices(edge_index, n)
    adj_gcn = adj_gcn.astype(jnp.bfloat16)

    args = (
        feats, att_bias, adj_gcn,
        *params["proj"], *params["in"],
        *params["gat1"], *params["gat2"],
        *params["gcn1"], *params["gcn2"],
        *params["out"], *params["ens"],
    )

    vmem = pl.BlockSpec(memory_space=pltpu.MemorySpace.VMEM)
    out_t = pl.pallas_call(
        functools.partial(_fused_kernel, n_nodes=n, hidden=hidden,
                          heads1=heads1, ch1=ch1, heads2=heads2, ch2=ch2,
                          out_cols=out_cols),
        out_shape=jax.ShapeDtypeStruct((8, out_cols), jnp.float32),
        in_specs=[vmem] * len(args),
        out_specs=vmem,
        # ~1 MiB actual use at N=64; 16 MiB leaves growth headroom and is well
        # inside v7x's 64 MiB physical VMEM (and v5e/v6e's 128 MiB).
        compiler_params=pltpu.CompilerParams(vmem_limit_bytes=16 * 1024 * 1024),
    )(*args)

    # rows 0-1: GAT-branch class logits, rows 2-3: GCN-branch -> [2N, 2]
    gat_logits = out_t[0:2, :n].T
    gcn_logits = out_t[2:4, :n].T
    return jnp.concatenate([gat_logits, gcn_logits], axis=0)


if __name__ == "__main__":
    N_NODES = 64
    N_EDGES = 128
    HIDDEN = 32
    DES_SIZE = 768
    TWEET_SIZE = 768
    NUM_PROP_SIZE = 5
    CAT_PROP_SIZE = 3

    key = jax.random.PRNGKey(0)
    k_des, k_tw, k_np, k_cp, k_src, k_dst, k_par = jax.random.split(key, 7)

    des = jax.random.normal(k_des, (N_NODES, DES_SIZE), jnp.float32)
    tweet = jax.random.normal(k_tw, (N_NODES, TWEET_SIZE), jnp.float32)
    num_prop = jax.random.normal(k_np, (N_NODES, NUM_PROP_SIZE), jnp.float32)
    cat_prop = jax.random.normal(k_cp, (N_NODES, CAT_PROP_SIZE), jnp.float32)
    edge_index = jnp.stack([
        jax.random.randint(k_src, (N_EDGES,), 0, N_NODES),
        jax.random.randint(k_dst, (N_EDGES,), 0, N_NODES),
    ], axis=0).astype(jnp.int32)

    params = init_params(k_par, HIDDEN, DES_SIZE, TWEET_SIZE,
                         NUM_PROP_SIZE, CAT_PROP_SIZE)

    out = botgat_gcn_ensemble_forward(params, des, tweet, num_prop, cat_prop, edge_index)
    out = jax.block_until_ready(out)
    assert out.shape == (2 * N_NODES, 2)
    assert bool(jnp.all(jnp.isfinite(out)))
    print("KERNEL_OK")
</pallas_src>

<mosaic_0001>
module attributes {stable_mosaic.version = 11 : i64} {
  func.func @_fused_kernel(%arg0: memref<64x1664xbf16, #tpu.memory_space<vmem>>, %arg1: memref<64x64xf32, #tpu.memory_space<vmem>>, %arg2: memref<64x64xbf16, #tpu.memory_space<vmem>>, %arg3: memref<1664x64xbf16, #tpu.memory_space<vmem>>, %arg4: memref<1x64xf32, #tpu.memory_space<vmem>>, %arg5: memref<64x64xbf16, #tpu.memory_space<vmem>>, %arg6: memref<1x64xf32, #tpu.memory_space<vmem>>, %arg7: memref<32x36xbf16, #tpu.memory_space<vmem>>, %arg8: memref<4x32xbf16, #tpu.memory_space<vmem>>, %arg9: memref<4x32xf32, #tpu.memory_space<vmem>>, %arg10: memref<1x32xf32, #tpu.memory_space<vmem>>, %arg11: memref<32x33xbf16, #tpu.memory_space<vmem>>, %arg12: memref<1x32xbf16, #tpu.memory_space<vmem>>, %arg13: memref<1x32xf32, #tpu.memory_space<vmem>>, %arg14: memref<1x32xf32, #tpu.memory_space<vmem>>, %arg15: memref<32x32xbf16, #tpu.memory_space<vmem>>, %arg16: memref<1x32xf32, #tpu.memory_space<vmem>>, %arg17: memref<32x32xbf16, #tpu.memory_space<vmem>>, %arg18: memref<1x32xf32, #tpu.memory_space<vmem>>, %arg19: memref<64x64xbf16, #tpu.memory_space<vmem>>, %arg20: memref<1x64xf32, #tpu.memory_space<vmem>>, %arg21: memref<8x64xbf16, #tpu.memory_space<vmem>>, %arg22: memref<8x1xf32, #tpu.memory_space<vmem>>, %arg23: memref<8x128xf32, #tpu.memory_space<vmem>>) attributes {dimension_semantics = [], scalar_prefetch = 0 : i64, scratch_operands = 0 : i64, tpu.core_type = #tpu.core_type<tc>} {
    %c0 = arith.constant 0 : index
    %c0_0 = arith.constant 0 : index
    %0 = vector.load %arg0[%c0, %c0_0] : memref<64x1664xbf16, #tpu.memory_space<vmem>>, vector<64x1664xbf16>
    %c0_1 = arith.constant 0 : index
    %c0_2 = arith.constant 0 : index
    %1 = vector.load %arg1[%c0_1, %c0_2] : memref<64x64xf32, #tpu.memory_space<vmem>>, vector<64x64xf32>
    %c0_3 = arith.constant 0 : index
    %c0_4 = arith.constant 0 : index
    %2 = vector.load %arg2[%c0_3, %c0_4] : memref<64x64xbf16, #tpu.memory_space<vmem>>, vector<64x64xbf16>
    %c0_5 = arith.constant 0 : index
    %c0_6 = arith.constant 0 : index
    %3 = vector.load %arg3[%c0_5, %c0_6] : memref<1664x64xbf16, #tpu.memory_space<vmem>>, vector<1664x64xbf16>
    %cst = arith.constant dense<0.000000e+00> : vector<64x64xf32>
    %4 = tpu.matmul %0, %3, %cst {dimension_numbers = #tpu.dot_dimension_numbers<[1], [0], [0], [1], [0, 0, 1, 1], [], []>} : vector<64x1664xbf16>, vector<1664x64xbf16>, vector<64x64xf32> -> vector<64x64xf32>
    %c0_7 = arith.constant 0 : index
    %c0_8 = arith.constant 0 : index
    %5 = vector.load %arg4[%c0_7, %c0_8] : memref<1x64xf32, #tpu.memory_space<vmem>>, vector<1x64xf32>
    %6 = vector.broadcast %5 : vector<1x64xf32> to vector<64x64xf32>
    %7 = arith.addf %4, %6 : vector<64x64xf32>
    %cst_9 = arith.constant 0.000000e+00 : f32
    %8 = vector.broadcast %cst_9 : f32 to vector<64x64xf32>
    %9 = arith.cmpf ogt, %7, %8 : vector<64x64xf32>
    %cst_10 = arith.constant 0.00999999977 : f32
    %10 = vector.broadcast %cst_10 : f32 to vector<64x64xf32>
    %11 = arith.mulf %10, %7 : vector<64x64xf32>
    %12 = arith.select %9, %7, %11 : vector<64x64xi1>, vector<64x64xf32>
    %13 = arith.truncf %12 : vector<64x64xf32> to vector<64x64xbf16>
    %c0_11 = arith.constant 0 : index
    %c0_12 = arith.constant 0 : index
    %14 = vector.load %arg5[%c0_11, %c0_12] : memref<64x64xbf16, #tpu.memory_space<vmem>>, vector<64x64xbf16>
    %cst_13 = arith.constant dense<0.000000e+00> : vector<64x64xf32>
    %15 = tpu.matmul %13, %14, %cst_13 {dimension_numbers = #tpu.dot_dimension_numbers<[1], [0], [0], [1], [0, 0, 1, 1], [], []>} : vector<64x64xbf16>, vector<64x64xbf16>, vector<64x64xf32> -> vector<64x64xf32>
    %c0_14 = arith.constant 0 : index
    %c0_15 = arith.constant 0 : index
    %16 = vector.load %arg6[%c0_14, %c0_15] : memref<1x64xf32, #tpu.memory_space<vmem>>, vector<1x64xf32>
    %17 = vector.broadcast %16 : vector<1x64xf32> to vector<64x64xf32>
    %18 = arith.addf %15, %17 : vector<64x64xf32>
    %cst_16 = arith.constant 0.000000e+00 : f32
    %19 = vector.broadcast %cst_16 : f32 to vector<64x64xf32>
    %20 = arith.cmpf ogt, %18, %19 : vector<64x64xf32>
    %cst_17 = arith.constant 0.00999999977 : f32
    %21 = vector.broadcast %cst_17 : f32 to vector<64x64xf32>
    %22 = arith.mulf %21, %18 : vector<64x64xf32>
    %23 = arith.select %20, %18, %22 : vector<64x64xi1>, vector<64x64xf32>
    %24 = vector.extract_strided_slice %23 {offsets = [0, 0], sizes = [64, 32], strides = [1, 1]} : vector<64x64xf32> to vector<64x32xf32>
    %25 = vector.extract_strided_slice %23 {offsets = [0, 32], sizes = [64, 32], strides = [1, 1]} : vector<64x64xf32> to vector<64x32xf32>
    %26 = arith.truncf %24 : vector<64x32xf32> to vector<64x32xbf16>
    %c0_18 = arith.constant 0 : index
    %c0_19 = arith.constant 0 : index
    %27 = vector.load %arg7[%c0_18, %c0_19] : memref<32x36xbf16, #tpu.memory_space<vmem>>, vector<32x36xbf16>
    %cst_20 = arith.constant dense<0.000000e+00> : vector<64x36xf32>
    %28 = tpu.matmul %26, %27, %cst_20 {dimension_numbers = #tpu.dot_dimension_numbers<[1], [0], [0], [1], [0, 0, 1, 1], [], []>} : vector<64x32xbf16>, vector<32x36xbf16>, vector<64x36xf32> -> vector<64x36xf32>
    %29 = vector.extract_strided_slice %28 {offsets = [0, 0], sizes = [64, 32], strides = [1, 1]} : vector<64x36xf32> to vector<64x32xf32>
    %30 = vector.extract_strided_slice %28 {offsets = [0, 32], sizes = [64, 4], strides = [1, 1]} : vector<64x36xf32> to vector<64x4xf32>
    %31 = arith.truncf %29 : vector<64x32xf32> to vector<64x32xbf16>
    %c0_21 = arith.constant 0 : index
    %c0_22 = arith.constant 0 : index
    %32 = vector.load %arg8[%c0_21, %c0_22] : memref<4x32xbf16, #tpu.memory_space<vmem>>, vector<4x32xbf16>
    %cst_23 = arith.constant dense<0.000000e+00> : vector<4x64xf32>
    %33 = tpu.matmul %32, %31, %cst_23 {dimension_numbers = #tpu.dot_dimension_numbers<[1], [1], [0], [0], [0, 0, 1, 0], [], []>} : vector<4x32xbf16>, vector<64x32xbf16>, vector<4x64xf32> -> vector<4x64xf32>
    %34 = vector.extract_strided_slice %30 {offsets = [0, 0], sizes = [64, 1], strides = [1, 1]} : vector<64x4xf32> to vector<64x1xf32>
    %35 = vector.extract_strided_slice %33 {offsets = [0, 0], sizes = [1, 64], strides = [1, 1]} : vector<4x64xf32> to vector<1x64xf32>
    %36 = vector.broadcast %34 : vector<64x1xf32> to vector<64x64xf32>
    %37 = vector.broadcast %35 : vector<1x64xf32> to vector<64x64xf32>
    %38 = arith.addf %36, %37 : vector<64x64xf32>
    %cst_24 = arith.constant 0.000000e+00 : f32
    %39 = vector.broadcast %cst_24 : f32 to vector<64x64xf32>
    %40 = arith.cmpf ogt, %38, %39 : vector<64x64xf32>
    %cst_25 = arith.constant 2.000000e-01 : f32
    %41 = vector.broadcast %cst_25 : f32 to vector<64x64xf32>
    %42 = arith.mulf %41, %38 : vector<64x64xf32>
    %43 = arith.select %40, %38, %42 : vector<64x64xi1>, vector<64x64xf32>
    %44 = arith.addf %43, %1 : vector<64x64xf32>
    %cst_26 = arith.constant dense<0xFF800000> : vector<64xf32>
    %45 = vector.multi_reduction <maximumf>, %44, %cst_26 [1] : vector<64x64xf32> to vector<64xf32>
    %46 = vector.shape_cast %45 : vector<64xf32> to vector<64x1xf32>
    %47 = vector.broadcast %46 : vector<64x1xf32> to vector<64x64xf32>
    %48 = arith.subf %44, %47 : vector<64x64xf32>
    %49 = math.exp %48 : vector<64x64xf32>
    %cst_27 = arith.constant dense<0.000000e+00> : vector<64xf32>
    %50 = vector.multi_reduction <add>, %49, %cst_27 [1] : vector<64x64xf32> to vector<64xf32>
    %51 = vector.shape_cast %50 : vector<64xf32> to vector<64x1xf32>
    %52 = tpu.reciprocal %51 : vector<64x1xf32> -> vector<64x1xf32>
    %53 = vector.broadcast %52 : vector<64x1xf32> to vector<64x64xf32>
    %54 = arith.mulf %49, %53 : vector<64x64xf32>
    %c0_28 = arith.constant 0 : index
    %c0_29 = arith.constant 0 : index
    %55 = vector.load %arg9[%c0_28, %c0_29] : memref<4x32xf32, #tpu.memory_space<vmem>>, vector<1x32xf32>
    %56 = vector.broadcast %55 : vector<1x32xf32> to vector<64x32xf32>
    %57 = arith.mulf %29, %56 : vector<64x32xf32>
    %58 = arith.truncf %57 : vector<64x32xf32> to vector<64x32xbf16>
    %59 = arith.truncf %54 : vector<64x64xf32> to vector<64x64xbf16>
    %cst_30 = arith.constant dense<0.000000e+00> : vector<64x32xf32>
    %60 = tpu.matmul %59, %58, %cst_30 {dimension_numbers = #tpu.dot_dimension_numbers<[1], [0], [0], [1], [0, 0, 1, 1], [], []>} : vector<64x64xbf16>, vector<64x32xbf16>, vector<64x32xf32> -> vector<64x32xf32>
    %61 = vector.extract_strided_slice %30 {offsets = [0, 1], sizes = [64, 1], strides = [1, 1]} : vector<64x4xf32> to vector<64x1xf32>
    %62 = vector.extract_strided_slice %33 {offsets = [1, 0], sizes = [1, 64], strides = [1, 1]} : vector<4x64xf32> to vector<1x64xf32>
    %63 = vector.broadcast %61 : vector<64x1xf32> to vector<64x64xf32>
    %64 = vector.broadcast %62 : vector<1x64xf32> to vector<64x64xf32>
    %65 = arith.addf %63, %64 : vector<64x64xf32>
    %cst_31 = arith.constant 0.000000e+00 : f32
    %66 = vector.broadcast %cst_31 : f32 to vector<64x64xf32>
    %67 = arith.cmpf ogt, %65, %66 : vector<64x64xf32>
    %cst_32 = arith.constant 2.000000e-01 : f32
    %68 = vector.broadcast %cst_32 : f32 to vector<64x64xf32>
    %69 = arith.mulf %68, %65 : vector<64x64xf32>
    %70 = arith.select %67, %65, %69 : vector<64x64xi1>, vector<64x64xf32>
    %71 = arith.addf %70, %1 : vector<64x64xf32>
    %cst_33 = arith.constant dense<0xFF800000> : vector<64xf32>
    %72 = vector.multi_reduction <maximumf>, %71, %cst_33 [1] : vector<64x64xf32> to vector<64xf32>
    %73 = vector.shape_cast %72 : vector<64xf32> to vector<64x1xf32>
    %74 = vector.broadcast %73 : vector<64x1xf32> to vector<64x64xf32>
    %75 = arith.subf %71, %74 : vector<64x64xf32>
    %76 = math.exp %75 : vector<64x64xf32>
    %cst_34 = arith.constant dense<0.000000e+00> : vector<64xf32>
    %77 = vector.multi_reduction <add>, %76, %cst_34 [1] : vector<64x64xf32> to vector<64xf32>
    %78 = vector.shape_cast %77 : vector<64xf32> to vector<64x1xf32>
    %79 = tpu.reciprocal %78 : vector<64x1xf32> -> vector<64x1xf32>
    %80 = vector.broadcast %79 : vector<64x1xf32> to vector<64x64xf32>
    %81 = arith.mulf %76, %80 : vector<64x64xf32>
    %c1 = arith.constant 1 : index
    %c0_35 = arith.constant 0 : index
    %82 = vector.load %arg9[%c1, %c0_35] : memref<4x32xf32, #tpu.memory_space<vmem>>, vector<1x32xf32>
    %83 = vector.broadcast %82 : vector<1x32xf32> to vector<64x32xf32>
    %84 = arith.mulf %29, %83 : vector<64x32xf32>
    %85 = arith.truncf %84 : vector<64x32xf32> to vector<64x32xbf16>
    %86 = arith.truncf %81 : vector<64x64xf32> to vector<64x64xbf16>
    %cst_36 = arith.constant dense<0.000000e+00> : vector<64x32xf32>
    %87 = tpu.matmul %86, %85, %cst_36 {dimension_numbers = #tpu.dot_dimension_numbers<[1], [0], [0], [1], [0, 0, 1, 1], [], []>} : vector<64x64xbf16>, vector<64x32xbf16>, vector<64x32xf32> -> vector<64x32xf32>
    %88 = arith.addf %60, %87 : vector<64x32xf32>
    %89 = vector.extract_strided_slice %30 {offsets = [0, 2], sizes = [64, 1], strides = [1, 1]} : vector<64x4xf32> to vector<64x1xf32>
    %90 = vector.extract_strided_slice %33 {offsets = [2, 0], sizes = [1, 64], strides = [1, 1]} : vector<4x64xf32> to vector<1x64xf32>
    %91 = vector.broadcast %89 : vector<64x1xf32> to vector<64x64xf32>
    %92 = vector.broadcast %90 : vector<1x64xf32> to vector<64x64xf32>
    %93 = arith.addf %91, %92 : vector<64x64xf32>
    %cst_37 = arith.constant 0.000000e+00 : f32
    %94 = vector.broadcast %cst_37 : f32 to vector<64x64xf32>
    %95 = arith.cmpf ogt, %93, %94 : vector<64x64xf32>
    %cst_38 = arith.constant 2.000000e-01 : f32
    %96 = vector.broadcast %cst_38 : f32 to vector<64x64xf32>
    %97 = arith.mulf %96, %93 : vector<64x64xf32>
    %98 = arith.select %95, %93, %97 : vector<64x64xi1>, vector<64x64xf32>
    %99 = arith.addf %98, %1 : vector<64x64xf32>
    %cst_39 = arith.constant dense<0xFF800000> : vector<64xf32>
    %100 = vector.multi_reduction <maximumf>, %99, %cst_39 [1] : vector<64x64xf32> to vector<64xf32>
    %101 = vector.shape_cast %100 : vector<64xf32> to vector<64x1xf32>
    %102 = vector.broadcast %101 : vector<64x1xf32> to vector<64x64xf32>
    %103 = arith.subf %99, %102 : vector<64x64xf32>
    %104 = math.exp %103 : vector<64x64xf32>
    %cst_40 = arith.constant dense<0.000000e+00> : vector<64xf32>
    %105 = vector.multi_reduction <add>, %104, %cst_40 [1] : vector<64x64xf32> to vector<64xf32>
    %106 = vector.shape_cast %105 : vector<64xf32> to vector<64x1xf32>
    %107 = tpu.reciprocal %106 : vector<64x1xf32> -> vector<64x1xf32>
    %108 = vector.broadcast %107 : vector<64x1xf32> to vector<64x64xf32>
    %109 = arith.mulf %104, %108 : vector<64x64xf32>
    %c2 = arith.constant 2 : index
    %c0_41 = arith.constant 0 : index
    %110 = vector.load %arg9[%c2, %c0_41] : memref<4x32xf32, #tpu.memory_space<vmem>>, vector<1x32xf32>
    %111 = vector.broadcast %110 : vector<1x32xf32> to vector<64x32xf32>
    %112 = arith.mulf %29, %111 : vector<64x32xf32>
    %113 = arith.truncf %112 : vector<64x32xf32> to vector<64x32xbf16>
    %114 = arith.truncf %109 : vector<64x64xf32> to vector<64x64xbf16>
    %cst_42 = arith.constant dense<0.000000e+00> : vector<64x32xf32>
    %115 = tpu.matmul %114, %113, %cst_42 {dimension_numbers = #tpu.dot_dimension_numbers<[1], [0], [0], [1], [0, 0, 1, 1], [], []>} : vector<64x64xbf16>, vector<64x32xbf16>, vector<64x32xf32> -> vector<64x32xf32>
    %116 = arith.addf %88, %115 : vector<64x32xf32>
    %117 = vector.extract_strided_slice %30 {offsets = [0, 3], sizes = [64, 1], strides = [1, 1]} : vector<64x4xf32> to vector<64x1xf32>
    %118 = vector.extract_strided_slice %33 {offsets = [3, 0], sizes = [1, 64], strides = [1, 1]} : vector<4x64xf32> to vector<1x64xf32>
    %119 = vector.broadcast %117 : vector<64x1xf32> to vector<64x64xf32>
    %120 = vector.broadcast %118 : vector<1x64xf32> to vector<64x64xf32>
    %121 = arith.addf %119, %120 : vector<64x64xf32>
    %cst_43 = arith.constant 0.000000e+00 : f32
    %122 = vector.broadcast %cst_43 : f32 to vector<64x64xf32>
    %123 = arith.cmpf ogt, %121, %122 : vector<64x64xf32>
    %cst_44 = arith.constant 2.000000e-01 : f32
    %124 = vector.broadcast %cst_44 : f32 to vector<64x64xf32>
    %125 = arith.mulf %124, %121 : vector<64x64xf32>
    %126 = arith.select %123, %121, %125 : vector<64x64xi1>, vector<64x64xf32>
    %127 = arith.addf %126, %1 : vector<64x64xf32>
    %cst_45 = arith.constant dense<0xFF800000> : vector<64xf32>
    %128 = vector.multi_reduction <maximumf>, %127, %cst_45 [1] : vector<64x64xf32> to vector<64xf32>
    %129 = vector.shape_cast %128 : vector<64xf32> to vector<64x1xf32>
    %130 = vector.broadcast %129 : vector<64x1xf32> to vector<64x64xf32>
    %131 = arith.subf %127, %130 : vector<64x64xf32>
    %132 = math.exp %131 : vector<64x64xf32>
    %cst_46 = arith.constant dense<0.000000e+00> : vector<64xf32>
    %133 = vector.multi_reduction <add>, %132, %cst_46 [1] : vector<64x64xf32> to vector<64xf32>
    %134 = vector.shape_cast %133 : vector<64xf32> to vector<64x1xf32>
    %135 = tpu.reciprocal %134 : vector<64x1xf32> -> vector<64x1xf32>
    %136 = vector.broadcast %135 : vector<64x1xf32> to vector<64x64xf32>
    %137 = arith.mulf %132, %136 : vector<64x64xf32>
    %c3 = arith.constant 3 : index
    %c0_47 = arith.constant 0 : index
    %138 = vector.load %arg9[%c3, %c0_47] : memref<4x32xf32, #tpu.memory_space<vmem>>, vector<1x32xf32>
    %139 = vector.broadcast %138 : vector<1x32xf32> to vector<64x32xf32>
    %140 = arith.mulf %29, %139 : vector<64x32xf32>
    %141 = arith.truncf %140 : vector<64x32xf32> to vector<64x32xbf16>
    %142 = arith.truncf %137 : vector<64x64xf32> to vector<64x64xbf16>
    %cst_48 = arith.constant dense<0.000000e+00> : vector<64x32xf32>
    %143 = tpu.matmul %142, %141, %cst_48 {dimension_numbers = #tpu.dot_dimension_numbers<[1], [0], [0], [1], [0, 0, 1, 1], [], []>} : vector<64x64xbf16>, vector<64x32xbf16>, vector<64x32xf32> -> vector<64x32xf32>
    %144 = arith.addf %116, %143 : vector<64x32xf32>
    %c0_49 = arith.constant 0 : index
    %c0_50 = arith.constant 0 : index
    %145 = vector.load %arg10[%c0_49, %c0_50] : memref<1x32xf32, #tpu.memory_space<vmem>>, vector<1x32xf32>
    %146 = vector.broadcast %145 : vector<1x32xf32> to vector<64x32xf32>
    %147 = arith.addf %144, %146 : vector<64x32xf32>
    %148 = arith.truncf %147 : vector<64x32xf32> to vector<64x32xbf16>
    %c0_51 = arith.constant 0 : index
    %c0_52 = arith.constant 0 : index
    %149 = vector.load %arg11[%c0_51, %c0_52] : memref<32x33xbf16, #tpu.memory_space<vmem>>, vector<32x33xbf16>
    %cst_53 = arith.constant dense<0.000000e+00> : vector<64x33xf32>
    %150 = tpu.matmul %148, %149, %cst_53 {dimension_numbers = #tpu.dot_dimension_numbers<[1], [0], [0], [1], [0, 0, 1, 1], [], []>} : vector<64x32xbf16>, vector<32x33xbf16>, vector<64x33xf32> -> vector<64x33xf32>
    %151 = vector.extract_strided_slice %150 {offsets = [0, 0], sizes = [64, 32], strides = [1, 1]} : vector<64x33xf32> to vector<64x32xf32>
    %152 = vector.extract_strided_slice %150 {offsets = [0, 32], sizes = [64, 1], strides = [1, 1]} : vector<64x33xf32> to vector<64x1xf32>
    %153 = arith.truncf %151 : vector<64x32xf32> to vector<64x32xbf16>
    %c0_54 = arith.constant 0 : index
    %c0_55 = arith.constant 0 : index
    %154 = vector.load %arg12[%c0_54, %c0_55] : memref<1x32xbf16, #tpu.memory_space<vmem>>, vector<1x32xbf16>
    %cst_56 = arith.constant dense<0.000000e+00> : vector<1x64xf32>
    %155 = tpu.matmul %154, %153, %cst_56 {dimension_numbers = #tpu.dot_dimension_numbers<[1], [1], [0], [0], [0, 0, 1, 0], [], []>} : vector<1x32xbf16>, vector<64x32xbf16>, vector<1x64xf32> -> vector<1x64xf32>
    %156 = vector.broadcast %152 : vector<64x1xf32> to vector<64x64xf32>
    %157 = vector.broadcast %155 : vector<1x64xf32> to vector<64x64xf32>
    %158 = arith.addf %156, %157 : vector<64x64xf32>
    %cst_57 = arith.constant 0.000000e+00 : f32
    %159 = vector.broadcast %cst_57 : f32 to vector<64x64xf32>
    %160 = arith.cmpf ogt, %158, %159 : vector<64x64xf32>
    %cst_58 = arith.constant 2.000000e-01 : f32
    %161 = vector.broadcast %cst_58 : f32 to vector<64x64xf32>
    %162 = arith.mulf %161, %158 : vector<64x64xf32>
    %163 = arith.select %160, %158, %162 : vector<64x64xi1>, vector<64x64xf32>
    %164 = arith.addf %163, %1 : vector<64x64xf32>
    %cst_59 = arith.constant dense<0xFF800000> : vector<64xf32>
    %165 = vector.multi_reduction <maximumf>, %164, %cst_59 [1] : vector<64x64xf32> to vector<64xf32>
    %166 = vector.shape_cast %165 : vector<64xf32> to vector<64x1xf32>
    %167 = vector.broadcast %166 : vector<64x1xf32> to vector<64x64xf32>
    %168 = arith.subf %164, %167 : vector<64x64xf32>
    %169 = math.exp %168 : vector<64x64xf32>
    %cst_60 = arith.constant dense<0.000000e+00> : vector<64xf32>
    %170 = vector.multi_reduction <add>, %169, %cst_60 [1] : vector<64x64xf32> to vector<64xf32>
    %171 = vector.shape_cast %170 : vector<64xf32> to vector<64x1xf32>
    %172 = tpu.reciprocal %171 : vector<64x1xf32> -> vector<64x1xf32>
    %173 = vector.broadcast %172 : vector<64x1xf32> to vector<64x64xf32>
    %174 = arith.mulf %169, %173 : vector<64x64xf32>
    %c0_61 = arith.constant 0 : index
    %c0_62 = arith.constant 0 : index
    %175 = vector.load %arg13[%c0_61, %c0_62] : memref<1x32xf32, #tpu.memory_space<vmem>>, vector<1x32xf32>
    %176 = vector.broadcast %175 : vector<1x32xf32> to vector<64x32xf32>
    %177 = arith.mulf %151, %176 : vector<64x32xf32>
    %178 = arith.truncf %177 : vector<64x32xf32> to vector<64x32xbf16>
    %179 = arith.truncf %174 : vector<64x64xf32> to vector<64x64xbf16>
    %cst_63 = arith.constant dense<0.000000e+00> : vector<64x32xf32>
    %180 = tpu.matmul %179, %178, %cst_63 {dimension_numbers = #tpu.dot_dimension_numbers<[1], [0], [0], [1], [0, 0, 1, 1], [], []>} : vector<64x64xbf16>, vector<64x32xbf16>, vector<64x32xf32> -> vector<64x32xf32>
    %c0_64 = arith.constant 0 : index
    %c0_65 = arith.constant 0 : index
    %181 = vector.load %arg14[%c0_64, %c0_65] : memref<1x32xf32, #tpu.memory_space<vmem>>, vector<1x32xf32>
    %182 = vector.broadcast %181 : vector<1x32xf32> to vector<64x32xf32>
    %183 = arith.addf %180, %182 : vector<64x32xf32>
    %184 = arith.truncf %25 : vector<64x32xf32> to vector<64x32xbf16>
    %c0_66 = arith.constant 0 : index
    %c0_67 = arith.constant 0 : index
    %185 = vector.load %arg15[%c0_66, %c0_67] : memref<32x32xbf16, #tpu.memory_space<vmem>>, vector<32x32xbf16>
    %cst_68 = arith.constant dense<0.000000e+00> : vector<64x32xf32>
    %186 = tpu.matmul %184, %185, %cst_68 {dimension_numbers = #tpu.dot_dimension_numbers<[1], [0], [0], [1], [0, 0, 1, 1], [], []>} : vector<64x32xbf16>, vector<32x32xbf16>, vector<64x32xf32> -> vector<64x32xf32>
    %187 = arith.truncf %186 : vector<64x32xf32> to vector<64x32xbf16>
    %cst_69 = arith.constant dense<0.000000e+00> : vector<64x32xf32>
    %188 = tpu.matmul %2, %187, %cst_69 {dimension_numbers = #tpu.dot_dimension_numbers<[1], [0], [0], [1], [0, 0, 1, 1], [], []>} : vector<64x64xbf16>, vector<64x32xbf16>, vector<64x32xf32> -> vector<64x32xf32>
    %c0_70 = arith.constant 0 : index
    %c0_71 = arith.constant 0 : index
    %189 = vector.load %arg16[%c0_70, %c0_71] : memref<1x32xf32, #tpu.memory_space<vmem>>, vector<1x32xf32>
    %190 = vector.broadcast %189 : vector<1x32xf32> to vector<64x32xf32>
    %191 = arith.addf %188, %190 : vector<64x32xf32>
    %192 = arith.truncf %191 : vector<64x32xf32> to vector<64x32xbf16>
    %c0_72 = arith.constant 0 : index
    %c0_73 = arith.constant 0 : index
    %193 = vector.load %arg17[%c0_72, %c0_73] : memref<32x32xbf16, #tpu.memory_space<vmem>>, vector<32x32xbf16>
    %cst_74 = arith.constant dense<0.000000e+00> : vector<64x32xf32>
    %194 = tpu.matmul %192, %193, %cst_74 {dimension_numbers = #tpu.dot_dimension_numbers<[1], [0], [0], [1], [0, 0, 1, 1], [], []>} : vector<64x32xbf16>, vector<32x32xbf16>, vector<64x32xf32> -> vector<64x32xf32>
    %195 = arith.truncf %194 : vector<64x32xf32> to vector<64x32xbf16>
    %cst_75 = arith.constant dense<0.000000e+00> : vector<64x32xf32>
    %196 = tpu.matmul %2, %195, %cst_75 {dimension_numbers = #tpu.dot_dimension_numbers<[1], [0], [0], [1], [0, 0, 1, 1], [], []>} : vector<64x64xbf16>, vector<64x32xbf16>, vector<64x32xf32> -> vector<64x32xf32>
    %c0_76 = arith.constant 0 : index
    %c0_77 = arith.constant 0 : index
    %197 = vector.load %arg18[%c0_76, %c0_77] : memref<1x32xf32, #tpu.memory_space<vmem>>, vector<1x32xf32>
    %198 = vector.broadcast %197 : vector<1x32xf32> to vector<64x32xf32>
    %199 = arith.addf %196, %198 : vector<64x32xf32>
    %200 = tpu.concatenate %183, %199 in 1 : vector<64x32xf32>, vector<64x32xf32> -> vector<64x64xf32>
    %201 = arith.truncf %200 : vector<64x64xf32> to vector<64x64xbf16>
    %c0_78 = arith.constant 0 : index
    %c0_79 = arith.constant 0 : index
    %202 = vector.load %arg19[%c0_78, %c0_79] : memref<64x64xbf16, #tpu.memory_space<vmem>>, vector<64x64xbf16>
    %cst_80 = arith.constant dense<0.000000e+00> : vector<64x64xf32>
    %203 = tpu.matmul %201, %202, %cst_80 {dimension_numbers = #tpu.dot_dimension_numbers<[1], [0], [0], [1], [0, 0, 1, 1], [], []>} : vector<64x64xbf16>, vector<64x64xbf16>, vector<64x64xf32> -> vector<64x64xf32>
    %c0_81 = arith.constant 0 : index
    %c0_82 = arith.constant 0 : index
    %204 = vector.load %arg20[%c0_81, %c0_82] : memref<1x64xf32, #tpu.memory_space<vmem>>, vector<1x64xf32>
    %205 = vector.broadcast %204 : vector<1x64xf32> to vector<64x64xf32>
    %206 = arith.addf %203, %205 : vector<64x64xf32>
    %cst_83 = arith.constant 0.000000e+00 : f32
    %207 = vector.broadcast %cst_83 : f32 to vector<64x64xf32>
    %208 = arith.cmpf ogt, %206, %207 : vector<64x64xf32>
    %cst_84 = arith.constant 0.00999999977 : f32
    %209 = vector.broadcast %cst_84 : f32 to vector<64x64xf32>
    %210 = arith.mulf %209, %206 : vector<64x64xf32>
    %211 = arith.select %208, %206, %210 : vector<64x64xi1>, vector<64x64xf32>
    %cst_85 = arith.constant 0.000000e+00 : f32
    %212 = vector.broadcast %cst_85 : f32 to vector<64x64xf32>
    %213 = tpu.concatenate %211, %212 in 0 : vector<64x64xf32>, vector<64x64xf32> -> vector<128x64xf32>
    %c0_86 = arith.constant 0 : index
    %c0_87 = arith.constant 0 : index
    %214 = vector.load %arg21[%c0_86, %c0_87] : memref<8x64xbf16, #tpu.memory_space<vmem>>, vector<8x64xbf16>
    %215 = arith.truncf %213 : vector<128x64xf32> to vector<128x64xbf16>
    %cst_88 = arith.constant dense<0.000000e+00> : vector<8x128xf32>
    %216 = tpu.matmul %214, %215, %cst_88 {dimension_numbers = #tpu.dot_dimension_numbers<[1], [1], [0], [0], [0, 0, 1, 0], [], []>} : vector<8x64xbf16>, vector<128x64xbf16>, vector<8x128xf32> -> vector<8x128xf32>
    %c0_89 = arith.constant 0 : index
    %c0_90 = arith.constant 0 : index
    %217 = vector.load %arg22[%c0_89, %c0_90] : memref<8x1xf32, #tpu.memory_space<vmem>>, vector<8x1xf32>
    %218 = vector.broadcast %217 : vector<8x1xf32> to vector<8x128xf32>
    %219 = arith.addf %216, %218 : vector<8x128xf32>
    %c0_91 = arith.constant 0 : index
    %c0_92 = arith.constant 0 : index
    %220 = vector.load %arg23[%c0_91, %c0_92] : memref<8x128xf32, #tpu.memory_space<vmem>>, vector<8x128xf32>
    tpu.vector_store %arg23[%c0_91, %c0_92], %219 {strides = array<i32>} : memref<8x128xf32, #tpu.memory_space<vmem>>, vector<8x128xf32>,
    return
  }
}

</mosaic_0001>

<llo_original>
// kernel: tpu_custom_call.1
$region0: #{tpu_custom_call.1}
  #allocation0 [shape = 'u32[]', space=smem, size = 0x4, offset = 0x4, fixed_abs, tag = 'smem constant byte address 0x4 - core index']
  #allocation1 [shape = 'u32[144,128]{1,0:T(1,128)}', space=vmem, size = 0x12000, scoped, tag = 'internal scratch']
  %s0 = inlined_call_operand.vmem [shape: bf16[64,1664], index: 0, kind: input, shape index: {}]
  %s1 = inlined_call_operand.vmem [shape: f32[64,64], index: 1, kind: input, shape index: {}]
  %s2 = inlined_call_operand.vmem [shape: bf16[64,64], index: 2, kind: input, shape index: {}]
  %s3 = inlined_call_operand.vmem [shape: bf16[1664,64], index: 3, kind: input, shape index: {}]
  %s4 = inlined_call_operand.vmem [shape: f32[1,64], index: 4, kind: input, shape index: {}]
  %s5 = inlined_call_operand.vmem [shape: bf16[64,64], index: 5, kind: input, shape index: {}]
  %s6 = inlined_call_operand.vmem [shape: f32[1,64], index: 6, kind: input, shape index: {}]
  %s7 = inlined_call_operand.vmem [shape: bf16[32,36], index: 7, kind: input, shape index: {}]
  %s8 = inlined_call_operand.vmem [shape: bf16[4,32], index: 8, kind: input, shape index: {}]
  %s9 = inlined_call_operand.vmem [shape: f32[4,32], index: 9, kind: input, shape index: {}]
  %s10 = inlined_call_operand.vmem [shape: f32[1,32], index: 10, kind: input, shape index: {}]
  %s11 = inlined_call_operand.vmem [shape: bf16[32,33], index: 11, kind: input, shape index: {}]
  %s12 = inlined_call_operand.vmem [shape: bf16[1,32], index: 12, kind: input, shape index: {}]
  %s13 = inlined_call_operand.vmem [shape: f32[1,32], index: 13, kind: input, shape index: {}]
  %s14 = inlined_call_operand.vmem [shape: f32[1,32], index: 14, kind: input, shape index: {}]
  %s15 = inlined_call_operand.vmem [shape: bf16[32,32], index: 15, kind: input, shape index: {}]
  %s16 = inlined_call_operand.vmem [shape: f32[1,32], index: 16, kind: input, shape index: {}]
  %s17 = inlined_call_operand.vmem [shape: bf16[32,32], index: 17, kind: input, shape index: {}]
  %s18 = inlined_call_operand.vmem [shape: f32[1,32], index: 18, kind: input, shape index: {}]
  %s19 = inlined_call_operand.vmem [shape: bf16[64,64], index: 19, kind: input, shape index: {}]
  %s20 = inlined_call_operand.vmem [shape: f32[1,64], index: 20, kind: input, shape index: {}]
  %s21 = inlined_call_operand.vmem [shape: bf16[8,64], index: 21, kind: input, shape index: {}]
  %s22 = inlined_call_operand.vmem [shape: f32[8,1], index: 22, kind: input, shape index: {}]
  %s23 = inlined_call_operand.hbm [shape: f32[8,128], index: 23, kind: output, shape index: {}]
  %s24 = sld [smem:[#allocation0]]
  $region102: #{tpu_custom_call.1} parent=0
    _
  %s26 = ssub.s32 1, %s24
  %s27 = scalar_select 0, %s26, %s24
  $region1: #{tpu_custom_call.1} parent=0
    #allocation2 [shape = 'u8[4096]{0}', space=vmem, size = 0x1000, scoped, tag = 'output window, operand 0, single buffered']
    #allocation3 [shape = 's32[1]{0}', space=sflag, size = 0x4, scoped, tag = 'scoped memory for tpu_custom_call.1']
    %28 = vsyncpa [#allocation3], 0
    // Predicated region
    $region2: #{tpu_custom_call.1} parent=1 // pred_check
      _
    $region3: #{tpu_custom_call.1} parent=1 // pred_check_branch
      %30 = sbr.rel (0) target = $region5
    $region4: #{tpu_custom_call.1} parent=1 // pred_region
      _
    $region5: #{tpu_custom_call.1} parent=1 // pred_fallthru
      _
    // Predicated region
    $region6: #{tpu_custom_call.1} parent=1 // pred_check
      _
    $region7: #{tpu_custom_call.1} parent=1 // pred_check_branch
      %32 = sbr.rel (0) target = $region9
    $region8: #{tpu_custom_call.1} parent=1 // pred_region
      _
    $region9: #{tpu_custom_call.1} parent=1 // pred_fallthru
      _
    // Predicated region
    $region10: #{tpu_custom_call.1} parent=1 // pred_check
      _
    $region11: #{tpu_custom_call.1} parent=1 // pred_check_branch
      %34 = sbr.rel (0) target = $region13
    $region12: #{tpu_custom_call.1} parent=1 // pred_region
      _
    $region13: #{tpu_custom_call.1} parent=1 // pred_fallthru
      _
    // Predicated region
    $region14: #{tpu_custom_call.1} parent=1 // pred_check
      _
    $region15: #{tpu_custom_call.1} parent=1 // pred_check_branch
      %36 = sbr.rel (0) target = $region17
    $region16: #{tpu_custom_call.1} parent=1 // pred_region
      _
    $region17: #{tpu_custom_call.1} parent=1 // pred_fallthru
      _
    // Predicated region
    $region18: #{tpu_custom_call.1} parent=1 // pred_check
      _
    $region19: #{tpu_custom_call.1} parent=1 // pred_check_branch
      %38 = sbr.rel (0) target = $region21
    $region20: #{tpu_custom_call.1} parent=1 // pred_region
      _
    $region21: #{tpu_custom_call.1} parent=1 // pred_fallthru
      _
    // Predicated region
    $region22: #{tpu_custom_call.1} parent=1 // pred_check
      _
    $region23: #{tpu_custom_call.1} parent=1 // pred_check_branch
      %40 = sbr.rel (0) target = $region25
    $region24: #{tpu_custom_call.1} parent=1 // pred_region
      _
    $region25: #{tpu_custom_call.1} parent=1 // pred_fallthru
      _
    // Predicated region
    $region26: #{tpu_custom_call.1} parent=1 // pred_check
      _
    $region27: #{tpu_custom_call.1} parent=1 // pred_check_branch
      %42 = sbr.rel (0) target = $region29
    $region28: #{tpu_custom_call.1} parent=1 // pred_region
      _
    $region29: #{tpu_custom_call.1} parent=1 // pred_fallthru
      _
    // Predicated region
    $region30: #{tpu_custom_call.1} parent=1 // pred_check
      _
    $region31: #{tpu_custom_call.1} parent=1 // pred_check_branch
      %44 = sbr.rel (0) target = $region33
    $region32: #{tpu_custom_call.1} parent=1 // pred_region
      _
    $region33: #{tpu_custom_call.1} parent=1 // pred_fallthru
      _
    // Predicated region
    $region34: #{tpu_custom_call.1} parent=1 // pred_check
      _
    $region35: #{tpu_custom_call.1} parent=1 // pred_check_branch
      %46 = sbr.rel (0) target = $region37
    $region36: #{tpu_custom_call.1} parent=1 // pred_region
      _
    $region37: #{tpu_custom_call.1} parent=1 // pred_fallthru
      _
    // Predicated region
    $region38: #{tpu_custom_call.1} parent=1 // pred_check
      _
    $region39: #{tpu_custom_call.1} parent=1 // pred_check_branch
      %48 = sbr.rel (0) target = $region41
    $region40: #{tpu_custom_call.1} parent=1 // pred_region
      _
    $region41: #{tpu_custom_call.1} parent=1 // pred_fallthru
      _
    // Predicated region
    $region42: #{tpu_custom_call.1} parent=1 // pred_check
      _
    $region43: #{tpu_custom_call.1} parent=1 // pred_check_branch
      %50 = sbr.rel (0) target = $region45
    $region44: #{tpu_custom_call.1} parent=1 // pred_region
      _
    $region45: #{tpu_custom_call.1} parent=1 // pred_fallthru
      _
    // Predicated region
    $region46: #{tpu_custom_call.1} parent=1 // pred_check
      _
    $region47: #{tpu_custom_call.1} parent=1 // pred_check_branch
      %52 = sbr.rel (0) target = $region49
    $region48: #{tpu_custom_call.1} parent=1 // pred_region
      _
    $region49: #{tpu_custom_call.1} parent=1 // pred_fallthru
      _
    // Predicated region
    $region50: #{tpu_custom_call.1} parent=1 // pred_check
      _
    $region51: #{tpu_custom_call.1} parent=1 // pred_check_branch
      %54 = sbr.rel (0) target = $region53
    $region52: #{tpu_custom_call.1} parent=1 // pred_region
      _
    $region53: #{tpu_custom_call.1} parent=1 // pred_fallthru
      _
    // Predicated region
    $region54: #{tpu_custom_call.1} parent=1 // pred_check
      _
    $region55: #{tpu_custom_call.1} parent=1 // pred_check_branch
      %56 = sbr.rel (0) target = $region57
    $region56: #{tpu_custom_call.1} parent=1 // pred_region
      _
    $region57: #{tpu_custom_call.1} parent=1 // pred_fallthru
      _
    // Predicated region
    $region58: #{tpu_custom_call.1} parent=1 // pred_check
      _
    $region59: #{tpu_custom_call.1} parent=1 // pred_check_branch
      %58 = sbr.rel (0) target = $region61
    $region60: #{tpu_custom_call.1} parent=1 // pred_region
      _
    $region61: #{tpu_custom_call.1} parent=1 // pred_fallthru
      _
    // Predicated region
    $region62: #{tpu_custom_call.1} parent=1 // pred_check
      _
    $region63: #{tpu_custom_call.1} parent=1 // pred_check_branch
      %60 = sbr.rel (0) target = $region65
    $region64: #{tpu_custom_call.1} parent=1 // pred_region
      _
    $region65: #{tpu_custom_call.1} parent=1 // pred_fallthru
      _
    // Predicated region
    $region66: #{tpu_custom_call.1} parent=1 // pred_check
      _
    $region67: #{tpu_custom_call.1} parent=1 // pred_check_branch
      %62 = sbr.rel (0) target = $region69
    $region68: #{tpu_custom_call.1} parent=1 // pred_region
      _
    $region69: #{tpu_custom_call.1} parent=1 // pred_fallthru
      _
    // Predicated region
    $region70: #{tpu_custom_call.1} parent=1 // pred_check
      _
    $region71: #{tpu_custom_call.1} parent=1 // pred_check_branch
      %64 = sbr.rel (0) target = $region73
    $region72: #{tpu_custom_call.1} parent=1 // pred_region
      _
    $region73: #{tpu_custom_call.1} parent=1 // pred_fallthru
      _
    // Predicated region
    $region74: #{tpu_custom_call.1} parent=1 // pred_check
      _
    $region75: #{tpu_custom_call.1} parent=1 // pred_check_branch
      %66 = sbr.rel (0) target = $region77
    $region76: #{tpu_custom_call.1} parent=1 // pred_region
      _
    $region77: #{tpu_custom_call.1} parent=1 // pred_fallthru
      _
    // Predicated region
    $region78: #{tpu_custom_call.1} parent=1 // pred_check
      _
    $region79: #{tpu_custom_call.1} parent=1 // pred_check_branch
      %68 = sbr.rel (0) target = $region81
    $region80: #{tpu_custom_call.1} parent=1 // pred_region
      _
    $region81: #{tpu_custom_call.1} parent=1 // pred_fallthru
      _
    // Predicated region
    $region82: #{tpu_custom_call.1} parent=1 // pred_check
      _
    $region83: #{tpu_custom_call.1} parent=1 // pred_check_branch
      %70 = sbr.rel (0) target = $region85
    $region84: #{tpu_custom_call.1} parent=1 // pred_region
      _
    $region85: #{tpu_custom_call.1} parent=1 // pred_fallthru
      _
    // Predicated region
    $region86: #{tpu_custom_call.1} parent=1 // pred_check
      _
    $region87: #{tpu_custom_call.1} parent=1 // pred_check_branch
      %72 = sbr.rel (0) target = $region89
    $region88: #{tpu_custom_call.1} parent=1 // pred_region
      _
    $region89: #{tpu_custom_call.1} parent=1 // pred_fallthru
      _
    // Predicated region
    $region90: #{tpu_custom_call.1} parent=1 // pred_check
      _
    $region91: #{tpu_custom_call.1} parent=1 // pred_check_branch
      %74 = sbr.rel (0) target = $region93
    $region92: #{tpu_custom_call.1} parent=1 // pred_region
      _
    $region93: #{tpu_custom_call.1} parent=1 // pred_fallthru
      _
    %v76 = vld [vmem:[%s0] sm:$0xff]
    %v77 = vld [vmem:[%s0 + $0x8] sm:$0xff]
    %v78 = vld [vmem:[%s0 + $0x10] sm:$0xff]
    %v79 = vld [vmem:[%s0 + $0x18] sm:$0xff]
    %v80 = vld [vmem:[%s0 + $0x20] sm:$0xff]
    %v81 = vld [vmem:[%s0 + $0x28] sm:$0xff]
    %v82 = vld [vmem:[%s0 + $0x30] sm:$0xf]
    %v83 = vld [vmem:[%s0 + $0x34] sm:$0xff]
    %v84 = vld [vmem:[%s0 + $0x3c] sm:$0xff]
    %v85 = vld [vmem:[%s0 + $0x44] sm:$0xff]
    %v86 = vld [vmem:[%s0 + $0x4c] sm:$0xff]
    %v87 = vld [vmem:[%s0 + $0x54] sm:$0xff]
    %v88 = vld [vmem:[%s0 + $0x5c] sm:$0xff]
    %v89 = vld [vmem:[%s0 + $0x64] sm:$0xf]
    %v90 = vld [vmem:[%s0 + $0x68] sm:$0xff]
    %v91 = vld [vmem:[%s0 + $0x70] sm:$0xff]
    %v92 = vld [vmem:[%s0 + $0x78] sm:$0xff]
    %v93 = vld [vmem:[%s0 + $0x80] sm:$0xff]
    %v94 = vld [vmem:[%s0 + $0x88] sm:$0xff]
    %v95 = vld [vmem:[%s0 + $0x90] sm:$0xff]
    %v96 = vld [vmem:[%s0 + $0x98] sm:$0xf]
    %v97 = vld [vmem:[%s0 + $0x9c] sm:$0xff]
    %v98 = vld [vmem:[%s0 + $0xa4] sm:$0xff]
    %v99 = vld [vmem:[%s0 + $0xac] sm:$0xff]
    %v100 = vld [vmem:[%s0 + $0xb4] sm:$0xff]
    %v101 = vld [vmem:[%s0 + $0xbc] sm:$0xff]
    %v102 = vld [vmem:[%s0 + $0xc4] sm:$0xff]
    %v103 = vld [vmem:[%s0 + $0xcc] sm:$0xf]
    %v104 = vld [vmem:[%s0 + $0xd0] sm:$0xff]
    %v105 = vld [vmem:[%s0 + $0xd8] sm:$0xff]
    %v106 = vld [vmem:[%s0 + $0xe0] sm:$0xff]
    %v107 = vld [vmem:[%s0 + $0xe8] sm:$0xff]
    %v108 = vld [vmem:[%s0 + $0xf0] sm:$0xff]
    %v109 = vld [vmem:[%s0 + $0xf8] sm:$0xff]
    %v110 = vld [vmem:[%s0 + $0x100] sm:$0xf]
    %v111 = vld [vmem:[%s0 + $0x104] sm:$0xff]
    %v112 = vld [vmem:[%s0 + $0x10c] sm:$0xff]
    %v113 = vld [vmem:[%s0 + $0x114] sm:$0xff]
    %v114 = vld [vmem:[%s0 + $0x11c] sm:$0xff]
    %v115 = vld [vmem:[%s0 + $0x124] sm:$0xff]
    %v116 = vld [vmem:[%s0 + $0x12c] sm:$0xff]
    %v117 = vld [vmem:[%s0 + $0x134] sm:$0xf]
    %v118 = vld [vmem:[%s0 + $0x138] sm:$0xff]
    %v119 = vld [vmem:[%s0 + $0x140] sm:$0xff]
    %v120 = vld [vmem:[%s0 + $0x148] sm:$0xff]
    %v121 = vld [vmem:[%s0 + $0x150] sm:$0xff]
    %v122 = vld [vmem:[%s0 + $0x158] sm:$0xff]
    %v123 = vld [vmem:[%s0 + $0x160] sm:$0xff]
    %v124 = vld [vmem:[%s0 + $0x168] sm:$0xf]
    %v125 = vld [vmem:[%s0 + $0x16c] sm:$0xff]
    %v126 = vld [vmem:[%s0 + $0x174] sm:$0xff]
    %v127 = vld [vmem:[%s0 + $0x17c] sm:$0xff]
    %v128 = vld [vmem:[%s0 + $0x184] sm:$0xff]
    %v129 = vld [vmem:[%s0 + $0x18c] sm:$0xff]
    %v130 = vld [vmem:[%s0 + $0x194] sm:$0xff]
    %v131 = vld [vmem:[%s0 + $0x19c] sm:$0xf]
    %v132 = vld [vmem:[%s1] sm:$0xff]
    %v133 = vld [vmem:[%s1 + $0x8] sm:$0xff]
    %v134 = vld [vmem:[%s1 + $0x10] sm:$0xff]
    %v135 = vld [vmem:[%s1 + $0x18] sm:$0xff]
    %v136 = vld [vmem:[%s1 + $0x20] sm:$0xff]
    %v137 = vld [vmem:[%s1 + $0x28] sm:$0xff]
    %v138 = vld [vmem:[%s1 + $0x30] sm:$0xff]
    %v139 = vld [vmem:[%s1 + $0x38] sm:$0xff]
    %v140 = vld [vmem:[%s2] sm:$0xf]
    %v141 = vld [vmem:[%s2 + $0x4] sm:$0xf]
    %v142 = vld [vmem:[%s2 + $0x8] sm:$0xf]
    %v143 = vld [vmem:[%s2 + $0xc] sm:$0xf]
    %v144 = vld [vmem:[%s2 + $0x10] sm:$0xf]
    %v145 = vld [vmem:[%s2 + $0x14] sm:$0xf]
    %v146 = vld [vmem:[%s2 + $0x18] sm:$0xf]
    %v147 = vld [vmem:[%s2 + $0x1c] sm:$0xf]
    %v148 = vld [vmem:[%s3] sm:$0xf]
    %v149 = vld [vmem:[%s3 + $0x4] sm:$0xf]
    %v150 = vld [vmem:[%s3 + $0x8] sm:$0xf]
    %v151 = vld [vmem:[%s3 + $0xc] sm:$0xf]
    %v152 = vld [vmem:[%s3 + $0x10] sm:$0xf]
    %v153 = vld [vmem:[%s3 + $0x14] sm:$0xf]
    %v154 = vld [vmem:[%s3 + $0x18] sm:$0xf]
    %v155 = vld [vmem:[%s3 + $0x1c] sm:$0xf]
    %v156 = vld [vmem:[%s3 + $0x20] sm:$0xf]
    %v157 = vld [vmem:[%s3 + $0x24] sm:$0xf]
    %v158 = vld [vmem:[%s3 + $0x28] sm:$0xf]
    %v159 = vld [vmem:[%s3 + $0x2c] sm:$0xf]
    %v160 = vld [vmem:[%s3 + $0x30] sm:$0xf]
    %v161 = vld [vmem:[%s3 + $0x34] sm:$0xf]
    %v162 = vld [vmem:[%s3 + $0x38] sm:$0xf]
    %v163 = vld [vmem:[%s3 + $0x3c] sm:$0xf]
    %v164 = vld [vmem:[%s3 + $0x40] sm:$0xf]
    %v165 = vld [vmem:[%s3 + $0x44] sm:$0xf]
    %v166 = vld [vmem:[%s3 + $0x48] sm:$0xf]
    %v167 = vld [vmem:[%s3 + $0x4c] sm:$0xf]
    %v168 = vld [vmem:[%s3 + $0x50] sm:$0xf]
    %v169 = vld [vmem:[%s3 + $0x54] sm:$0xf]
    %v170 = vld [vmem:[%s3 + $0x58] sm:$0xf]
    %v171 = vld [vmem:[%s3 + $0x5c] sm:$0xf]
    %v172 = vld [vmem:[%s3 + $0x60] sm:$0xf]
    %v173 = vld [vmem:[%s3 + $0x64] sm:$0xf]
    %v174 = vld [vmem:[%s3 + $0x68] sm:$0xf]
    %v175 = vld [vmem:[%s3 + $0x6c] sm:$0xf]
    %v176 = vld [vmem:[%s3 + $0x70] sm:$0xf]
    %v177 = vld [vmem:[%s3 + $0x74] sm:$0xf]
    %v178 = vld [vmem:[%s3 + $0x78] sm:$0xf]
    %v179 = vld [vmem:[%s3 + $0x7c] sm:$0xf]
    %v180 = vld [vmem:[%s3 + $0x80] sm:$0xf]
    %v181 = vld [vmem:[%s3 + $0x84] sm:$0xf]
    %v182 = vld [vmem:[%s3 + $0x88] sm:$0xf]
    %v183 = vld [vmem:[%s3 + $0x8c] sm:$0xf]
    %v184 = vld [vmem:[%s3 + $0x90] sm:$0xf]
    %v185 = vld [vmem:[%s3 + $0x94] sm:$0xf]
    %v186 = vld [vmem:[%s3 + $0x98] sm:$0xf]
    %v187 = vld [vmem:[%s3 + $0x9c] sm:$0xf]
    %v188 = vld [vmem:[%s3 + $0xa0] sm:$0xf]
    %v189 = vld [vmem:[%s3 + $0xa4] sm:$0xf]
    %v190 = vld [vmem:[%s3 + $0xa8] sm:$0xf]
    %v191 = vld [vmem:[%s3 + $0xac] sm:$0xf]
    %v192 = vld [vmem:[%s3 + $0xb0] sm:$0xf]
    %v193 = vld [vmem:[%s3 + $0xb4] sm:$0xf]
    %v194 = vld [vmem:[%s3 + $0xb8] sm:$0xf]
    %v195 = vld [vmem:[%s3 + $0xbc] sm:$0xf]
    %v196 = vld [vmem:[%s3 + $0xc0] sm:$0xf]
    %v197 = vld [vmem:[%s3 + $0xc4] sm:$0xf]
    %v198 = vld [vmem:[%s3 + $0xc8] sm:$0xf]
    %v199 = vld [vmem:[%s3 + $0xcc] sm:$0xf]
    %v200 = vld [vmem:[%s3 + $0xd0] sm:$0xf]
    %v201 = vld [vmem:[%s3 + $0xd4] sm:$0xf]
    %v202 = vld [vmem:[%s3 + $0xd8] sm:$0xf]
    %v203 = vld [vmem:[%s3 + $0xdc] sm:$0xf]
    %v204 = vld [vmem:[%s3 + $0xe0] sm:$0xf]
    %v205 = vld [vmem:[%s3 + $0xe4] sm:$0xf]
    %v206 = vld [vmem:[%s3 + $0xe8] sm:$0xf]
    %v207 = vld [vmem:[%s3 + $0xec] sm:$0xf]
    %v208 = vld [vmem:[%s3 + $0xf0] sm:$0xf]
    %v209 = vld [vmem:[%s3 + $0xf4] sm:$0xf]
    %v210 = vld [vmem:[%s3 + $0xf8] sm:$0xf]
    %v211 = vld [vmem:[%s3 + $0xfc] sm:$0xf]
    %v212 = vld [vmem:[%s3 + $0x100] sm:$0xf]
    %v213 = vld [vmem:[%s3 + $0x104] sm:$0xf]
    %v214 = vld [vmem:[%s3 + $0x108] sm:$0xf]
    %v215 = vld [vmem:[%s3 + $0x10c] sm:$0xf]
    %v216 = vld [vmem:[%s3 + $0x110] sm:$0xf]
    %v217 = vld [vmem:[%s3 + $0x114] sm:$0xf]
    %v218 = vld [vmem:[%s3 + $0x118] sm:$0xf]
    %v219 = vld [vmem:[%s3 + $0x11c] sm:$0xf]
    %v220 = vld [vmem:[%s3 + $0x120] sm:$0xf]
    %v221 = vld [vmem:[%s3 + $0x124] sm:$0xf]
    %v222 = vld [vmem:[%s3 + $0x128] sm:$0xf]
    %v223 = vld [vmem:[%s3 + $0x12c] sm:$0xf]
    %v224 = vld [vmem:[%s3 + $0x130] sm:$0xf]
    %v225 = vld [vmem:[%s3 + $0x134] sm:$0xf]
    %v226 = vld [vmem:[%s3 + $0x138] sm:$0xf]
    %v227 = vld [vmem:[%s3 + $0x13c] sm:$0xf]
    %v228 = vld [vmem:[%s3 + $0x140] sm:$0xf]
    %v229 = vld [vmem:[%s3 + $0x144] sm:$0xf]
    %v230 = vld [vmem:[%s3 + $0x148] sm:$0xf]
    %v231 = vld [vmem:[%s3 + $0x14c] sm:$0xf]
    %v232 = vld [vmem:[%s3 + $0x150] sm:$0xf]
    %v233 = vld [vmem:[%s3 + $0x154] sm:$0xf]
    %v234 = vld [vmem:[%s3 + $0x158] sm:$0xf]
    %v235 = vld [vmem:[%s3 + $0x15c] sm:$0xf]
    %v236 = vld [vmem:[%s3 + $0x160] sm:$0xf]
    %v237 = vld [vmem:[%s3 + $0x164] sm:$0xf]
    %v238 = vld [vmem:[%s3 + $0x168] sm:$0xf]
    %v239 = vld [vmem:[%s3 + $0x16c] sm:$0xf]
    %v240 = vld [vmem:[%s3 + $0x170] sm:$0xf]
    %v241 = vld [vmem:[%s3 + $0x174] sm:$0xf]
    %v242 = vld [vmem:[%s3 + $0x178] sm:$0xf]
    %v243 = vld [vmem:[%s3 + $0x17c] sm:$0xf]
    %v244 = vld [vmem:[%s3 + $0x180] sm:$0xf]
    %v245 = vld [vmem:[%s3 + $0x184] sm:$0xf]
    %v246 = vld [vmem:[%s3 + $0x188] sm:$0xf]
    %v247 = vld [vmem:[%s3 + $0x18c] sm:$0xf]
    %v248 = vld [vmem:[%s3 + $0x190] sm:$0xf]
    %v249 = vld [vmem:[%s3 + $0x194] sm:$0xf]
    %v250 = vld [vmem:[%s3 + $0x198] sm:$0xf]
    %v251 = vld [vmem:[%s3 + $0x19c] sm:$0xf]
    %v252 = vld [vmem:[%s3 + $0x1a0] sm:$0xf]
    %v253 = vld [vmem:[%s3 + $0x1a4] sm:$0xf]
    %v254 = vld [vmem:[%s3 + $0x1a8] sm:$0xf]
    %v255 = vld [vmem:[%s3 + $0x1ac] sm:$0xf]
    %v256 = vld [vmem:[%s3 + $0x1b0] sm:$0xf]
    %v257 = vld [vmem:[%s3 + $0x1b4] sm:$0xf]
    %v258 = vld [vmem:[%s3 + $0x1b8] sm:$0xf]
    %v259 = vld [vmem:[%s3 + $0x1bc] sm:$0xf]
    %v260 = vld [vmem:[%s3 + $0x1c0] sm:$0xf]
    %v261 = vld [vmem:[%s3 + $0x1c4] sm:$0xf]
    %v262 = vld [vmem:[%s3 + $0x1c8] sm:$0xf]
    %v263 = vld [vmem:[%s3 + $0x1cc] sm:$0xf]
    %v264 = vld [vmem:[%s3 + $0x1d0] sm:$0xf]
    %v265 = vld [vmem:[%s3 + $0x1d4] sm:$0xf]
    %v266 = vld [vmem:[%s3 + $0x1d8] sm:$0xf]
    %v267 = vld [vmem:[%s3 + $0x1dc] sm:$0xf]
    %v268 = vld [vmem:[%s3 + $0x1e0] sm:$0xf]
    %v269 = vld [vmem:[%s3 + $0x1e4] sm:$0xf]
    %v270 = vld [vmem:[%s3 + $0x1e8] sm:$0xf]
    %v271 = vld [vmem:[%s3 + $0x1ec] sm:$0xf]
    %v272 = vld [vmem:[%s3 + $0x1f0] sm:$0xf]
    %v273 = vld [vmem:[%s3 + $0x1f4] sm:$0xf]
    %v274 = vld [vmem:[%s3 + $0x1f8] sm:$0xf]
    %v275 = vld [vmem:[%s3 + $0x1fc] sm:$0xf]
    %v276 = vld [vmem:[%s3 + $0x200] sm:$0xf]
    %v277 = vld [vmem:[%s3 + $0x204] sm:$0xf]
    %v278 = vld [vmem:[%s3 + $0x208] sm:$0xf]
    %v279 = vld [vmem:[%s3 + $0x20c] sm:$0xf]
    %v280 = vld [vmem:[%s3 + $0x210] sm:$0xf]
    %v281 = vld [vmem:[%s3 + $0x214] sm:$0xf]
    %v282 = vld [vmem:[%s3 + $0x218] sm:$0xf]
    %v283 = vld [vmem:[%s3 + $0x21c] sm:$0xf]
    %v284 = vld [vmem:[%s3 + $0x220] sm:$0xf]
    %v285 = vld [vmem:[%s3 + $0x224] sm:$0xf]
    %v286 = vld [vmem:[%s3 + $0x228] sm:$0xf]
    %v287 = vld [vmem:[%s3 + $0x22c] sm:$0xf]
    %v288 = vld [vmem:[%s3 + $0x230] sm:$0xf]
    %v289 = vld [vmem:[%s3 + $0x234] sm:$0xf]
    %v290 = vld [vmem:[%s3 + $0x238] sm:$0xf]
    %v291 = vld [vmem:[%s3 + $0x23c] sm:$0xf]
    %v292 = vld [vmem:[%s3 + $0x240] sm:$0xf]
    %v293 = vld [vmem:[%s3 + $0x244] sm:$0xf]
    %v294 = vld [vmem:[%s3 + $0x248] sm:$0xf]
    %v295 = vld [vmem:[%s3 + $0x24c] sm:$0xf]
    %v296 = vld [vmem:[%s3 + $0x250] sm:$0xf]
    %v297 = vld [vmem:[%s3 + $0x254] sm:$0xf]
    %v298 = vld [vmem:[%s3 + $0x258] sm:$0xf]
    %v299 = vld [vmem:[%s3 + $0x25c] sm:$0xf]
    %v300 = vld [vmem:[%s3 + $0x260] sm:$0xf]
    %v301 = vld [vmem:[%s3 + $0x264] sm:$0xf]
    %v302 = vld [vmem:[%s3 + $0x268] sm:$0xf]
    %v303 = vld [vmem:[%s3 + $0x26c] sm:$0xf]
    %v304 = vld [vmem:[%s3 + $0x270] sm:$0xf]
    %v305 = vld [vmem:[%s3 + $0x274] sm:$0xf]
    %v306 = vld [vmem:[%s3 + $0x278] sm:$0xf]
    %v307 = vld [vmem:[%s3 + $0x27c] sm:$0xf]
    %v308 = vld [vmem:[%s3 + $0x280] sm:$0xf]
    %v309 = vld [vmem:[%s3 + $0x284] sm:$0xf]
    %v310 = vld [vmem:[%s3 + $0x288] sm:$0xf]
    %v311 = vld [vmem:[%s3 + $0x28c] sm:$0xf]
    %v312 = vld [vmem:[%s3 + $0x290] sm:$0xf]
    %v313 = vld [vmem:[%s3 + $0x294] sm:$0xf]
    %v314 = vld [vmem:[%s3 + $0x298] sm:$0xf]
    %v315 = vld [vmem:[%s3 + $0x29c] sm:$0xf]
    %v316 = vld [vmem:[%s3 + $0x2a0] sm:$0xf]
    %v317 = vld [vmem:[%s3 + $0x2a4] sm:$0xf]
    %v318 = vld [vmem:[%s3 + $0x2a8] sm:$0xf]
    %v319 = vld [vmem:[%s3 + $0x2ac] sm:$0xf]
    %v320 = vld [vmem:[%s3 + $0x2b0] sm:$0xf]
    %v321 = vld [vmem:[%s3 + $0x2b4] sm:$0xf]
    %v322 = vld [vmem:[%s3 + $0x2b8] sm:$0xf]
    %v323 = vld [vmem:[%s3 + $0x2bc] sm:$0xf]
    %v324 = vld [vmem:[%s3 + $0x2c0] sm:$0xf]
    %v325 = vld [vmem:[%s3 + $0x2c4] sm:$0xf]
    %v326 = vld [vmem:[%s3 + $0x2c8] sm:$0xf]
    %v327 = vld [vmem:[%s3 + $0x2cc] sm:$0xf]
    %v328 = vld [vmem:[%s3 + $0x2d0] sm:$0xf]
    %v329 = vld [vmem:[%s3 + $0x2d4] sm:$0xf]
    %v330 = vld [vmem:[%s3 + $0x2d8] sm:$0xf]
    %v331 = vld [vmem:[%s3 + $0x2dc] sm:$0xf]
    %v332 = vld [vmem:[%s3 + $0x2e0] sm:$0xf]
    %v333 = vld [vmem:[%s3 + $0x2e4] sm:$0xf]
    %v334 = vld [vmem:[%s3 + $0x2e8] sm:$0xf]
    %v335 = vld [vmem:[%s3 + $0x2ec] sm:$0xf]
    %v336 = vld [vmem:[%s3 + $0x2f0] sm:$0xf]
    %v337 = vld [vmem:[%s3 + $0x2f4] sm:$0xf]
    %v338 = vld [vmem:[%s3 + $0x2f8] sm:$0xf]
    %v339 = vld [vmem:[%s3 + $0x2fc] sm:$0xf]
    %v340 = vld [vmem:[%s3 + $0x300] sm:$0xf]
    %v341 = vld [vmem:[%s3 + $0x304] sm:$0xf]
    %v342 = vld [vmem:[%s3 + $0x308] sm:$0xf]
    %v343 = vld [vmem:[%s3 + $0x30c] sm:$0xf]
    %v344 = vld [vmem:[%s3 + $0x310] sm:$0xf]
    %v345 = vld [vmem:[%s3 + $0x314] sm:$0xf]
    %v346 = vld [vmem:[%s3 + $0x318] sm:$0xf]
    %v347 = vld [vmem:[%s3 + $0x31c] sm:$0xf]
    %v348 = vld [vmem:[%s3 + $0x320] sm:$0xf]
    %v349 = vld [vmem:[%s3 + $0x324] sm:$0xf]
    %v350 = vld [vmem:[%s3 + $0x328] sm:$0xf]
    %v351 = vld [vmem:[%s3 + $0x32c] sm:$0xf]
    %v352 = vld [vmem:[%s3 + $0x330] sm:$0xf]
    %v353 = vld [vmem:[%s3 + $0x334] sm:$0xf]
    %v354 = vld [vmem:[%s3 + $0x338] sm:$0xf]
    %v355 = vld [vmem:[%s3 + $0x33c] sm:$0xf]
    %v356 = vld [vmem:[%s4] sm:$0x1]
    %v358 = vlaneseq
    %v359 = vshrl.u32 %v358, 7
    %v360 = vsub.s32 0, %v359
    %v361 = vrot.slane %v356, %v360
    %v419 = vunpack.c.l.b16 %v76
    %v420 = vunpack.c.h.b16 %v76
    %v421 = vunpack.c.l.b16 %v77
    %v422 = vunpack.c.h.b16 %v77
    %v423 = vunpack.c.l.b16 %v78
    %v424 = vunpack.c.h.b16 %v78
    %v425 = vunpack.c.l.b16 %v79
    %v426 = vunpack.c.h.b16 %v79
    %v427 = vunpack.c.l.b16 %v80
    %v428 = vunpack.c.h.b16 %v80
    %v429 = vunpack.c.l.b16 %v81
    %v430 = vunpack.c.h.b16 %v81
    %v431 = vunpack.c.l.b16 %v82
    %v432 = vunpack.c.l.b16 %v83
    %v433 = vunpack.c.h.b16 %v83
    %v434 = vunpack.c.l.b16 %v84
    %v435 = vunpack.c.h.b16 %v84
    %v436 = vunpack.c.l.b16 %v85
    %v437 = vunpack.c.h.b16 %v85
    %v438 = vunpack.c.l.b16 %v86
    %v439 = vunpack.c.h.b16 %v86
    %v440 = vunpack.c.l.b16 %v87
    %v441 = vunpack.c.h.b16 %v87
    %v442 = vunpack.c.l.b16 %v88
    %v443 = vunpack.c.h.b16 %v88
    %v444 = vunpack.c.l.b16 %v89
    %v445 = vunpack.c.l.b16 %v90
    %v446 = vunpack.c.h.b16 %v90
    %v447 = vunpack.c.l.b16 %v91
    %v448 = vunpack.c.h.b16 %v91
    %v449 = vunpack.c.l.b16 %v92
    %v450 = vunpack.c.h.b16 %v92
    %v451 = vunpack.c.l.b16 %v93
    %v452 = vunpack.c.h.b16 %v93
    %v453 = vunpack.c.l.b16 %v94
    %v454 = vunpack.c.h.b16 %v94
    %v455 = vunpack.c.l.b16 %v95
    %v456 = vunpack.c.h.b16 %v95
    %v457 = vunpack.c.l.b16 %v96
    %v458 = vunpack.c.l.b16 %v97
    %v459 = vunpack.c.h.b16 %v97
    %v460 = vunpack.c.l.b16 %v98
    %v461 = vunpack.c.h.b16 %v98
    %v462 = vunpack.c.l.b16 %v99
    %v463 = vunpack.c.h.b16 %v99
    %v464 = vunpack.c.l.b16 %v100
    %v465 = vunpack.c.h.b16 %v100
    %v466 = vunpack.c.l.b16 %v101
    %v467 = vunpack.c.h.b16 %v101
    %v468 = vunpack.c.l.b16 %v102
    %v469 = vunpack.c.h.b16 %v102
    %v470 = vunpack.c.l.b16 %v103
    %v471 = vunpack.c.l.b16 %v104
    %v472 = vunpack.c.h.b16 %v104
    %v473 = vunpack.c.l.b16 %v105
    %v474 = vunpack.c.h.b16 %v105
    %v475 = vunpack.c.l.b16 %v106
    %v476 = vunpack.c.h.b16 %v106
    %v477 = vunpack.c.l.b16 %v107
    %v478 = vunpack.c.h.b16 %v107
    %v479 = vunpack.c.l.b16 %v108
    %v480 = vunpack.c.h.b16 %v108
    %v481 = vunpack.c.l.b16 %v109
    %v482 = vunpack.c.h.b16 %v109
    %v483 = vunpack.c.l.b16 %v110
    %v484 = vunpack.c.l.b16 %v111
    %v485 = vunpack.c.h.b16 %v111
    %v486 = vunpack.c.l.b16 %v112
    %v487 = vunpack.c.h.b16 %v112
    %v488 = vunpack.c.l.b16 %v113
    %v489 = vunpack.c.h.b16 %v113
    %v490 = vunpack.c.l.b16 %v114
    %v491 = vunpack.c.h.b16 %v114
    %v492 = vunpack.c.l.b16 %v115
    %v493 = vunpack.c.h.b16 %v115
    %v494 = vunpack.c.l.b16 %v116
    %v495 = vunpack.c.h.b16 %v116
    %v496 = vunpack.c.l.b16 %v117
    %v497 = vunpack.c.l.b16 %v118
    %v498 = vunpack.c.h.b16 %v118
    %v499 = vunpack.c.l.b16 %v119
    %v500 = vunpack.c.h.b16 %v119
    %v501 = vunpack.c.l.b16 %v120
    %v502 = vunpack.c.h.b16 %v120
    %v503 = vunpack.c.l.b16 %v121
    %v504 = vunpack.c.h.b16 %v121
    %v505 = vunpack.c.l.b16 %v122
    %v506 = vunpack.c.h.b16 %v122
    %v507 = vunpack.c.l.b16 %v123
    %v508 = vunpack.c.h.b16 %v123
    %v509 = vunpack.c.l.b16 %v124
    %v510 = vunpack.c.l.b16 %v125
    %v511 = vunpack.c.h.b16 %v125
    %v512 = vunpack.c.l.b16 %v126
    %v513 = vunpack.c.h.b16 %v126
    %v514 = vunpack.c.l.b16 %v127
    %v515 = vunpack.c.h.b16 %v127
    %v516 = vunpack.c.l.b16 %v128
    %v517 = vunpack.c.h.b16 %v128
    %v518 = vunpack.c.l.b16 %v129
    %v519 = vunpack.c.h.b16 %v129
    %v520 = vunpack.c.l.b16 %v130
    %v521 = vunpack.c.h.b16 %v130
    %v522 = vunpack.c.l.b16 %v131
    %v523 = vpack.c.b16 %v432, %v419
    %v524 = vpack.c.b16 %v433, %v420
    %v525 = vpack.c.b16 %v434, %v421
    %v526 = vpack.c.b16 %v435, %v422
    %v527 = vpack.c.b16 %v436, %v423
    %v528 = vpack.c.b16 %v437, %v424
    %v529 = vpack.c.b16 %v438, %v425
    %v530 = vpack.c.b16 %v439, %v426
    %v531 = vpack.c.b16 %v440, %v427
    %v532 = vpack.c.b16 %v441, %v428
    %v533 = vpack.c.b16 %v442, %v429
    %v534 = vpack.c.b16 %v443, %v430
    %v535 = vpack.c.b16 %v444, %v431
    %v536 = vpack.c.b16 %v458, %v445
    %v537 = vpack.c.b16 %v459, %v446
    %v538 = vpack.c.b16 %v460, %v447
    %v539 = vpack.c.b16 %v461, %v448
    %v540 = vpack.c.b16 %v462, %v449
    %v541 = vpack.c.b16 %v463, %v450
    %v542 = vpack.c.b16 %v464, %v451
    %v543 = vpack.c.b16 %v465, %v452
    %v544 = vpack.c.b16 %v466, %v453
    %v545 = vpack.c.b16 %v467, %v454
    %v546 = vpack.c.b16 %v468, %v455
    %v547 = vpack.c.b16 %v469, %v456
    %v548 = vpack.c.b16 %v470, %v457
    %v549 = vpack.c.b16 %v484, %v471
    %v550 = vpack.c.b16 %v485, %v472
    %v551 = vpack.c.b16 %v486, %v473
    %v552 = vpack.c.b16 %v487, %v474
    %v553 = vpack.c.b16 %v488, %v475
    %v554 = vpack.c.b16 %v489, %v476
    %v555 = vpack.c.b16 %v490, %v477
    %v556 = vpack.c.b16 %v491, %v478
    %v557 = vpack.c.b16 %v492, %v479
    %v558 = vpack.c.b16 %v493, %v480
    %v559 = vpack.c.b16 %v494, %v481
    %v560 = vpack.c.b16 %v495, %v482
    %v561 = vpack.c.b16 %v496, %v483
    %v562 = vpack.c.b16 %v510, %v497
    %v563 = vpack.c.b16 %v511, %v498
    %v564 = vpack.c.b16 %v512, %v499
    %v565 = vpack.c.b16 %v513, %v500
    %v566 = vpack.c.b16 %v514, %v501
    %v567 = vpack.c.b16 %v515, %v502
    %v568 = vpack.c.b16 %v516, %v503
    %v569 = vpack.c.b16 %v517, %v504
    %v570 = vpack.c.b16 %v518, %v505
    %v571 = vpack.c.b16 %v519, %v506
    %v572 = vpack.c.b16 %v520, %v507
    %v573 = vpack.c.b16 %v521, %v508
    %v574 = vpack.c.b16 %v522, %v509
    %v835 = vunpack.c.l.b16 %v148
    %v836 = vunpack.c.l.b16 %v149
    %v837 = vunpack.c.l.b16 %v150
    %v838 = vunpack.c.l.b16 %v151
    %v839 = vunpack.c.l.b16 %v152
    %v840 = vunpack.c.l.b16 %v153
    %v841 = vunpack.c.l.b16 %v154
    %v842 = vunpack.c.l.b16 %v155
    %v843 = vunpack.c.l.b16 %v156
    %v844 = vunpack.c.l.b16 %v157
    %v845 = vunpack.c.l.b16 %v158
    %v846 = vunpack.c.l.b16 %v159
    %v847 = vunpack.c.l.b16 %v160
    %v848 = vunpack.c.l.b16 %v161
    %v849 = vunpack.c.l.b16 %v162
    %v850 = vunpack.c.l.b16 %v163
    %v851 = vunpack.c.l.b16 %v164
    %v852 = vunpack.c.l.b16 %v165
    %v853 = vunpack.c.l.b16 %v166
    %v854 = vunpack.c.l.b16 %v167
    %v855 = vunpack.c.l.b16 %v168
    %v856 = vunpack.c.l.b16 %v169
    %v857 = vunpack.c.l.b16 %v170
    %v858 = vunpack.c.l.b16 %v171
    %v859 = vunpack.c.l.b16 %v172
    %v860 = vunpack.c.l.b16 %v173
    %v861 = vunpack.c.l.b16 %v174
    %v862 = vunpack.c.l.b16 %v175
    %v863 = vunpack.c.l.b16 %v176
    %v864 = vunpack.c.l.b16 %v177
    %v865 = vunpack.c.l.b16 %v178
    %v866 = vunpack.c.l.b16 %v179
    %v867 = vunpack.c.l.b16 %v180
    %v868 = vunpack.c.l.b16 %v181
    %v869 = vunpack.c.l.b16 %v182
    %v870 = vunpack.c.l.b16 %v183
    %v871 = vunpack.c.l.b16 %v184
    %v872 = vunpack.c.l.b16 %v185
    %v873 = vunpack.c.l.b16 %v186
    %v874 = vunpack.c.l.b16 %v187
    %v875 = vunpack.c.l.b16 %v188
    %v876 = vunpack.c.l.b16 %v189
    %v877 = vunpack.c.l.b16 %v190
    %v878 = vunpack.c.l.b16 %v191
    %v879 = vunpack.c.l.b16 %v192
    %v880 = vunpack.c.l.b16 %v193
    %v881 = vunpack.c.l.b16 %v194
    %v882 = vunpack.c.l.b16 %v195
    %v883 = vunpack.c.l.b16 %v196
    %v884 = vunpack.c.l.b16 %v197
    %v885 = vunpack.c.l.b16 %v198
    %v886 = vunpack.c.l.b16 %v199
    %v887 = vunpack.c.l.b16 %v200
    %v888 = vunpack.c.l.b16 %v201
    %v889 = vunpack.c.l.b16 %v202
    %v890 = vunpack.c.l.b16 %v203
    %v891 = vunpack.c.l.b16 %v204
    %v892 = vunpack.c.l.b16 %v205
    %v893 = vunpack.c.l.b16 %v206
    %v894 = vunpack.c.l.b16 %v207
    %v895 = vunpack.c.l.b16 %v208
    %v896 = vunpack.c.l.b16 %v209
    %v897 = vunpack.c.l.b16 %v210
    %v898 = vunpack.c.l.b16 %v211
    %v899 = vunpack.c.l.b16 %v212
    %v900 = vunpack.c.l.b16 %v213
    %v901 = vunpack.c.l.b16 %v214
    %v902 = vunpack.c.l.b16 %v215
    %v903 = vunpack.c.l.b16 %v216
    %v904 = vunpack.c.l.b16 %v217
    %v905 = vunpack.c.l.b16 %v218
    %v906 = vunpack.c.l.b16 %v219
    %v907 = vunpack.c.l.b16 %v220
    %v908 = vunpack.c.l.b16 %v221
    %v909 = vunpack.c.l.b16 %v222
    %v910 = vunpack.c.l.b16 %v223
    %v911 = vunpack.c.l.b16 %v224
    %v912 = vunpack.c.l.b16 %v225
    %v913 = vunpack.c.l.b16 %v226
    %v914 = vunpack.c.l.b16 %v227
    %v915 = vunpack.c.l.b16 %v228
    %v916 = vunpack.c.l.b16 %v229
    %v917 = vunpack.c.l.b16 %v230
    %v918 = vunpack.c.l.b16 %v231
    %v919 = vunpack.c.l.b16 %v232
    %v920 = vunpack.c.l.b16 %v233
    %v921 = vunpack.c.l.b16 %v234
    %v922 = vunpack.c.l.b16 %v235
    %v923 = vunpack.c.l.b16 %v236
    %v924 = vunpack.c.l.b16 %v237
    %v925 = vunpack.c.l.b16 %v238
    %v926 = vunpack.c.l.b16 %v239
    %v927 = vunpack.c.l.b16 %v240
    %v928 = vunpack.c.l.b16 %v241
    %v929 = vunpack.c.l.b16 %v242
    %v930 = vunpack.c.l.b16 %v243
    %v931 = vunpack.c.l.b16 %v244
    %v932 = vunpack.c.l.b16 %v245
    %v933 = vunpack.c.l.b16 %v246
    %v934 = vunpack.c.l.b16 %v247
    %v935 = vunpack.c.l.b16 %v248
    %v936 = vunpack.c.l.b16 %v249
    %v937 = vunpack.c.l.b16 %v250
    %v938 = vunpack.c.l.b16 %v251
    %v939 = vunpack.c.l.b16 %v252
    %v940 = vunpack.c.l.b16 %v253
    %v941 = vunpack.c.l.b16 %v254
    %v942 = vunpack.c.l.b16 %v255
    %v943 = vunpack.c.l.b16 %v256
    %v944 = vunpack.c.l.b16 %v257
    %v945 = vunpack.c.l.b16 %v258
    %v946 = vunpack.c.l.b16 %v259
    %v947 = vunpack.c.l.b16 %v260
    %v948 = vunpack.c.l.b16 %v261
    %v949 = vunpack.c.l.b16 %v262
    %v950 = vunpack.c.l.b16 %v263
    %v951 = vunpack.c.l.b16 %v264
    %v952 = vunpack.c.l.b16 %v265
    %v953 = vunpack.c.l.b16 %v266
    %v954 = vunpack.c.l.b16 %v267
    %v955 = vunpack.c.l.b16 %v268
    %v956 = vunpack.c.l.b16 %v269
    %v957 = vunpack.c.l.b16 %v270
    %v958 = vunpack.c.l.b16 %v271
    %v959 = vunpack.c.l.b16 %v272
    %v960 = vunpack.c.l.b16 %v273
    %v961 = vunpack.c.l.b16 %v274
    %v962 = vunpack.c.l.b16 %v275
    %v963 = vunpack.c.l.b16 %v276
    %v964 = vunpack.c.l.b16 %v277
    %v965 = vunpack.c.l.b16 %v278
    %v966 = vunpack.c.l.b16 %v279
    %v967 = vunpack.c.l.b16 %v280
    %v968 = vunpack.c.l.b16 %v281
    %v969 = vunpack.c.l.b16 %v282
    %v970 = vunpack.c.l.b16 %v283
    %v971 = vunpack.c.l.b16 %v284
    %v972 = vunpack.c.l.b16 %v285
    %v973 = vunpack.c.l.b16 %v286
    %v974 = vunpack.c.l.b16 %v287
    %v975 = vunpack.c.l.b16 %v288
    %v976 = vunpack.c.l.b16 %v289
    %v977 = vunpack.c.l.b16 %v290
    %v978 = vunpack.c.l.b16 %v291
    %v979 = vunpack.c.l.b16 %v292
    %v980 = vunpack.c.l.b16 %v293
    %v981 = vunpack.c.l.b16 %v294
    %v982 = vunpack.c.l.b16 %v295
    %v983 = vunpack.c.l.b16 %v296
    %v984 = vunpack.c.l.b16 %v297
    %v985 = vunpack.c.l.b16 %v298
    %v986 = vunpack.c.l.b16 %v299
    %v987 = vunpack.c.l.b16 %v300
    %v988 = vunpack.c.l.b16 %v301
    %v989 = vunpack.c.l.b16 %v302
    %v990 = vunpack.c.l.b16 %v303
    %v991 = vunpack.c.l.b16 %v304
    %v992 = vunpack.c.l.b16 %v305
    %v993 = vunpack.c.l.b16 %v306
    %v994 = vunpack.c.l.b16 %v307
    %v995 = vunpack.c.l.b16 %v308
    %v996 = vunpack.c.l.b16 %v309
    %v997 = vunpack.c.l.b16 %v310
    %v998 = vunpack.c.l.b16 %v311
    %v999 = vunpack.c.l.b16 %v312
    %v1000 = vunpack.c.l.b16 %v313
    %v1001 = vunpack.c.l.b16 %v314
    %v1002 = vunpack.c.l.b16 %v315
    %v1003 = vunpack.c.l.b16 %v316
    %v1004 = vunpack.c.l.b16 %v317
    %v1005 = vunpack.c.l.b16 %v318
    %v1006 = vunpack.c.l.b16 %v319
    %v1007 = vunpack.c.l.b16 %v320
    %v1008 = vunpack.c.l.b16 %v321
    %v1009 = vunpack.c.l.b16 %v322
    %v1010 = vunpack.c.l.b16 %v323
    %v1011 = vunpack.c.l.b16 %v324
    %v1012 = vunpack.c.l.b16 %v325
    %v1013 = vunpack.c.l.b16 %v326
    %v1014 = vunpack.c.l.b16 %v327
    %v1015 = vunpack.c.l.b16 %v328
    %v1016 = vunpack.c.l.b16 %v329
    %v1017 = vunpack.c.l.b16 %v330
    %v1018 = vunpack.c.l.b16 %v331
    %v1019 = vunpack.c.l.b16 %v332
    %v1020 = vunpack.c.l.b16 %v333
    %v1021 = vunpack.c.l.b16 %v334
    %v1022 = vunpack.c.l.b16 %v335
    %v1023 = vunpack.c.l.b16 %v336
    %v1024 = vunpack.c.l.b16 %v337
    %v1025 = vunpack.c.l.b16 %v338
    %v1026 = vunpack.c.l.b16 %v339
    %v1027 = vunpack.c.l.b16 %v340
    %v1028 = vunpack.c.l.b16 %v341
    %v1029 = vunpack.c.l.b16 %v342
    %v1030 = vunpack.c.l.b16 %v343
    %v1031 = vunpack.c.l.b16 %v344
    %v1032 = vunpack.c.l.b16 %v345
    %v1033 = vunpack.c.l.b16 %v346
    %v1034 = vunpack.c.l.b16 %v347
    %v1035 = vunpack.c.l.b16 %v348
    %v1036 = vunpack.c.l.b16 %v349
    %v1037 = vunpack.c.l.b16 %v350
    %v1038 = vunpack.c.l.b16 %v351
    %v1039 = vunpack.c.l.b16 %v352
    %v1040 = vunpack.c.l.b16 %v353
    %v1041 = vunpack.c.l.b16 %v354
    %v1042 = vunpack.c.l.b16 %v355
    %v1043 = vpack.c.b16 %v836, %v835
    %v1044 = vpack.c.b16 %v838, %v837
    %v1045 = vpack.c.b16 %v840, %v839
    %v1046 = vpack.c.b16 %v842, %v841
    %v1047 = vpack.c.b16 %v844, %v843
    %v1048 = vpack.c.b16 %v846, %v845
    %v1049 = vpack.c.b16 %v848, %v847
    %v1050 = vpack.c.b16 %v850, %v849
    %v1051 = vpack.c.b16 %v852, %v851
    %v1052 = vpack.c.b16 %v854, %v853
    %v1053 = vpack.c.b16 %v856, %v855
    %v1054 = vpack.c.b16 %v858, %v857
    %v1055 = vpack.c.b16 %v860, %v859
    %v1056 = vpack.c.b16 %v862, %v861
    %v1057 = vpack.c.b16 %v864, %v863
    %v1058 = vpack.c.b16 %v866, %v865
    %v1059 = vpack.c.b16 %v868, %v867
    %v1060 = vpack.c.b16 %v870, %v869
    %v1061 = vpack.c.b16 %v872, %v871
    %v1062 = vpack.c.b16 %v874, %v873
    %v1063 = vpack.c.b16 %v876, %v875
    %v1064 = vpack.c.b16 %v878, %v877
    %v1065 = vpack.c.b16 %v880, %v879
    %v1066 = vpack.c.b16 %v882, %v881
    %v1067 = vpack.c.b16 %v884, %v883
    %v1068 = vpack.c.b16 %v886, %v885
    %v1069 = vpack.c.b16 %v888, %v887
    %v1070 = vpack.c.b16 %v890, %v889
    %v1071 = vpack.c.b16 %v892, %v891
    %v1072 = vpack.c.b16 %v894, %v893
    %v1073 = vpack.c.b16 %v896, %v895
    %v1074 = vpack.c.b16 %v898, %v897
    %v1075 = vpack.c.b16 %v900, %v899
    %v1076 = vpack.c.b16 %v902, %v901
    %v1077 = vpack.c.b16 %v904, %v903
    %v1078 = vpack.c.b16 %v906, %v905
    %v1079 = vpack.c.b16 %v908, %v907
    %v1080 = vpack.c.b16 %v910, %v909
    %v1081 = vpack.c.b16 %v912, %v911
    %v1082 = vpack.c.b16 %v914, %v913
    %v1083 = vpack.c.b16 %v916, %v915
    %v1084 = vpack.c.b16 %v918, %v917
    %v1085 = vpack.c.b16 %v920, %v919
    %v1086 = vpack.c.b16 %v922, %v921
    %v1087 = vpack.c.b16 %v924, %v923
    %v1088 = vpack.c.b16 %v926, %v925
    %v1089 = vpack.c.b16 %v928, %v927
    %v1090 = vpack.c.b16 %v930, %v929
    %v1091 = vpack.c.b16 %v932, %v931
    %v1092 = vpack.c.b16 %v934, %v933
    %v1093 = vpack.c.b16 %v936, %v935
    %v1094 = vpack.c.b16 %v938, %v937
    %v1095 = vpack.c.b16 %v940, %v939
    %v1096 = vpack.c.b16 %v942, %v941
    %v1097 = vpack.c.b16 %v944, %v943
    %v1098 = vpack.c.b16 %v946, %v945
    %v1099 = vpack.c.b16 %v948, %v947
    %v1100 = vpack.c.b16 %v950, %v949
    %v1101 = vpack.c.b16 %v952, %v951
    %v1102 = vpack.c.b16 %v954, %v953
    %v1103 = vpack.c.b16 %v956, %v955
    %v1104 = vpack.c.b16 %v958, %v957
    %v1105 = vpack.c.b16 %v960, %v959
    %v1106 = vpack.c.b16 %v962, %v961
    %v1107 = vpack.c.b16 %v964, %v963
    %v1108 = vpack.c.b16 %v966, %v965
    %v1109 = vpack.c.b16 %v968, %v967
    %v1110 = vpack.c.b16 %v970, %v969
    %v1111 = vpack.c.b16 %v972, %v971
    %v1112 = vpack.c.b16 %v974, %v973
    %v1113 = vpack.c.b16 %v976, %v975
    %v1114 = vpack.c.b16 %v978, %v977
    %v1115 = vpack.c.b16 %v980, %v979
    %v1116 = vpack.c.b16 %v982, %v981
    %v1117 = vpack.c.b16 %v984, %v983
    %v1118 = vpack.c.b16 %v986, %v985
    %v1119 = vpack.c.b16 %v988, %v987
    %v1120 = vpack.c.b16 %v990, %v989
    %v1121 = vpack.c.b16 %v992, %v991
    %v1122 = vpack.c.b16 %v994, %v993
    %v1123 = vpack.c.b16 %v996, %v995
    %v1124 = vpack.c.b16 %v998, %v997
    %v1125 = vpack.c.b16 %v1000, %v999
    %v1126 = vpack.c.b16 %v1002, %v1001
    %v1127 = vpack.c.b16 %v1004, %v1003
    %v1128 = vpack.c.b16 %v1006, %v1005
    %v1129 = vpack.c.b16 %v1008, %v1007
    %v1130 = vpack.c.b16 %v1010, %v1009
    %v1131 = vpack.c.b16 %v1012, %v1011
    %v1132 = vpack.c.b16 %v1014, %v1013
    %v1133 = vpack.c.b16 %v1016, %v1015
    %v1134 = vpack.c.b16 %v1018, %v1017
    %v1135 = vpack.c.b16 %v1020, %v1019
    %v1136 = vpack.c.b16 %v1022, %v1021
    %v1137 = vpack.c.b16 %v1024, %v1023
    %v1138 = vpack.c.b16 %v1026, %v1025
    %v1139 = vpack.c.b16 %v1028, %v1027
    %v1140 = vpack.c.b16 %v1030, %v1029
    %v1141 = vpack.c.b16 %v1032, %v1031
    %v1142 = vpack.c.b16 %v1034, %v1033
    %v1143 = vpack.c.b16 %v1036, %v1035
    %v1144 = vpack.c.b16 %v1038, %v1037
    %v1145 = vpack.c.b16 %v1040, %v1039
    %v1146 = vpack.c.b16 %v1042, %v1041
    %1251 = vmatprep.subr.bf16.mxu0 0
    %1252 = vmatpush1.bf16.msra.mxu0 %v1043
    %1253 = vmatprep.subr.bf16.mxu0 0
    %1254 = vmatpush1.bf16.msra.mxu0 %v1044
    %1255 = vmatprep.subr.bf16.mxu0 0
    %1256 = vmatpush1.bf16.msra.mxu0 %v1045
    %1257 = vmatprep.subr.bf16.mxu0 0
    %1258 = vmatpush1.bf16.msra.mxu0 %v1046
    %1259 = vmatprep.subr.bf16.mxu0 0
    %1260 = vmatpush1.bf16.msra.mxu0 %v1047
    %1261 = vmatprep.subr.bf16.mxu0 0
    %1262 = vmatpush1.bf16.msra.mxu0 %v1048
    %1263 = vmatprep.subr.bf16.mxu0 0
    %1264 = vmatpush1.bf16.msra.mxu0 %v1049
    %1265 = vmatprep.subr.bf16.mxu0 0
    %1266 = vmatpush1.bf16.msra.mxu0 %v1050
    %1267 = vmatprep.subr.bf16.mxu0 0
    %1268 = vmatpush1.bf16.msra.mxu0 %v1051
    %1269 = vmatprep.subr.bf16.mxu0 0
    %1270 = vmatpush1.bf16.msra.mxu0 %v1052
    %1271 = vmatprep.subr.bf16.mxu0 0
    %1272 = vmatpush1.bf16.msra.mxu0 %v1053
    %1273 = vmatprep.subr.bf16.mxu0 0
    %1274 = vmatpush1.bf16.msra.mxu0 %v1054
    %1275 = vmatprep.subr.bf16.mxu0 0
    %1276 = vmatpush1.bf16.msra.mxu0 %v1055
    %1277 = vmatprep.subr.bf16.mxu0 0
    %1278 = vmatpush1.bf16.msra.mxu0 %v1056
    %1279 = vmatprep.subr.bf16.mxu0 0
    %1280 = vmatpush1.bf16.msra.mxu0 %v1057
    %1281 = vmatprep.subr.bf16.mxu0 0
    %1282 = vmatpush1.bf16.msra.mxu0 %v1058
    %1283 = vmatprep.mubr.bf16.mxu0 %v524
    %1284 = vmatmul.mubr.bf16.gmra.mrb[0].mxu0 %v523
    %v1285 = vpop.f32.mrb[0].mxu0
    %v1286 = vadd.f32 %v361, %v1285
    %v1287 = vpop.f32.mrb[0].mxu0
    %v1288 = vpop.f32.mrb[0].mxu0
    %v1289 = vadd.f32 %v361, %v1288
    %v1290 = vpop.f32.mrb[0].mxu0
    %1291 = vmatprep.mubr.bf16.mxu0 %v537
    %1292 = vmatmul.mubr.bf16.gmra.mrb[0].mxu0 %v536
    %v1293 = vpop.f32.mrb[0].mxu0
    %v1294 = vadd.f32 %v361, %v1293
    %v1295 = vpop.f32.mrb[0].mxu0
    %v1296 = vpop.f32.mrb[0].mxu0
    %v1297 = vadd.f32 %v361, %v1296
    %v1298 = vpop.f32.mrb[0].mxu0
    %1299 = vmatprep.mubr.bf16.mxu0 %v550
    %1300 = vmatmul.mubr.bf16.gmra.mrb[0].mxu0 %v549
    %v1301 = vpop.f32.mrb[0].mxu0
    %v1302 = vadd.f32 %v361, %v1301
    %v1303 = vpop.f32.mrb[0].mxu0
    %v1304 = vpop.f32.mrb[0].mxu0
    %v1305 = vadd.f32 %v361, %v1304
    %v1306 = vpop.f32.mrb[0].mxu0
    %1307 = vmatprep.mubr.bf16.mxu0 %v563
    %1308 = vmatmul.mubr.bf16.gmra.mrb[0].mxu0 %v562
    %v1309 = vpop.f32.mrb[0].mxu0
    %v1310 = vadd.f32 %v361, %v1309
    %v1311 = vpop.f32.mrb[0].mxu0
    %v1312 = vpop.f32.mrb[0].mxu0
    %v1313 = vadd.f32 %v361, %v1312
    %v1314 = vpop.f32.mrb[0].mxu0
    %1315 = vdwg.mxu0
    %1316 = vmatprep.subr.bf16.mxu0 0
    %1317 = vmatpush1.bf16.msra.mxu0 %v1059
    %1318 = vmatprep.subr.bf16.mxu0 0
    %1319 = vmatpush1.bf16.msra.mxu0 %v1060
    %1320 = vmatprep.subr.bf16.mxu0 0
    %1321 = vmatpush1.bf16.msra.mxu0 %v1061
    %1322 = vmatprep.subr.bf16.mxu0 0
    %1323 = vmatpush1.bf16.msra.mxu0 %v1062
    %1324 = vmatprep.subr.bf16.mxu0 0
    %1325 = vmatpush1.bf16.msra.mxu0 %v1063
    %1326 = vmatprep.subr.bf16.mxu0 0
    %1327 = vmatpush1.bf16.msra.mxu0 %v1064
    %1328 = vmatprep.subr.bf16.mxu0 0
    %1329 = vmatpush1.bf16.msra.mxu0 %v1065
    %1330 = vmatprep.subr.bf16.mxu0 0
    %1331 = vmatpush1.bf16.msra.mxu0 %v1066
    %1332 = vmatprep.subr.bf16.mxu0 0
    %1333 = vmatpush1.bf16.msra.mxu0 %v1067
    %1334 = vmatprep.subr.bf16.mxu0 0
    %1335 = vmatpush1.bf16.msra.mxu0 %v1068
    %1336 = vmatprep.subr.bf16.mxu0 0
    %1337 = vmatpush1.bf16.msra.mxu0 %v1069
    %1338 = vmatprep.subr.bf16.mxu0 0
    %1339 = vmatpush1.bf16.msra.mxu0 %v1070
    %1340 = vmatprep.subr.bf16.mxu0 0
    %1341 = vmatpush1.bf16.msra.mxu0 %v1071
    %1342 = vmatprep.subr.bf16.mxu0 0
    %1343 = vmatpush1.bf16.msra.mxu0 %v1072
    %1344 = vmatprep.subr.bf16.mxu0 0
    %1345 = vmatpush1.bf16.msra.mxu0 %v1073
    %1346 = vmatprep.subr.bf16.mxu0 0
    %1347 = vmatpush1.bf16.msra.mxu0 %v1074
    %1348 = vmatprep.mubr.bf16.mxu0 %v526
    %1349 = vmatmul.mubr.bf16.gmra.mrb[0].mxu0 %v525
    %v1350 = vpop.f32.mrb[0].mxu0
    %v1351 = vadd.f32 %v1286, %v1350
    %v1352 = vpop.f32.mrb[0].mxu0
    %v1353 = vpop.f32.mrb[0].mxu0
    %v1354 = vadd.f32 %v1289, %v1353
    %v1355 = vpop.f32.mrb[0].mxu0
    %1356 = vmatprep.mubr.bf16.mxu0 %v539
    %1357 = vmatmul.mubr.bf16.gmra.mrb[0].mxu0 %v538
    %v1358 = vpop.f32.mrb[0].mxu0
    %v1359 = vadd.f32 %v1294, %v1358
    %v1360 = vpop.f32.mrb[0].mxu0
    %v1361 = vpop.f32.mrb[0].mxu0
    %v1362 = vadd.f32 %v1297, %v1361
    %v1363 = vpop.f32.mrb[0].mxu0
    %1364 = vmatprep.mubr.bf16.mxu0 %v552
    %1365 = vmatmul.mubr.bf16.gmra.mrb[0].mxu0 %v551
    %v1366 = vpop.f32.mrb[0].mxu0
    %v1367 = vadd.f32 %v1302, %v1366
    %v1368 = vpop.f32.mrb[0].mxu0
    %v1369 = vpop.f32.mrb[0].mxu0
    %v1370 = vadd.f32 %v1305, %v1369
    %v1371 = vpop.f32.mrb[0].mxu0
    %1372 = vmatprep.mubr.bf16.mxu0 %v565
    %1373 = vmatmul.mubr.bf16.gmra.mrb[0].mxu0 %v564
    %v1374 = vpop.f32.mrb[0].mxu0
    %v1375 = vadd.f32 %v1310, %v1374
    %v1376 = vpop.f32.mrb[0].mxu0
    %v1377 = vpop.f32.mrb[0].mxu0
    %v1378 = vadd.f32 %v1313, %v1377
    %v1379 = vpop.f32.mrb[0].mxu0
    %1380 = vdwg.mxu0
    %1381 = vmatprep.subr.bf16.mxu0 0
    %1382 = vmatpush1.bf16.msra.mxu0 %v1075
    %1383 = vmatprep.subr.bf16.mxu0 0
    %1384 = vmatpush1.bf16.msra.mxu0 %v1076
    %1385 = vmatprep.subr.bf16.mxu0 0
    %1386 = vmatpush1.bf16.msra.mxu0 %v1077
    %1387 = vmatprep.subr.bf16.mxu0 0
    %1388 = vmatpush1.bf16.msra.mxu0 %v1078
    %1389 = vmatprep.subr.bf16.mxu0 0
    %1390 = vmatpush1.bf16.msra.mxu0 %v1079
    %1391 = vmatprep.subr.bf16.mxu0 0
    %1392 = vmatpush1.bf16.msra.mxu0 %v1080
    %1393 = vmatprep.subr.bf16.mxu0 0
    %1394 = vmatpush1.bf16.msra.mxu0 %v1081
    %1395 = vmatprep.subr.bf16.mxu0 0
    %1396 = vmatpush1.bf16.msra.mxu0 %v1082
    %1397 = vmatprep.subr.bf16.mxu0 0
    %1398 = vmatpush1.bf16.msra.mxu0 %v1083
    %1399 = vmatprep.subr.bf16.mxu0 0
    %1400 = vmatpush1.bf16.msra.mxu0 %v1084
    %1401 = vmatprep.subr.bf16.mxu0 0
    %1402 = vmatpush1.bf16.msra.mxu0 %v1085
    %1403 = vmatprep.subr.bf16.mxu0 0
    %1404 = vmatpush1.bf16.msra.mxu0 %v1086
    %1405 = vmatprep.subr.bf16.mxu0 0
    %1406 = vmatpush1.bf16.msra.mxu0 %v1087
    %1407 = vmatprep.subr.bf16.mxu0 0
    %1408 = vmatpush1.bf16.msra.mxu0 %v1088
    %1409 = vmatprep.subr.bf16.mxu0 0
    %1410 = vmatpush1.bf16.msra.mxu0 %v1089
    %1411 = vmatprep.subr.bf16.mxu0 0
    %1412 = vmatpush1.bf16.msra.mxu0 %v1090
    %1413 = vmatprep.mubr.bf16.mxu0 %v528
    %1414 = vmatmul.mubr.bf16.gmra.mrb[0].mxu0 %v527
    %v1415 = vpop.f32.mrb[0].mxu0
    %v1416 = vadd.f32 %v1351, %v1415
    %v1417 = vpop.f32.mrb[0].mxu0
    %v1418 = vpop.f32.mrb[0].mxu0
    %v1419 = vadd.f32 %v1354, %v1418
    %v1420 = vpop.f32.mrb[0].mxu0
    %1421 = vmatprep.mubr.bf16.mxu0 %v541
    %1422 = vmatmul.mubr.bf16.gmra.mrb[0].mxu0 %v540
    %v1423 = vpop.f32.mrb[0].mxu0
    %v1424 = vadd.f32 %v1359, %v1423
    %v1425 = vpop.f32.mrb[0].mxu0
    %v1426 = vpop.f32.mrb[0].mxu0
    %v1427 = vadd.f32 %v1362, %v1426
    %v1428 = vpop.f32.mrb[0].mxu0
    %1429 = vmatprep.mubr.bf16.mxu0 %v554
    %1430 = vmatmul.mubr.bf16.gmra.mrb[0].mxu0 %v553
    %v1431 = vpop.f32.mrb[0].mxu0
    %v1432 = vadd.f32 %v1367, %v1431
    %v1433 = vpop.f32.mrb[0].mxu0
    %v1434 = vpop.f32.mrb[0].mxu0
    %v1435 = vadd.f32 %v1370, %v1434
    %v1436 = vpop.f32.mrb[0].mxu0
    %1437 = vmatprep.mubr.bf16.mxu0 %v567
    %1438 = vmatmul.mubr.bf16.gmra.mrb[0].mxu0 %v566
    %v1439 = vpop.f32.mrb[0].mxu0
    %v1440 = vadd.f32 %v1375, %v1439
    %v1441 = vpop.f32.mrb[0].mxu0
    %v1442 = vpop.f32.mrb[0].mxu0
    %v1443 = vadd.f32 %v1378, %v1442
    %v1444 = vpop.f32.mrb[0].mxu0
    %1445 = vdwg.mxu0
    %1446 = vmatprep.subr.bf16.mxu0 0
    %1447 = vmatpush1.bf16.msra.mxu0 %v1091
    %1448 = vmatprep.subr.bf16.mxu0 0
    %1449 = vmatpush1.bf16.msra.mxu0 %v1092
    %1450 = vmatprep.subr.bf16.mxu0 0
    %1451 = vmatpush1.bf16.msra.mxu0 %v1093
    %1452 = vmatprep.subr.bf16.mxu0 0
    %1453 = vmatpush1.bf16.msra.mxu0 %v1094
    %1454 = vmatprep.subr.bf16.mxu0 0
    %1455 = vmatpush1.bf16.msra.mxu0 %v1095
    %1456 = vmatprep.subr.bf16.mxu0 0
    %1457 = vmatpush1.bf16.msra.mxu0 %v1096
    %1458 = vmatprep.subr.bf16.mxu0 0
    %1459 = vmatpush1.bf16.msra.mxu0 %v1097
    %1460 = vmatprep.subr.bf16.mxu0 0
    %1461 = vmatpush1.bf16.msra.mxu0 %v1098
    %1462 = vmatprep.subr.bf16.mxu0 0
    %1463 = vmatpush1.bf16.msra.mxu0 %v1099
    %1464 = vmatprep.subr.bf16.mxu0 0
    %1465 = vmatpush1.bf16.msra.mxu0 %v1100
    %1466 = vmatprep.subr.bf16.mxu0 0
    %1467 = vmatpush1.bf16.msra.mxu0 %v1101
    %1468 = vmatprep.subr.bf16.mxu0 0
    %1469 = vmatpush1.bf16.msra.mxu0 %v1102
    %1470 = vmatprep.subr.bf16.mxu0 0
    %1471 = vmatpush1.bf16.msra.mxu0 %v1103
    %1472 = vmatprep.subr.bf16.mxu0 0
    %1473 = vmatpush1.bf16.msra.mxu0 %v1104
    %1474 = vmatprep.subr.bf16.mxu0 0
    %1475 = vmatpush1.bf16.msra.mxu0 %v1105
    %1476 = vmatprep.subr.bf16.mxu0 0
    %1477 = vmatpush1.bf16.msra.mxu0 %v1106
    %1478 = vmatprep.mubr.bf16.mxu0 %v530
    %1479 = vmatmul.mubr.bf16.gmra.mrb[0].mxu0 %v529
    %v1480 = vpop.f32.mrb[0].mxu0
    %v1481 = vadd.f32 %v1416, %v1480
    %v1482 = vpop.f32.mrb[0].mxu0
    %v1483 = vpop.f32.mrb[0].mxu0
    %v1484 = vadd.f32 %v1419, %v1483
    %v1485 = vpop.f32.mrb[0].mxu0
    %1486 = vmatprep.mubr.bf16.mxu0 %v543
    %1487 = vmatmul.mubr.bf16.gmra.mrb[0].mxu0 %v542
    %v1488 = vpop.f32.mrb[0].mxu0
    %v1489 = vadd.f32 %v1424, %v1488
    %v1490 = vpop.f32.mrb[0].mxu0
    %v1491 = vpop.f32.mrb[0].mxu0
    %v1492 = vadd.f32 %v1427, %v1491
    %v1493 = vpop.f32.mrb[0].mxu0
    %1494 = vmatprep.mubr.bf16.mxu0 %v556
    %1495 = vmatmul.mubr.bf16.gmra.mrb[0].mxu0 %v555
    %v1496 = vpop.f32.mrb[0].mxu0
    %v1497 = vadd.f32 %v1432, %v1496
    %v1498 = vpop.f32.mrb[0].mxu0
    %v1499 = vpop.f32.mrb[0].mxu0
    %v1500 = vadd.f32 %v1435, %v1499
    %v1501 = vpop.f32.mrb[0].mxu0
    %1502 = vmatprep.mubr.bf16.mxu0 %v569
    %1503 = vmatmul.mubr.bf16.gmra.mrb[0].mxu0 %v568
    %v1504 = vpop.f32.mrb[0].mxu0
    %v1505 = vadd.f32 %v1440, %v1504
    %v1506 = vpop.f32.mrb[0].mxu0
    %v1507 = vpop.f32.mrb[0].mxu0
    %v1508 = vadd.f32 %v1443, %v1507
    %v1509 = vpop.f32.mrb[0].mxu0
    %1510 = vdwg.mxu0
    %1511 = vmatprep.subr.bf16.mxu0 0
    %1512 = vmatpush1.bf16.msra.mxu0 %v1107
    %1513 = vmatprep.subr.bf16.mxu0 0
    %1514 = vmatpush1.bf16.msra.mxu0 %v1108
    %1515 = vmatprep.subr.bf16.mxu0 0
    %1516 = vmatpush1.bf16.msra.mxu0 %v1109
    %1517 = vmatprep.subr.bf16.mxu0 0
    %1518 = vmatpush1.bf16.msra.mxu0 %v1110
    %1519 = vmatprep.subr.bf16.mxu0 0
    %1520 = vmatpush1.bf16.msra.mxu0 %v1111
    %1521 = vmatprep.subr.bf16.mxu0 0
    %1522 = vmatpush1.bf16.msra.mxu0 %v1112
    %1523 = vmatprep.subr.bf16.mxu0 0
    %1524 = vmatpush1.bf16.msra.mxu0 %v1113
    %1525 = vmatprep.subr.bf16.mxu0 0
    %1526 = vmatpush1.bf16.msra.mxu0 %v1114
    %1527 = vmatprep.subr.bf16.mxu0 0
    %1528 = vmatpush1.bf16.msra.mxu0 %v1115
    %1529 = vmatprep.subr.bf16.mxu0 0
    %1530 = vmatpush1.bf16.msra.mxu0 %v1116
    %1531 = vmatprep.subr.bf16.mxu0 0
    %1532 = vmatpush1.bf16.msra.mxu0 %v1117
    %1533 = vmatprep.subr.bf16.mxu0 0
    %1534 = vmatpush1.bf16.msra.mxu0 %v1118
    %1535 = vmatprep.subr.bf16.mxu0 0
    %1536 = vmatpush1.bf16.msra.mxu0 %v1119
    %1537 = vmatprep.subr.bf16.mxu0 0
    %1538 = vmatpush1.bf16.msra.mxu0 %v1120
    %1539 = vmatprep.subr.bf16.mxu0 0
    %1540 = vmatpush1.bf16.msra.mxu0 %v1121
    %1541 = vmatprep.subr.bf16.mxu0 0
    %1542 = vmatpush1.bf16.msra.mxu0 %v1122
    %1543 = vmatprep.mubr.bf16.mxu0 %v532
    %1544 = vmatmul.mubr.bf16.gmra.mrb[0].mxu0 %v531
    %v1545 = vpop.f32.mrb[0].mxu0
    %v1546 = vadd.f32 %v1481, %v1545
    %v1547 = vpop.f32.mrb[0].mxu0
    %v1548 = vpop.f32.mrb[0].mxu0
    %v1549 = vadd.f32 %v1484, %v1548
    %v1550 = vpop.f32.mrb[0].mxu0
    %1551 = vmatprep.mubr.bf16.mxu0 %v545
    %1552 = vmatmul.mubr.bf16.gmra.mrb[0].mxu0 %v544
    %v1553 = vpop.f32.mrb[0].mxu0
    %v1554 = vadd.f32 %v1489, %v1553
    %v1555 = vpop.f32.mrb[0].mxu0
    %v1556 = vpop.f32.mrb[0].mxu0
    %v1557 = vadd.f32 %v1492, %v1556
    %v1558 = vpop.f32.mrb[0].mxu0
    %1559 = vmatprep.mubr.bf16.mxu0 %v558
    %1560 = vmatmul.mubr.bf16.gmra.mrb[0].mxu0 %v557
    %v1561 = vpop.f32.mrb[0].mxu0
    %v1562 = vadd.f32 %v1497, %v1561
    %v1563 = vpop.f32.mrb[0].mxu0
    %v1564 = vpop.f32.mrb[0].mxu0
    %v1565 = vadd.f32 %v1500, %v1564
    %v1566 = vpop.f32.mrb[0].mxu0
    %1567 = vmatprep.mubr.bf16.mxu0 %v571
    %1568 = vmatmul.mubr.bf16.gmra.mrb[0].mxu0 %v570
    %v1569 = vpop.f32.mrb[0].mxu0
    %v1570 = vadd.f32 %v1505, %v1569
    %v1571 = vpop.f32.mrb[0].mxu0
    %v1572 = vpop.f32.mrb[0].mxu0
    %v1573 = vadd.f32 %v1508, %v1572
    %v1574 = vpop.f32.mrb[0].mxu0
    %1575 = vdwg.mxu0
    %1576 = vmatprep.subr.bf16.mxu0 0
    %1577 = vmatpush1.bf16.msra.mxu0 %v1123
    %1578 = vmatprep.subr.bf16.mxu0 0
    %1579 = vmatpush1.bf16.msra.mxu0 %v1124
    %1580 = vmatprep.subr.bf16.mxu0 0
    %1581 = vmatpush1.bf16.msra.mxu0 %v1125
    %1582 = vmatprep.subr.bf16.mxu0 0
    %1583 = vmatpush1.bf16.msra.mxu0 %v1126
    %1584 = vmatprep.subr.bf16.mxu0 0
    %1585 = vmatpush1.bf16.msra.mxu0 %v1127
    %1586 = vmatprep.subr.bf16.mxu0 0
    %1587 = vmatpush1.bf16.msra.mxu0 %v1128
    %1588 = vmatprep.subr.bf16.mxu0 0
    %1589 = vmatpush1.bf16.msra.mxu0 %v1129
    %1590 = vmatprep.subr.bf16.mxu0 0
    %1591 = vmatpush1.bf16.msra.mxu0 %v1130
    %1592 = vmatprep.subr.bf16.mxu0 0
    %1593 = vmatpush1.bf16.msra.mxu0 %v1131
    %1594 = vmatprep.subr.bf16.mxu0 0
    %1595 = vmatpush1.bf16.msra.mxu0 %v1132
    %1596 = vmatprep.subr.bf16.mxu0 0
    %1597 = vmatpush1.bf16.msra.mxu0 %v1133
    %1598 = vmatprep.subr.bf16.mxu0 0
    %1599 = vmatpush1.bf16.msra.mxu0 %v1134
    %1600 = vmatprep.subr.bf16.mxu0 0
    %1601 = vmatpush1.bf16.msra.mxu0 %v1135
    %1602 = vmatprep.subr.bf16.mxu0 0
    %1603 = vmatpush1.bf16.msra.mxu0 %v1136
    %1604 = vmatprep.subr.bf16.mxu0 0
    %1605 = vmatpush1.bf16.msra.mxu0 %v1137
    %1606 = vmatprep.subr.bf16.mxu0 0
    %1607 = vmatpush1.bf16.msra.mxu0 %v1138
    %1608 = vmatprep.mubr.bf16.mxu0 %v534
    %1609 = vmatmul.mubr.bf16.gmra.mrb[0].mxu0 %v533
    %v1610 = vpop.f32.mrb[0].mxu0
    %v1611 = vadd.f32 %v1546, %v1610
    %v1612 = vpop.f32.mrb[0].mxu0
    %v1613 = vpop.f32.mrb[0].mxu0
    %v1614 = vadd.f32 %v1549, %v1613
    %v1615 = vpop.f32.mrb[0].mxu0
    %1616 = vmatprep.mubr.bf16.mxu0 %v547
    %1617 = vmatmul.mubr.bf16.gmra.mrb[0].mxu0 %v546
    %v1618 = vpop.f32.mrb[0].mxu0
    %v1619 = vadd.f32 %v1554, %v1618
    %v1620 = vpop.f32.mrb[0].mxu0
    %v1621 = vpop.f32.mrb[0].mxu0
    %v1622 = vadd.f32 %v1557, %v1621
    %v1623 = vpop.f32.mrb[0].mxu0
    %1624 = vmatprep.mubr.bf16.mxu0 %v560
    %1625 = vmatmul.mubr.bf16.gmra.mrb[0].mxu0 %v559
    %v1626 = vpop.f32.mrb[0].mxu0
    %v1627 = vadd.f32 %v1562, %v1626
    %v1628 = vpop.f32.mrb[0].mxu0
    %v1629 = vpop.f32.mrb[0].mxu0
    %v1630 = vadd.f32 %v1565, %v1629
    %v1631 = vpop.f32.mrb[0].mxu0
    %1632 = vmatprep.mubr.bf16.mxu0 %v573
    %1633 = vmatmul.mubr.bf16.gmra.mrb[0].mxu0 %v572
    %v1634 = vpop.f32.mrb[0].mxu0
    %v1635 = vadd.f32 %v1570, %v1634
    %v1636 = vpop.f32.mrb[0].mxu0
    %v1637 = vpop.f32.mrb[0].mxu0
    %v1638 = vadd.f32 %v1573, %v1637
    %v1639 = vpop.f32.mrb[0].mxu0
    %1640 = vdwg.mxu0
    %1641 = vmatprep.subr.bf16.mxu0 0
    %1642 = vmatpush1.bf16.msra.mxu0 %v1139
    %1643 = vmatprep.subr.bf16.mxu0 0
    %1644 = vmatpush1.bf16.msra.mxu0 %v1140
    %1645 = vmatprep.subr.bf16.mxu0 0
    %1646 = vmatpush1.bf16.msra.mxu0 %v1141
    %1647 = vmatprep.subr.bf16.mxu0 0
    %1648 = vmatpush1.bf16.msra.mxu0 %v1142
    %1649 = vmatprep.subr.bf16.mxu0 0
    %1650 = vmatpush1.bf16.msra.mxu0 %v1143
    %1651 = vmatprep.subr.bf16.mxu0 0
    %1652 = vmatpush1.bf16.msra.mxu0 %v1144
    %1653 = vmatprep.subr.bf16.mxu0 0
    %1654 = vmatpush1.bf16.msra.mxu0 %v1145
    %1655 = vmatprep.subr.bf16.mxu0 0
    %1656 = vmatpush1.bf16.msra.mxu0 %v1146
    %1657 = vmatprep.subr.bf16.mxu0 0
    %1658 = vmatpush1.bf16.msra.mxu0 0
    %1659 = vmatprep.subr.bf16.mxu0 0
    %1660 = vmatpush1.bf16.msra.mxu0 0
    %1661 = vmatprep.subr.bf16.mxu0 0
    %1662 = vmatpush1.bf16.msra.mxu0 0
    %1663 = vmatprep.subr.bf16.mxu0 0
    %1664 = vmatpush1.bf16.msra.mxu0 0
    %1665 = vmatprep.subr.bf16.mxu0 0
    %1666 = vmatpush1.bf16.msra.mxu0 0
    %1667 = vmatprep.subr.bf16.mxu0 0
    %1668 = vmatpush1.bf16.msra.mxu0 0
    %1669 = vmatprep.subr.bf16.mxu0 0
    %1670 = vmatpush1.bf16.msra.mxu0 0
    %1671 = vmatprep.subr.bf16.mxu0 0
    %1672 = vmatpush1.bf16.msra.mxu0 0
    %1673 = vmatprep.mubr.bf16.mxu0 0
    %1674 = vmatmul.mubr.bf16.gmra.mrb[0].mxu0 %v535
    %v1675 = vpop.f32.mrb[0].mxu0
    %v1676 = vadd.f32 %v1611, %v1675
    %v1677 = vpop.f32.mrb[0].mxu0
    %v1678 = vpop.f32.mrb[0].mxu0
    %v1679 = vadd.f32 %v1614, %v1678
    %v1680 = vpop.f32.mrb[0].mxu0
    %1681 = vmatprep.mubr.bf16.mxu0 0
    %1682 = vmatmul.mubr.bf16.gmra.mrb[0].mxu0 %v548
    %v1683 = vpop.f32.mrb[0].mxu0
    %v1684 = vadd.f32 %v1619, %v1683
    %v1685 = vpop.f32.mrb[0].mxu0
    %v1686 = vpop.f32.mrb[0].mxu0
    %v1687 = vadd.f32 %v1622, %v1686
    %v1688 = vpop.f32.mrb[0].mxu0
    %1689 = vmatprep.mubr.bf16.mxu0 0
    %1690 = vmatmul.mubr.bf16.gmra.mrb[0].mxu0 %v561
    %v1691 = vpop.f32.mrb[0].mxu0
    %v1692 = vadd.f32 %v1627, %v1691
    %v1693 = vpop.f32.mrb[0].mxu0
    %v1694 = vpop.f32.mrb[0].mxu0
    %v1695 = vadd.f32 %v1630, %v1694
    %v1696 = vpop.f32.mrb[0].mxu0
    %1697 = vmatprep.mubr.bf16.mxu0 0
    %1698 = vmatmul.mubr.bf16.gmra.mrb[0].mxu0 %v574
    %v1699 = vpop.f32.mrb[0].mxu0
    %v1700 = vadd.f32 %v1635, %v1699
    %v1701 = vpop.f32.mrb[0].mxu0
    %v1702 = vpop.f32.mrb[0].mxu0
    %v1703 = vadd.f32 %v1638, %v1702
    %v1704 = vpop.f32.mrb[0].mxu0
    %1705 = vdwg.mxu0
    %vm1706 = vcmp.gt.f32.partialorder %v1676, 0.0
    %vm1707 = vcmp.gt.f32.partialorder %v1679, 0.0
    %vm1708 = vcmp.gt.f32.partialorder %v1684, 0.0
    %vm1709 = vcmp.gt.f32.partialorder %v1687, 0.0
    %vm1710 = vcmp.gt.f32.partialorder %v1692, 0.0
    %vm1711 = vcmp.gt.f32.partialorder %v1695, 0.0
    %vm1712 = vcmp.gt.f32.partialorder %v1700, 0.0
    %vm1713 = vcmp.gt.f32.partialorder %v1703, 0.0
    %v1714 = vmul.f32 %v1676, 0.01
    %v1715 = vmul.f32 %v1679, 0.01
    %v1716 = vmul.f32 %v1684, 0.01
    %v1717 = vmul.f32 %v1687, 0.01
    %v1718 = vmul.f32 %v1692, 0.01
    %v1719 = vmul.f32 %v1695, 0.01
    %v1720 = vmul.f32 %v1700, 0.01
    %v1721 = vmul.f32 %v1703, 0.01
    %v1722 = vsel %vm1706, %v1676, %v1714
    %v1723 = vsel %vm1707, %v1679, %v1715
    %v1724 = vsel %vm1708, %v1684, %v1716
    %v1725 = vsel %vm1709, %v1687, %v1717
    %v1726 = vsel %vm1710, %v1692, %v1718
    %v1727 = vsel %vm1711, %v1695, %v1719
    %v1728 = vsel %vm1712, %v1700, %v1720
    %v1729 = vsel %vm1713, %v1703, %v1721
    %v1730 = vpack.c.bf16 %v1723, %v1722
    %v1731 = vpack.c.bf16 %v1725, %v1724
    %v1732 = vpack.c.bf16 %v1727, %v1726
    %v1733 = vpack.c.bf16 %v1729, %v1728
    %v1734 = vld [vmem:[%s5] sm:$0xf]
    %v1735 = vld [vmem:[%s5 + $0x4] sm:$0xf]
    %v1736 = vld [vmem:[%s5 + $0x8] sm:$0xf]
    %v1737 = vld [vmem:[%s5 + $0xc] sm:$0xf]
    %v1738 = vld [vmem:[%s5 + $0x10] sm:$0xf]
    %v1739 = vld [vmem:[%s5 + $0x14] sm:$0xf]
    %v1740 = vld [vmem:[%s5 + $0x18] sm:$0xf]
    %v1741 = vld [vmem:[%s5 + $0x1c] sm:$0xf]
    %v1742 = vld [vmem:[%s6] sm:$0x1]
    %v1744 = vlaneseq
    %v1745 = vshrl.u32 %v1744, 7
    %v1746 = vsub.s32 0, %v1745
    %v1747 = vrot.slane %v1742, %v1746
    %v1757 = vunpack.c.l.b16 %v1734
    %v1758 = vunpack.c.l.b16 %v1735
    %v1759 = vunpack.c.l.b16 %v1736
    %v1760 = vunpack.c.l.b16 %v1737
    %v1761 = vunpack.c.l.b16 %v1738
    %v1762 = vunpack.c.l.b16 %v1739
    %v1763 = vunpack.c.l.b16 %v1740
    %v1764 = vunpack.c.l.b16 %v1741
    %v1765 = vpack.c.b16 %v1758, %v1757
    %v1766 = vpack.c.b16 %v1760, %v1759
    %v1767 = vpack.c.b16 %v1762, %v1761
    %v1768 = vpack.c.b16 %v1764, %v1763
    %vm1773 = vcmask 523264
    %v1775 = vsel %vm1773, %v1730, 0
    %v1778 = vsel %vm1773, %v1731, 0
    %v1781 = vsel %vm1773, %v1732, 0
    %v1784 = vsel %vm1773, %v1733, 0
    %1786 = vmatprep.subr.bf16.mxu0 0
    %1787 = vmatpush1.bf16.msra.mxu0 %v1765
    %1788 = vmatprep.subr.bf16.mxu0 0
    %1789 = vmatpush1.bf16.msra.mxu0 %v1766
    %1790 = vmatprep.subr.bf16.mxu0 0
    %1791 = vmatpush1.bf16.msra.mxu0 %v1767
    %1792 = vmatprep.subr.bf16.mxu0 0
    %1793 = vmatpush1.bf16.msra.mxu0 %v1768
    %1794 = vmatprep.subr.bf16.mxu0 0
    %1795 = vmatpush1.bf16.msra.mxu0 0
    %1796 = vmatprep.subr.bf16.mxu0 0
    %1797 = vmatpush1.bf16.msra.mxu0 0
    %1798 = vmatprep.subr.bf16.mxu0 0
    %1799 = vmatpush1.bf16.msra.mxu0 0
    %1800 = vmatprep.subr.bf16.mxu0 0
    %1801 = vmatpush1.bf16.msra.mxu0 0
    %1802 = vmatprep.subr.bf16.mxu0 0
    %1803 = vmatpush1.bf16.msra.mxu0 0
    %1804 = vmatprep.subr.bf16.mxu0 0
    %1805 = vmatpush1.bf16.msra.mxu0 0
    %1806 = vmatprep.subr.bf16.mxu0 0
    %1807 = vmatpush1.bf16.msra.mxu0 0
    %1808 = vmatprep.subr.bf16.mxu0 0
    %1809 = vmatpush1.bf16.msra.mxu0 0
    %1810 = vmatprep.subr.bf16.mxu0 0
    %1811 = vmatpush1.bf16.msra.mxu0 0
    %1812 = vmatprep.subr.bf16.mxu0 0
    %1813 = vmatpush1.bf16.msra.mxu0 0
    %1814 = vmatprep.subr.bf16.mxu0 0
    %1815 = vmatpush1.bf16.msra.mxu0 0
    %1816 = vmatprep.subr.bf16.mxu0 0
    %1817 = vmatpush1.bf16.msra.mxu0 0
    %1818 = vmatprep.mubr.bf16.mxu0 0
    %1819 = vmatmul.mubr.bf16.gmra.mrb[0].mxu0 %v1775
    %v1820 = vpop.f32.mrb[0].mxu0
    %v1821 = vadd.f32 %v1747, %v1820
    %v1822 = vpop.f32.mrb[0].mxu0
    %v1823 = vpop.f32.mrb[0].mxu0
    %v1824 = vadd.f32 %v1747, %v1823
    %v1825 = vpop.f32.mrb[0].mxu0
    %1826 = vmatprep.mubr.bf16.mxu0 0
    %1827 = vmatmul.mubr.bf16.gmra.mrb[0].mxu0 %v1778
    %v1828 = vpop.f32.mrb[0].mxu0
    %v1829 = vadd.f32 %v1747, %v1828
    %v1830 = vpop.f32.mrb[0].mxu0
    %v1831 = vpop.f32.mrb[0].mxu0
    %v1832 = vadd.f32 %v1747, %v1831
    %v1833 = vpop.f32.mrb[0].mxu0
    %1834 = vmatprep.mubr.bf16.mxu0 0
    %1835 = vmatmul.mubr.bf16.gmra.mrb[0].mxu0 %v1781
    %v1836 = vpop.f32.mrb[0].mxu0
    %v1837 = vadd.f32 %v1747, %v1836
    %v1838 = vpop.f32.mrb[0].mxu0
    %v1839 = vpop.f32.mrb[0].mxu0
    %v1840 = vadd.f32 %v1747, %v1839
    %v1841 = vpop.f32.mrb[0].mxu0
    %1842 = vmatprep.mubr.bf16.mxu0 0
    %1843 = vmatmul.mubr.bf16.gmra.mrb[0].mxu0 %v1784
    %v1844 = vpop.f32.mrb[0].mxu0
    %v1845 = vadd.f32 %v1747, %v1844
    %v1846 = vpop.f32.mrb[0].mxu0
    %v1847 = vpop.f32.mrb[0].mxu0
    %v1848 = vadd.f32 %v1747, %v1847
    %v1849 = vpop.f32.mrb[0].mxu0
    %1850 = vdwg.mxu0
    %vm1851 = vcmp.gt.f32.partialorder %v1821, 0.0
    %vm1852 = vcmp.gt.f32.partialorder %v1824, 0.0
    %vm1853 = vcmp.gt.f32.partialorder %v1829, 0.0
    %vm1854 = vcmp.gt.f32.partialorder %v1832, 0.0
    %vm1855 = vcmp.gt.f32.partialorder %v1837, 0.0
    %vm1856 = vcmp.gt.f32.partialorder %v1840, 0.0
    %vm1857 = vcmp.gt.f32.partialorder %v1845, 0.0
    %vm1858 = vcmp.gt.f32.partialorder %v1848, 0.0
    %v1859 = vmul.f32 %v1821, 0.01
    %v1860 = vmul.f32 %v1824, 0.01
    %v1861 = vmul.f32 %v1829, 0.01
    %v1862 = vmul.f32 %v1832, 0.01
    %v1863 = vmul.f32 %v1837, 0.01
    %v1864 = vmul.f32 %v1840, 0.01
    %v1865 = vmul.f32 %v1845, 0.01
    %v1866 = vmul.f32 %v1848, 0.01
    %v1867 = vsel %vm1851, %v1821, %v1859
    %v1868 = vsel %vm1852, %v1824, %v1860
    %v1869 = vsel %vm1853, %v1829, %v1861
    %v1870 = vsel %vm1854, %v1832, %v1862
    %v1871 = vsel %vm1855, %v1837, %v1863
    %v1872 = vsel %vm1856, %v1840, %v1864
    %v1873 = vsel %vm1857, %v1845, %v1865
    %v1874 = vsel %vm1858, %v1848, %v1866
    %v1875 = vpack.c.bf16 %v1868, %v1867
    %v1876 = vpack.c.bf16 %v1870, %v1869
    %v1877 = vpack.c.bf16 %v1872, %v1871
    %v1878 = vpack.c.bf16 %v1874, %v1873
    %v1879 = vld [vmem:[%s7] sm:$0xf]
    %v1880 = vld [vmem:[%s7 + $0x4] sm:$0xf]
    %v1881 = vld [vmem:[%s7 + $0x8] sm:$0xf]
    %v1882 = vld [vmem:[%s7 + $0xc] sm:$0xf]
    %v1887 = vunpack.c.l.b16 %v1879
    %v1888 = vunpack.c.l.b16 %v1880
    %v1889 = vunpack.c.l.b16 %v1881
    %v1890 = vunpack.c.l.b16 %v1882
    %v1891 = vpack.c.b16 %v1888, %v1887
    %v1892 = vpack.c.b16 %v1890, %v1889
    %vm1895 = vcmask 261120
    %v1897 = vsel %vm1895, %v1875, 0
    %v1900 = vsel %vm1895, %v1876, 0
    %v1903 = vsel %vm1895, %v1877, 0
    %v1906 = vsel %vm1895, %v1878, 0
    %1908 = vmatprep.subr.bf16.mxu0 0
    %1909 = vmatpush1.bf16.msra.mxu0 %v1891
    %1910 = vmatprep.subr.bf16.mxu0 0
    %1911 = vmatpush1.bf16.msra.mxu0 %v1892
    %1912 = vmatprep.subr.bf16.mxu0 0
    %1913 = vmatpush1.bf16.msra.mxu0 0
    %1914 = vmatprep.subr.bf16.mxu0 0
    %1915 = vmatpush1.bf16.msra.mxu0 0
    %1916 = vmatprep.subr.bf16.mxu0 0
    %1917 = vmatpush1.bf16.msra.mxu0 0
    %1918 = vmatprep.subr.bf16.mxu0 0
    %1919 = vmatpush1.bf16.msra.mxu0 0
    %1920 = vmatprep.subr.bf16.mxu0 0
    %1921 = vmatpush1.bf16.msra.mxu0 0
    %1922 = vmatprep.subr.bf16.mxu0 0
    %1923 = vmatpush1.bf16.msra.mxu0 0
    %1924 = vmatprep.subr.bf16.mxu0 0
    %1925 = vmatpush1.bf16.msra.mxu0 0
    %1926 = vmatprep.subr.bf16.mxu0 0
    %1927 = vmatpush1.bf16.msra.mxu0 0
    %1928 = vmatprep.subr.bf16.mxu0 0
    %1929 = vmatpush1.bf16.msra.mxu0 0
    %1930 = vmatprep.subr.bf16.mxu0 0
    %1931 = vmatpush1.bf16.msra.mxu0 0
    %1932 = vmatprep.subr.bf16.mxu0 0
    %1933 = vmatpush1.bf16.msra.mxu0 0
    %1934 = vmatprep.subr.bf16.mxu0 0
    %1935 = vmatpush1.bf16.msra.mxu0 0
    %1936 = vmatprep.subr.bf16.mxu0 0
    %1937 = vmatpush1.bf16.msra.mxu0 0
    %1938 = vmatprep.subr.bf16.mxu0 0
    %1939 = vmatpush1.bf16.msra.mxu0 0
    %1940 = vmatprep.mubr.bf16.mxu0 0
    %1941 = vmatmul.mubr.bf16.gmra.mrb[0].mxu0 %v1897
    %v1942 = vpop.f32.mrb[0].mxu0
    %v1943 = vadd.f32 0.0, %v1942
    %v1944 = vpop.f32.mrb[0].mxu0
    %v1945 = vpop.f32.mrb[0].mxu0
    %v1946 = vadd.f32 0.0, %v1945
    %v1947 = vpop.f32.mrb[0].mxu0
    %1948 = vmatprep.mubr.bf16.mxu0 0
    %1949 = vmatmul.mubr.bf16.gmra.mrb[0].mxu0 %v1900
    %v1950 = vpop.f32.mrb[0].mxu0
    %v1951 = vadd.f32 0.0, %v1950
    %v1952 = vpop.f32.mrb[0].mxu0
    %v1953 = vpop.f32.mrb[0].mxu0
    %v1954 = vadd.f32 0.0, %v1953
    %v1955 = vpop.f32.mrb[0].mxu0
    %1956 = vmatprep.mubr.bf16.mxu0 0
    %1957 = vmatmul.mubr.bf16.gmra.mrb[0].mxu0 %v1903
    %v1958 = vpop.f32.mrb[0].mxu0
    %v1959 = vadd.f32 0.0, %v1958
    %v1960 = vpop.f32.mrb[0].mxu0
    %v1961 = vpop.f32.mrb[0].mxu0
    %v1962 = vadd.f32 0.0, %v1961
    %v1963 = vpop.f32.mrb[0].mxu0
    %1964 = vmatprep.mubr.bf16.mxu0 0
    %1965 = vmatmul.mubr.bf16.gmra.mrb[0].mxu0 %v1906
    %v1966 = vpop.f32.mrb[0].mxu0
    %v1967 = vadd.f32 0.0, %v1966
    %v1968 = vpop.f32.mrb[0].mxu0
    %v1969 = vpop.f32.mrb[0].mxu0
    %v1970 = vadd.f32 0.0, %v1969
    %v1971 = vpop.f32.mrb[0].mxu0
    %1972 = vdwg.mxu0
    %v1973 = vpack.c.bf16 %v1946, %v1943
    %v1974 = vpack.c.bf16 %v1954, %v1951
    %v1975 = vpack.c.bf16 %v1962, %v1959
    %v1976 = vpack.c.bf16 %v1970, %v1967
    %v1977 = vld [vmem:[%s8] sm:$0x3]
    %v1979 = vsel %vm1895, %v1977, 0
    %v1982 = vsel %vm1895, %v1973, 0
    %v1985 = vsel %vm1895, %v1974, 0
    %v1988 = vsel %vm1895, %v1975, 0
    %v1991 = vsel %vm1895, %v1976, 0
    %1993 = vmatprep.subr.bf16.mxu0 0
    %1994 = vmatpush1.bf16.xpose.msra.mxu0 %v1982
    %1995 = vmatprep.subr.bf16.mxu0 0
    %1996 = vmatpush1.bf16.xpose.msra.mxu0 %v1985
    %1997 = vmatprep.subr.bf16.mxu0 0
    %1998 = vmatpush1.bf16.xpose.msra.mxu0 %v1988
    %1999 = vmatprep.subr.bf16.mxu0 0
    %2000 = vmatpush1.bf16.xpose.msra.mxu0 %v1991
    %2001 = vmatprep.subr.bf16.mxu0 0
    %2002 = vmatpush1.bf16.xpose.msra.mxu0 0
    %2003 = vmatprep.subr.bf16.mxu0 0
    %2004 = vmatpush1.bf16.xpose.msra.mxu0 0
    %2005 = vmatprep.subr.bf16.mxu0 0
    %2006 = vmatpush1.bf16.xpose.msra.mxu0 0
    %2007 = vmatprep.subr.bf16.mxu0 0
    %2008 = vmatpush1.bf16.xpose.msra.mxu0 0
    %2009 = vmatprep.subr.bf16.mxu0 0
    %2010 = vmatpush1.bf16.xpose.msra.mxu0 0
    %2011 = vmatprep.subr.bf16.mxu0 0
    %2012 = vmatpush1.bf16.xpose.msra.mxu0 0
    %2013 = vmatprep.subr.bf16.mxu0 0
    %2014 = vmatpush1.bf16.xpose.msra.mxu0 0
    %2015 = vmatprep.subr.bf16.mxu0 0
    %2016 = vmatpush1.bf16.xpose.msra.mxu0 0
    %2017 = vmatprep.subr.bf16.mxu0 0
    %2018 = vmatpush1.bf16.xpose.msra.mxu0 0
    %2019 = vmatprep.subr.bf16.mxu0 0
    %2020 = vmatpush1.bf16.xpose.msra.mxu0 0
    %2021 = vmatprep.subr.bf16.mxu0 0
    %2022 = vmatpush1.bf16.xpose.msra.mxu0 0
    %2023 = vmatprep.subr.bf16.mxu0 0
    %2024 = vmatpush1.bf16.xpose.msra.mxu0 0
    %2025 = vmatprep.mubr.bf16.mxu0 0
    %2026 = vmatmul.mubr.bf16.gmra.mrb[0].mxu0 %v1979
    %v2027 = vpop.f32.mrb[0].mxu0
    %v2028 = vadd.f32 0.0, %v2027
    %v2029 = vpop.f32.mrb[0].mxu0
    %v2030 = vpop.f32.mrb[0].mxu0
    %v2031 = vpop.f32.mrb[0].mxu0
    %2032 = vdwg.mxu0
    %2034 = vset.pattern.permute.xlu0 32
    %2035 = vperm.xlu0 %2034, %v1943
    %v2036 = vpop.permute.xlu0 %2035
    %2039 = vset.pattern.permute.xlu0 32
    %2040 = vperm.xlu0 %2039, %v1946
    %v2041 = vpop.permute.xlu0 %2040
    %2044 = vset.pattern.permute.xlu0 32
    %2045 = vperm.xlu0 %2044, %v1951
    %v2046 = vpop.permute.xlu0 %2045
    %2049 = vset.pattern.permute.xlu0 32
    %2050 = vperm.xlu0 %2049, %v1954
    %v2051 = vpop.permute.xlu0 %2050
    %2054 = vset.pattern.permute.xlu0 32
    %2055 = vperm.xlu0 %2054, %v1959
    %v2056 = vpop.permute.xlu0 %2055
    %2059 = vset.pattern.permute.xlu0 32
    %2060 = vperm.xlu0 %2059, %v1962
    %v2061 = vpop.permute.xlu0 %2060
    %2064 = vset.pattern.permute.xlu0 32
    %2065 = vperm.xlu0 %2064, %v1967
    %v2066 = vpop.permute.xlu0 %2065
    %2069 = vset.pattern.permute.xlu0 32
    %2070 = vperm.xlu0 %2069, %v1970
    %v2071 = vpop.permute.xlu0 %2070
    %v2073 = vlaneseq
    %v2074 = vshrl.u32 %v2073, 7
    %v2075 = vsub.s32 0, %v2074
    %v2076 = vrot.slane %v2028, %v2075
    %v2077 = vadd.f32 %v2036, %v2076
    %v2078 = vadd.f32 %v2041, %v2076
    %v2079 = vadd.f32 %v2046, %v2076
    %v2080 = vadd.f32 %v2051, %v2076
    %v2081 = vadd.f32 %v2056, %v2076
    %v2082 = vadd.f32 %v2061, %v2076
    %v2083 = vadd.f32 %v2066, %v2076
    %v2084 = vadd.f32 %v2071, %v2076
    %vm2085 = vcmp.gt.f32.partialorder %v2077, 0.0
    %vm2086 = vcmp.gt.f32.partialorder %v2078, 0.0
    %vm2087 = vcmp.gt.f32.partialorder %v2079, 0.0
    %vm2088 = vcmp.gt.f32.partialorder %v2080, 0.0
    %vm2089 = vcmp.gt.f32.partialorder %v2081, 0.0
    %vm2090 = vcmp.gt.f32.partialorder %v2082, 0.0
    %vm2091 = vcmp.gt.f32.partialorder %v2083, 0.0
    %vm2092 = vcmp.gt.f32.partialorder %v2084, 0.0
    %v2093 = vmul.f32 %v2077, 0.2
    %v2094 = vmul.f32 %v2078, 0.2
    %v2095 = vmul.f32 %v2079, 0.2
    %v2096 = vmul.f32 %v2080, 0.2
    %v2097 = vmul.f32 %v2081, 0.2
    %v2098 = vmul.f32 %v2082, 0.2
    %v2099 = vmul.f32 %v2083, 0.2
    %v2100 = vmul.f32 %v2084, 0.2
    %v2101 = vsel %vm2085, %v2077, %v2093
    %v2102 = vsel %vm2086, %v2078, %v2094
    %v2103 = vsel %vm2087, %v2079, %v2095
    %v2104 = vsel %vm2088, %v2080, %v2096
    %v2105 = vsel %vm2089, %v2081, %v2097
    %v2106 = vsel %vm2090, %v2082, %v2098
    %v2107 = vsel %vm2091, %v2083, %v2099
    %v2108 = vsel %vm2092, %v2084, %v2100
    %v2109 = vadd.f32 %v2101, %v132
    %v2110 = vadd.f32 %v2102, %v133
    %v2111 = vadd.f32 %v2103, %v134
    %v2112 = vadd.f32 %v2104, %v135
    %v2113 = vadd.f32 %v2105, %v136
    %v2114 = vadd.f32 %v2106, %v137
    %v2115 = vadd.f32 %v2107, %v138
    %v2116 = vadd.f32 %v2108, %v139
    %v2117 = vsel %vm1773, %v2109, -inf
    %2118 = vmax.xlane.f32.xlu0 %v2117
    %v2119 = vpop.xlane.xlu0 %2118
    %v2120 = vsel %vm1773, %v2110, -inf
    %2121 = vmax.xlane.f32.xlu0 %v2120
    %v2122 = vpop.xlane.xlu0 %2121
    %v2123 = vsel %vm1773, %v2111, -inf
    %2124 = vmax.xlane.f32.xlu0 %v2123
    %v2125 = vpop.xlane.xlu0 %2124
    %v2126 = vsel %vm1773, %v2112, -inf
    %2127 = vmax.xlane.f32.xlu0 %v2126
    %v2128 = vpop.xlane.xlu0 %2127
    %v2129 = vsel %vm1773, %v2113, -inf
    %2130 = vmax.xlane.f32.xlu0 %v2129
    %v2131 = vpop.xlane.xlu0 %2130
    %v2132 = vsel %vm1773, %v2114, -inf
    %2133 = vmax.xlane.f32.xlu0 %v2132
    %v2134 = vpop.xlane.xlu0 %2133
    %v2135 = vsel %vm1773, %v2115, -inf
    %2136 = vmax.xlane.f32.xlu0 %v2135
    %v2137 = vpop.xlane.xlu0 %2136
    %v2138 = vsel %vm1773, %v2116, -inf
    %2139 = vmax.xlane.f32.xlu0 %v2138
    %v2140 = vpop.xlane.xlu0 %2139
    %v2141 = vsub.f32 %v2109, %v2119
    %v2142 = vsub.f32 %v2110, %v2122
    %v2143 = vsub.f32 %v2111, %v2125
    %v2144 = vsub.f32 %v2112, %v2128
    %v2145 = vsub.f32 %v2113, %v2131
    %v2146 = vsub.f32 %v2114, %v2134
    %v2147 = vsub.f32 %v2115, %v2137
    %v2148 = vsub.f32 %v2116, %v2140
    %v2149 = vmul.f32 %v2141, 1.442695
    %v2150 = vpow.pop %v2149
    %v2151 = vmul.f32 %v2142, 1.442695
    %v2152 = vpow.pop %v2151
    %v2153 = vmul.f32 %v2143, 1.442695
    %v2154 = vpow.pop %v2153
    %v2155 = vmul.f32 %v2144, 1.442695
    %v2156 = vpow.pop %v2155
    %v2157 = vmul.f32 %v2145, 1.442695
    %v2158 = vpow.pop %v2157
    %v2159 = vmul.f32 %v2146, 1.442695
    %v2160 = vpow.pop %v2159
    %v2161 = vmul.f32 %v2147, 1.442695
    %v2162 = vpow.pop %v2161
    %v2163 = vmul.f32 %v2148, 1.442695
    %v2164 = vpow.pop %v2163
    %v2165 = vsel %vm1773, %v2150, 0.0
    %2166 = vadd.xlane.f32.xlu0 %v2165
    %v2167 = vpop.xlane.xlu0 %2166
    %v2168 = vsel %vm1773, %v2152, 0.0
    %2169 = vadd.xlane.f32.xlu0 %v2168
    %v2170 = vpop.xlane.xlu0 %2169
    %v2171 = vsel %vm1773, %v2154, 0.0
    %2172 = vadd.xlane.f32.xlu0 %v2171
    %v2173 = vpop.xlane.xlu0 %2172
    %v2174 = vsel %vm1773, %v2156, 0.0
    %2175 = vadd.xlane.f32.xlu0 %v2174
    %v2176 = vpop.xlane.xlu0 %2175
    %v2177 = vsel %vm1773, %v2158, 0.0
    %2178 = vadd.xlane.f32.xlu0 %v2177
    %v2179 = vpop.xlane.xlu0 %2178
    %v2180 = vsel %vm1773, %v2160, 0.0
    %2181 = vadd.xlane.f32.xlu0 %v2180
    %v2182 = vpop.xlane.xlu0 %2181
    %v2183 = vsel %vm1773, %v2162, 0.0
    %2184 = vadd.xlane.f32.xlu0 %v2183
    %v2185 = vpop.xlane.xlu0 %2184
    %v2186 = vsel %vm1773, %v2164, 0.0
    %2187 = vadd.xlane.f32.xlu0 %v2186
    %v2188 = vpop.xlane.xlu0 %2187
    %v2189 = vrcp.pop %v2167
    %v2190 = vrcp.pop %v2170
    %v2191 = vrcp.pop %v2173
    %v2192 = vrcp.pop %v2176
    %v2193 = vrcp.pop %v2179
    %v2194 = vrcp.pop %v2182
    %v2195 = vrcp.pop %v2185
    %v2196 = vrcp.pop %v2188
    %v2197 = vmul.f32 %v2150, %v2189
    %v2198 = vmul.f32 %v2152, %v2190
    %v2199 = vmul.f32 %v2154, %v2191
    %v2200 = vmul.f32 %v2156, %v2192
    %v2201 = vmul.f32 %v2158, %v2193
    %v2202 = vmul.f32 %v2160, %v2194
    %v2203 = vmul.f32 %v2162, %v2195
    %v2204 = vmul.f32 %v2164, %v2196
    %v2205 = vld [vmem:[%s9] sm:$0x1]
    %v2206 = vlaneseq
    %v2207 = vshrl.u32 %v2206, 7
    %v2208 = vsub.s32 0, %v2207
    %v2209 = vrot.slane %v2205, %v2208
    %v2210 = vmul.f32 %v1943, %v2209
    %v2211 = vmul.f32 %v1946, %v2209
    %v2212 = vmul.f32 %v1951, %v2209
    %v2213 = vmul.f32 %v1954, %v2209
    %v2214 = vmul.f32 %v1959, %v2209
    %v2215 = vmul.f32 %v1962, %v2209
    %v2216 = vmul.f32 %v1967, %v2209
    %v2217 = vmul.f32 %v1970, %v2209
    %v2218 = vpack.c.bf16 %v2211, %v2210
    %v2219 = vpack.c.bf16 %v2213, %v2212
    %v2220 = vpack.c.bf16 %v2215, %v2214
    %v2221 = vpack.c.bf16 %v2217, %v2216
    %v2222 = vpack.c.bf16 %v2198, %v2197
    %v2223 = vpack.c.bf16 %v2200, %v2199
    %v2224 = vpack.c.bf16 %v2202, %v2201
    %v2225 = vpack.c.bf16 %v2204, %v2203
    %2226 = vset.pattern.permute.xlu0 33
    %2227 = vperm.xlu0 %2226, %v1943
    %v2228 = vpop.permute.xlu0 %2227
    %2230 = vset.pattern.permute.xlu0 33
    %2231 = vperm.xlu0 %2230, %v1946
    %v2232 = vpop.permute.xlu0 %2231
    %2234 = vset.pattern.permute.xlu0 33
    %2235 = vperm.xlu0 %2234, %v1951
    %v2236 = vpop.permute.xlu0 %2235
    %2238 = vset.pattern.permute.xlu0 33
    %2239 = vperm.xlu0 %2238, %v1954
    %v2240 = vpop.permute.xlu0 %2239
    %2242 = vset.pattern.permute.xlu0 33
    %2243 = vperm.xlu0 %2242, %v1959
    %v2244 = vpop.permute.xlu0 %2243
    %2246 = vset.pattern.permute.xlu0 33
    %2247 = vperm.xlu0 %2246, %v1962
    %v2248 = vpop.permute.xlu0 %2247
    %2250 = vset.pattern.permute.xlu0 33
    %2251 = vperm.xlu0 %2250, %v1967
    %v2252 = vpop.permute.xlu0 %2251
    %2254 = vset.pattern.permute.xlu0 33
    %2255 = vperm.xlu0 %2254, %v1970
    %v2256 = vpop.permute.xlu0 %2255
    %v2258 = vlaneseq
    %v2259 = vshrl.u32 %v2258, 7
    %v2260 = vsub.s32 1, %v2259
    %v2261 = vrot.slane %v2028, %v2260
    %v2262 = vadd.f32 %v2228, %v2261
    %v2263 = vadd.f32 %v2232, %v2261
    %v2264 = vadd.f32 %v2236, %v2261
    %v2265 = vadd.f32 %v2240, %v2261
    %v2266 = vadd.f32 %v2244, %v2261
    %v2267 = vadd.f32 %v2248, %v2261
    %v2268 = vadd.f32 %v2252, %v2261
    %v2269 = vadd.f32 %v2256, %v2261
    %vm2270 = vcmp.gt.f32.partialorder %v2262, 0.0
    %vm2271 = vcmp.gt.f32.partialorder %v2263, 0.0
    %vm2272 = vcmp.gt.f32.partialorder %v2264, 0.0
    %vm2273 = vcmp.gt.f32.partialorder %v2265, 0.0
    %vm2274 = vcmp.gt.f32.partialorder %v2266, 0.0
    %vm2275 = vcmp.gt.f32.partialorder %v2267, 0.0
    %vm2276 = vcmp.gt.f32.partialorder %v2268, 0.0
    %vm2277 = vcmp.gt.f32.partialorder %v2269, 0.0
    %v2278 = vmul.f32 %v2262, 0.2
    %v2279 = vmul.f32 %v2263, 0.2
    %v2280 = vmul.f32 %v2264, 0.2
    %v2281 = vmul.f32 %v2265, 0.2
    %v2282 = vmul.f32 %v2266, 0.2
    %v2283 = vmul.f32 %v2267, 0.2
    %v2284 = vmul.f32 %v2268, 0.2
    %v2285 = vmul.f32 %v2269, 0.2
    %v2286 = vsel %vm2270, %v2262, %v2278
    %v2287 = vsel %vm2271, %v2263, %v2279
    %v2288 = vsel %vm2272, %v2264, %v2280
    %v2289 = vsel %vm2273, %v2265, %v2281
    %v2290 = vsel %vm2274, %v2266, %v2282
    %v2291 = vsel %vm2275, %v2267, %v2283
    %v2292 = vsel %vm2276, %v2268, %v2284
    %v2293 = vsel %vm2277, %v2269, %v2285
    %v2294 = vadd.f32 %v2286, %v132
    %v2295 = vadd.f32 %v2287, %v133
    %v2296 = vadd.f32 %v2288, %v134
    %v2297 = vadd.f32 %v2289, %v135
    %v2298 = vadd.f32 %v2290, %v136
    %v2299 = vadd.f32 %v2291, %v137
    %v2300 = vadd.f32 %v2292, %v138
    %v2301 = vadd.f32 %v2293, %v139
    %v2302 = vsel %vm1773, %v2294, -inf
    %2303 = vmax.xlane.f32.xlu0 %v2302
    %v2304 = vpop.xlane.xlu0 %2303
    %v2305 = vsel %vm1773, %v2295, -inf
    %2306 = vmax.xlane.f32.xlu0 %v2305
    %v2307 = vpop.xlane.xlu0 %2306
    %v2308 = vsel %vm1773, %v2296, -inf
    %2309 = vmax.xlane.f32.xlu0 %v2308
    %v2310 = vpop.xlane.xlu0 %2309
    %v2311 = vsel %vm1773, %v2297, -inf
    %2312 = vmax.xlane.f32.xlu0 %v2311
    %v2313 = vpop.xlane.xlu0 %2312
    %v2314 = vsel %vm1773, %v2298, -inf
    %2315 = vmax.xlane.f32.xlu0 %v2314
    %v2316 = vpop.xlane.xlu0 %2315
    %v2317 = vsel %vm1773, %v2299, -inf
    %2318 = vmax.xlane.f32.xlu0 %v2317
    %v2319 = vpop.xlane.xlu0 %2318
    %v2320 = vsel %vm1773, %v2300, -inf
    %2321 = vmax.xlane.f32.xlu0 %v2320
    %v2322 = vpop.xlane.xlu0 %2321
    %v2323 = vsel %vm1773, %v2301, -inf
    %2324 = vmax.xlane.f32.xlu0 %v2323
    %v2325 = vpop.xlane.xlu0 %2324
    %v2326 = vsub.f32 %v2294, %v2304
    %v2327 = vsub.f32 %v2295, %v2307
    %v2328 = vsub.f32 %v2296, %v2310
    %v2329 = vsub.f32 %v2297, %v2313
    %v2330 = vsub.f32 %v2298, %v2316
    %v2331 = vsub.f32 %v2299, %v2319
    %v2332 = vsub.f32 %v2300, %v2322
    %v2333 = vsub.f32 %v2301, %v2325
    %v2334 = vmul.f32 %v2326, 1.442695
    %v2335 = vpow.pop %v2334
    %v2336 = vmul.f32 %v2327, 1.442695
    %v2337 = vpow.pop %v2336
    %v2338 = vmul.f32 %v2328, 1.442695
    %v2339 = vpow.pop %v2338
    %v2340 = vmul.f32 %v2329, 1.442695
    %v2341 = vpow.pop %v2340
    %v2342 = vmul.f32 %v2330, 1.442695
    %v2343 = vpow.pop %v2342
    %v2344 = vmul.f32 %v2331, 1.442695
    %v2345 = vpow.pop %v2344
    %v2346 = vmul.f32 %v2332, 1.442695
    %v2347 = vpow.pop %v2346
    %v2348 = vmul.f32 %v2333, 1.442695
    %v2349 = vpow.pop %v2348
    %v2350 = vsel %vm1773, %v2335, 0.0
    %2351 = vadd.xlane.f32.xlu0 %v2350
    %v2352 = vpop.xlane.xlu0 %2351
    %v2353 = vsel %vm1773, %v2337, 0.0
    %2354 = vadd.xlane.f32.xlu0 %v2353
    %v2355 = vpop.xlane.xlu0 %2354
    %v2356 = vsel %vm1773, %v2339, 0.0
    %2357 = vadd.xlane.f32.xlu0 %v2356
    %v2358 = vpop.xlane.xlu0 %2357
    %v2359 = vsel %vm1773, %v2341, 0.0
    %2360 = vadd.xlane.f32.xlu0 %v2359
    %v2361 = vpop.xlane.xlu0 %2360
    %v2362 = vsel %vm1773, %v2343, 0.0
    %2363 = vadd.xlane.f32.xlu0 %v2362
    %v2364 = vpop.xlane.xlu0 %2363
    %v2365 = vsel %vm1773, %v2345, 0.0
    %2366 = vadd.xlane.f32.xlu0 %v2365
    %v2367 = vpop.xlane.xlu0 %2366
    %v2368 = vsel %vm1773, %v2347, 0.0
    %2369 = vadd.xlane.f32.xlu0 %v2368
    %v2370 = vpop.xlane.xlu0 %2369
    %v2371 = vsel %vm1773, %v2349, 0.0
    %2372 = vadd.xlane.f32.xlu0 %v2371
    %v2373 = vpop.xlane.xlu0 %2372
    %v2374 = vrcp.pop %v2352
    %v2375 = vrcp.pop %v2355
    %v2376 = vrcp.pop %v2358
    %v2377 = vrcp.pop %v2361
    %v2378 = vrcp.pop %v2364
    %v2379 = vrcp.pop %v2367
    %v2380 = vrcp.pop %v2370
    %v2381 = vrcp.pop %v2373
    %v2382 = vmul.f32 %v2335, %v2374
    %v2383 = vmul.f32 %v2337, %v2375
    %v2384 = vmul.f32 %v2339, %v2376
    %v2385 = vmul.f32 %v2341, %v2377
    %v2386 = vmul.f32 %v2343, %v2378
    %v2387 = vmul.f32 %v2345, %v2379
    %v2388 = vmul.f32 %v2347, %v2380
    %v2389 = vmul.f32 %v2349, %v2381
    %v2390 = vld [vmem:[%s9 + $0x1] sm:$0x1]
    %v2391 = vlaneseq
    %v2392 = vshrl.u32 %v2391, 7
    %v2393 = vsub.s32 0, %v2392
    %v2394 = vrot.slane %v2390, %v2393
    %v2395 = vmul.f32 %v1943, %v2394
    %v2396 = vmul.f32 %v1946, %v2394
    %v2397 = vmul.f32 %v1951, %v2394
    %v2398 = vmul.f32 %v1954, %v2394
    %v2399 = vmul.f32 %v1959, %v2394
    %v2400 = vmul.f32 %v1962, %v2394
    %v2401 = vmul.f32 %v1967, %v2394
    %v2402 = vmul.f32 %v1970, %v2394
    %v2403 = vpack.c.bf16 %v2396, %v2395
    %v2404 = vpack.c.bf16 %v2398, %v2397
    %v2405 = vpack.c.bf16 %v2400, %v2399
    %v2406 = vpack.c.bf16 %v2402, %v2401
    %v2407 = vpack.c.bf16 %v2383, %v2382
    %v2408 = vpack.c.bf16 %v2385, %v2384
    %v2409 = vpack.c.bf16 %v2387, %v2386
    %v2410 = vpack.c.bf16 %v2389, %v2388
    %v2412 = vsel %vm1773, %v2407, 0
    %v2415 = vsel %vm1773, %v2408, 0
    %v2418 = vsel %vm1773, %v2409, 0
    %v2421 = vsel %vm1773, %v2410, 0
    %2423 = vmatprep.subr.bf16.mxu0 0
    %2424 = vmatpush1.bf16.msra.mxu0 %v2403
    %2425 = vmatprep.subr.bf16.mxu0 0
    %2426 = vmatpush1.bf16.msra.mxu0 %v2404
    %2427 = vmatprep.subr.bf16.mxu0 0
    %2428 = vmatpush1.bf16.msra.mxu0 %v2405
    %2429 = vmatprep.subr.bf16.mxu0 0
    %2430 = vmatpush1.bf16.msra.mxu0 %v2406
    %2431 = vmatprep.subr.bf16.mxu0 0
    %2432 = vmatpush1.bf16.msra.mxu0 0
    %2433 = vmatprep.subr.bf16.mxu0 0
    %2434 = vmatpush1.bf16.msra.mxu0 0
    %2435 = vmatprep.subr.bf16.mxu0 0
    %2436 = vmatpush1.bf16.msra.mxu0 0
    %2437 = vmatprep.subr.bf16.mxu0 0
    %2438 = vmatpush1.bf16.msra.mxu0 0
    %2439 = vmatprep.subr.bf16.mxu0 0
    %2440 = vmatpush1.bf16.msra.mxu0 0
    %2441 = vmatprep.subr.bf16.mxu0 0
    %2442 = vmatpush1.bf16.msra.mxu0 0
    %2443 = vmatprep.subr.bf16.mxu0 0
    %2444 = vmatpush1.bf16.msra.mxu0 0
    %2445 = vmatprep.subr.bf16.mxu0 0
    %2446 = vmatpush1.bf16.msra.mxu0 0
    %2447 = vmatprep.subr.bf16.mxu0 0
    %2448 = vmatpush1.bf16.msra.mxu0 0
    %2449 = vmatprep.subr.bf16.mxu0 0
    %2450 = vmatpush1.bf16.msra.mxu0 0
    %2451 = vmatprep.subr.bf16.mxu0 0
    %2452 = vmatpush1.bf16.msra.mxu0 0
    %2453 = vmatprep.subr.bf16.mxu0 0
    %2454 = vmatpush1.bf16.msra.mxu0 0
    %2455 = vmatprep.mubr.bf16.mxu0 0
    %2456 = vmatmul.mubr.bf16.gmra.mrb[0].mxu0 %v2412
    %v2457 = vpop.f32.mrb[0].mxu0
    %v2458 = vadd.f32 0.0, %v2457
    %v2459 = vpop.f32.mrb[0].mxu0
    %v2460 = vpop.f32.mrb[0].mxu0
    %v2461 = vadd.f32 0.0, %v2460
    %v2462 = vpop.f32.mrb[0].mxu0
    %2463 = vmatprep.mubr.bf16.mxu0 0
    %2464 = vmatmul.mubr.bf16.gmra.mrb[0].mxu0 %v2415
    %v2465 = vpop.f32.mrb[0].mxu0
    %v2466 = vadd.f32 0.0, %v2465
    %v2467 = vpop.f32.mrb[0].mxu0
    %v2468 = vpop.f32.mrb[0].mxu0
    %v2469 = vadd.f32 0.0, %v2468
    %v2470 = vpop.f32.mrb[0].mxu0
    %2471 = vmatprep.mubr.bf16.mxu0 0
    %2472 = vmatmul.mubr.bf16.gmra.mrb[0].mxu0 %v2418
    %v2473 = vpop.f32.mrb[0].mxu0
    %v2474 = vadd.f32 0.0, %v2473
    %v2475 = vpop.f32.mrb[0].mxu0
    %v2476 = vpop.f32.mrb[0].mxu0
    %v2477 = vadd.f32 0.0, %v2476
    %v2478 = vpop.f32.mrb[0].mxu0
    %2479 = vmatprep.mubr.bf16.mxu0 0
    %2480 = vmatmul.mubr.bf16.gmra.mrb[0].mxu0 %v2421
    %v2481 = vpop.f32.mrb[0].mxu0
    %v2482 = vadd.f32 0.0, %v2481
    %v2483 = vpop.f32.mrb[0].mxu0
    %v2484 = vpop.f32.mrb[0].mxu0
    %v2485 = vadd.f32 0.0, %v2484
    %v2486 = vpop.f32.mrb[0].mxu0
    %2487 = vdwg.mxu0
    %v2489 = vsel %vm1773, %v2222, 0
    %v2492 = vsel %vm1773, %v2223, 0
    %v2495 = vsel %vm1773, %v2224, 0
    %v2498 = vsel %vm1773, %v2225, 0
    %2500 = vmatprep.subr.bf16.mxu0 0
    %2501 = vmatpush1.bf16.msra.mxu0 %v2218
    %2502 = vmatprep.subr.bf16.mxu0 0
    %2503 = vmatpush1.bf16.msra.mxu0 %v2219
    %2504 = vmatprep.subr.bf16.mxu0 0
    %2505 = vmatpush1.bf16.msra.mxu0 %v2220
    %2506 = vmatprep.subr.bf16.mxu0 0
    %2507 = vmatpush1.bf16.msra.mxu0 %v2221
    %2508 = vmatprep.subr.bf16.mxu0 0
    %2509 = vmatpush1.bf16.msra.mxu0 0
    %2510 = vmatprep.subr.bf16.mxu0 0
    %2511 = vmatpush1.bf16.msra.mxu0 0
    %2512 = vmatprep.subr.bf16.mxu0 0
    %2513 = vmatpush1.bf16.msra.mxu0 0
    %2514 = vmatprep.subr.bf16.mxu0 0
    %2515 = vmatpush1.bf16.msra.mxu0 0
    %2516 = vmatprep.subr.bf16.mxu0 0
    %2517 = vmatpush1.bf16.msra.mxu0 0
    %2518 = vmatprep.subr.bf16.mxu0 0
    %2519 = vmatpush1.bf16.msra.mxu0 0
    %2520 = vmatprep.subr.bf16.mxu0 0
    %2521 = vmatpush1.bf16.msra.mxu0 0
    %2522 = vmatprep.subr.bf16.mxu0 0
    %2523 = vmatpush1.bf16.msra.mxu0 0
    %2524 = vmatprep.subr.bf16.mxu0 0
    %2525 = vmatpush1.bf16.msra.mxu0 0
    %2526 = vmatprep.subr.bf16.mxu0 0
    %2527 = vmatpush1.bf16.msra.mxu0 0
    %2528 = vmatprep.subr.bf16.mxu0 0
    %2529 = vmatpush1.bf16.msra.mxu0 0
    %2530 = vmatprep.subr.bf16.mxu0 0
    %2531 = vmatpush1.bf16.msra.mxu0 0
    %2532 = vmatprep.mubr.bf16.mxu0 0
    %2533 = vmatmul.mubr.bf16.gmra.mrb[0].mxu0 %v2489
    %v2534 = vpop.f32.mrb[0].mxu0
    %v2535 = vadd.f32 %v2458, %v2534
    %v2536 = vpop.f32.mrb[0].mxu0
    %v2537 = vpop.f32.mrb[0].mxu0
    %v2538 = vadd.f32 %v2461, %v2537
    %v2539 = vpop.f32.mrb[0].mxu0
    %2540 = vmatprep.mubr.bf16.mxu0 0
    %2541 = vmatmul.mubr.bf16.gmra.mrb[0].mxu0 %v2492
    %v2542 = vpop.f32.mrb[0].mxu0
    %v2543 = vadd.f32 %v2466, %v2542
    %v2544 = vpop.f32.mrb[0].mxu0
    %v2545 = vpop.f32.mrb[0].mxu0
    %v2546 = vadd.f32 %v2469, %v2545
    %v2547 = vpop.f32.mrb[0].mxu0
    %2548 = vmatprep.mubr.bf16.mxu0 0
    %2549 = vmatmul.mubr.bf16.gmra.mrb[0].mxu0 %v2495
    %v2550 = vpop.f32.mrb[0].mxu0
    %v2551 = vadd.f32 %v2474, %v2550
    %v2552 = vpop.f32.mrb[0].mxu0
    %v2553 = vpop.f32.mrb[0].mxu0
    %v2554 = vadd.f32 %v2477, %v2553
    %v2555 = vpop.f32.mrb[0].mxu0
    %2556 = vmatprep.mubr.bf16.mxu0 0
    %2557 = vmatmul.mubr.bf16.gmra.mrb[0].mxu0 %v2498
    %v2558 = vpop.f32.mrb[0].mxu0
    %v2559 = vadd.f32 %v2482, %v2558
    %v2560 = vpop.f32.mrb[0].mxu0
    %v2561 = vpop.f32.mrb[0].mxu0
    %v2562 = vadd.f32 %v2485, %v2561
    %v2563 = vpop.f32.mrb[0].mxu0
    %2564 = vdwg.mxu0
    %2565 = vset.pattern.permute.xlu0 34
    %2566 = vperm.xlu0 %2565, %v1943
    %v2567 = vpop.permute.xlu0 %2566
    %2569 = vset.pattern.permute.xlu0 34
    %2570 = vperm.xlu0 %2569, %v1946
    %v2571 = vpop.permute.xlu0 %2570
    %2573 = vset.pattern.permute.xlu0 34
    %2574 = vperm.xlu0 %2573, %v1951
    %v2575 = vpop.permute.xlu0 %2574
    %2577 = vset.pattern.permute.xlu0 34
    %2578 = vperm.xlu0 %2577, %v1954
    %v2579 = vpop.permute.xlu0 %2578
    %2581 = vset.pattern.permute.xlu0 34
    %2582 = vperm.xlu0 %2581, %v1959
    %v2583 = vpop.permute.xlu0 %2582
    %2585 = vset.pattern.permute.xlu0 34
    %2586 = vperm.xlu0 %2585, %v1962
    %v2587 = vpop.permute.xlu0 %2586
    %2589 = vset.pattern.permute.xlu0 34
    %2590 = vperm.xlu0 %2589, %v1967
    %v2591 = vpop.permute.xlu0 %2590
    %2593 = vset.pattern.permute.xlu0 34
    %2594 = vperm.xlu0 %2593, %v1970
    %v2595 = vpop.permute.xlu0 %2594
    %v2597 = vlaneseq
    %v2598 = vshrl.u32 %v2597, 7
    %v2599 = vsub.s32 2, %v2598
    %v2600 = vrot.slane %v2028, %v2599
    %v2601 = vadd.f32 %v2567, %v2600
    %v2602 = vadd.f32 %v2571, %v2600
    %v2603 = vadd.f32 %v2575, %v2600
    %v2604 = vadd.f32 %v2579, %v2600
    %v2605 = vadd.f32 %v2583, %v2600
    %v2606 = vadd.f32 %v2587, %v2600
    %v2607 = vadd.f32 %v2591, %v2600
    %v2608 = vadd.f32 %v2595, %v2600
    %vm2609 = vcmp.gt.f32.partialorder %v2601, 0.0
    %vm2610 = vcmp.gt.f32.partialorder %v2602, 0.0
    %vm2611 = vcmp.gt.f32.partialorder %v2603, 0.0
    %vm2612 = vcmp.gt.f32.partialorder %v2604, 0.0
    %vm2613 = vcmp.gt.f32.partialorder %v2605, 0.0
    %vm2614 = vcmp.gt.f32.partialorder %v2606, 0.0
    %vm2615 = vcmp.gt.f32.partialorder %v2607, 0.0
    %vm2616 = vcmp.gt.f32.partialorder %v2608, 0.0
    %v2617 = vmul.f32 %v2601, 0.2
    %v2618 = vmul.f32 %v2602, 0.2
    %v2619 = vmul.f32 %v2603, 0.2
    %v2620 = vmul.f32 %v2604, 0.2
    %v2621 = vmul.f32 %v2605, 0.2
    %v2622 = vmul.f32 %v2606, 0.2
    %v2623 = vmul.f32 %v2607, 0.2
    %v2624 = vmul.f32 %v2608, 0.2
    %v2625 = vsel %vm2609, %v2601, %v2617
    %v2626 = vsel %vm2610, %v2602, %v2618
    %v2627 = vsel %vm2611, %v2603, %v2619
    %v2628 = vsel %vm2612, %v2604, %v2620
    %v2629 = vsel %vm2613, %v2605, %v2621
    %v2630 = vsel %vm2614, %v2606, %v2622
    %v2631 = vsel %vm2615, %v2607, %v2623
    %v2632 = vsel %vm2616, %v2608, %v2624
    %v2633 = vadd.f32 %v2625, %v132
    %v2634 = vadd.f32 %v2626, %v133
    %v2635 = vadd.f32 %v2627, %v134
    %v2636 = vadd.f32 %v2628, %v135
    %v2637 = vadd.f32 %v2629, %v136
    %v2638 = vadd.f32 %v2630, %v137
    %v2639 = vadd.f32 %v2631, %v138
    %v2640 = vadd.f32 %v2632, %v139
    %v2641 = vsel %vm1773, %v2633, -inf
    %2642 = vmax.xlane.f32.xlu0 %v2641
    %v2643 = vpop.xlane.xlu0 %2642
    %v2644 = vsel %vm1773, %v2634, -inf
    %2645 = vmax.xlane.f32.xlu0 %v2644
    %v2646 = vpop.xlane.xlu0 %2645
    %v2647 = vsel %vm1773, %v2635, -inf
    %2648 = vmax.xlane.f32.xlu0 %v2647
    %v2649 = vpop.xlane.xlu0 %2648
    %v2650 = vsel %vm1773, %v2636, -inf
    %2651 = vmax.xlane.f32.xlu0 %v2650
    %v2652 = vpop.xlane.xlu0 %2651
    %v2653 = vsel %vm1773, %v2637, -inf
    %2654 = vmax.xlane.f32.xlu0 %v2653
    %v2655 = vpop.xlane.xlu0 %2654
    %v2656 = vsel %vm1773, %v2638, -inf
    %2657 = vmax.xlane.f32.xlu0 %v2656
    %v2658 = vpop.xlane.xlu0 %2657
    %v2659 = vsel %vm1773, %v2639, -inf
    %2660 = vmax.xlane.f32.xlu0 %v2659
    %v2661 = vpop.xlane.xlu0 %2660
    %v2662 = vsel %vm1773, %v2640, -inf
    %2663 = vmax.xlane.f32.xlu0 %v2662
    %v2664 = vpop.xlane.xlu0 %2663
    %v2665 = vsub.f32 %v2633, %v2643
    %v2666 = vsub.f32 %v2634, %v2646
    %v2667 = vsub.f32 %v2635, %v2649
    %v2668 = vsub.f32 %v2636, %v2652
    %v2669 = vsub.f32 %v2637, %v2655
    %v2670 = vsub.f32 %v2638, %v2658
    %v2671 = vsub.f32 %v2639, %v2661
    %v2672 = vsub.f32 %v2640, %v2664
    %v2673 = vmul.f32 %v2665, 1.442695
    %v2674 = vpow.pop %v2673
    %v2675 = vmul.f32 %v2666, 1.442695
    %v2676 = vpow.pop %v2675
    %v2677 = vmul.f32 %v2667, 1.442695
    %v2678 = vpow.pop %v2677
    %v2679 = vmul.f32 %v2668, 1.442695
    %v2680 = vpow.pop %v2679
    %v2681 = vmul.f32 %v2669, 1.442695
    %v2682 = vpow.pop %v2681
    %v2683 = vmul.f32 %v2670, 1.442695
    %v2684 = vpow.pop %v2683
    %v2685 = vmul.f32 %v2671, 1.442695
    %v2686 = vpow.pop %v2685
    %v2687 = vmul.f32 %v2672, 1.442695
    %v2688 = vpow.pop %v2687
    %v2689 = vsel %vm1773, %v2674, 0.0
    %2690 = vadd.xlane.f32.xlu0 %v2689
    %v2691 = vpop.xlane.xlu0 %2690
    %v2692 = vsel %vm1773, %v2676, 0.0
    %2693 = vadd.xlane.f32.xlu0 %v2692
    %v2694 = vpop.xlane.xlu0 %2693
    %v2695 = vsel %vm1773, %v2678, 0.0
    %2696 = vadd.xlane.f32.xlu0 %v2695
    %v2697 = vpop.xlane.xlu0 %2696
    %v2698 = vsel %vm1773, %v2680, 0.0
    %2699 = vadd.xlane.f32.xlu0 %v2698
    %v2700 = vpop.xlane.xlu0 %2699
    %v2701 = vsel %vm1773, %v2682, 0.0
    %2702 = vadd.xlane.f32.xlu0 %v2701
    %v2703 = vpop.xlane.xlu0 %2702
    %v2704 = vsel %vm1773, %v2684, 0.0
    %2705 = vadd.xlane.f32.xlu0 %v2704
    %v2706 = vpop.xlane.xlu0 %2705
    %v2707 = vsel %vm1773, %v2686, 0.0
    %2708 = vadd.xlane.f32.xlu0 %v2707
    %v2709 = vpop.xlane.xlu0 %2708
    %v2710 = vsel %vm1773, %v2688, 0.0
    %2711 = vadd.xlane.f32.xlu0 %v2710
    %v2712 = vpop.xlane.xlu0 %2711
    %v2713 = vrcp.pop %v2691
    %v2714 = vrcp.pop %v2694
    %v2715 = vrcp.pop %v2697
    %v2716 = vrcp.pop %v2700
    %v2717 = vrcp.pop %v2703
    %v2718 = vrcp.pop %v2706
    %v2719 = vrcp.pop %v2709
    %v2720 = vrcp.pop %v2712
    %v2721 = vmul.f32 %v2674, %v2713
    %v2722 = vmul.f32 %v2676, %v2714
    %v2723 = vmul.f32 %v2678, %v2715
    %v2724 = vmul.f32 %v2680, %v2716
    %v2725 = vmul.f32 %v2682, %v2717
    %v2726 = vmul.f32 %v2684, %v2718
    %v2727 = vmul.f32 %v2686, %v2719
    %v2728 = vmul.f32 %v2688, %v2720
    %v2729 = vld [vmem:[%s9 + $0x2] sm:$0x1]
    %v2730 = vlaneseq
    %v2731 = vshrl.u32 %v2730, 7
    %v2732 = vsub.s32 0, %v2731
    %v2733 = vrot.slane %v2729, %v2732
    %v2734 = vmul.f32 %v1943, %v2733
    %v2735 = vmul.f32 %v1946, %v2733
    %v2736 = vmul.f32 %v1951, %v2733
    %v2737 = vmul.f32 %v1954, %v2733
    %v2738 = vmul.f32 %v1959, %v2733
    %v2739 = vmul.f32 %v1962, %v2733
    %v2740 = vmul.f32 %v1967, %v2733
    %v2741 = vmul.f32 %v1970, %v2733
    %v2742 = vpack.c.bf16 %v2735, %v2734
    %v2743 = vpack.c.bf16 %v2737, %v2736
    %v2744 = vpack.c.bf16 %v2739, %v2738
    %v2745 = vpack.c.bf16 %v2741, %v2740
    %v2746 = vpack.c.bf16 %v2722, %v2721
    %v2747 = vpack.c.bf16 %v2724, %v2723
    %v2748 = vpack.c.bf16 %v2726, %v2725
    %v2749 = vpack.c.bf16 %v2728, %v2727
    %v2751 = vsel %vm1773, %v2746, 0
    %v2754 = vsel %vm1773, %v2747, 0
    %v2757 = vsel %vm1773, %v2748, 0
    %v2760 = vsel %vm1773, %v2749, 0
    %2762 = vmatprep.subr.bf16.mxu0 0
    %2763 = vmatpush1.bf16.msra.mxu0 %v2742
    %2764 = vmatprep.subr.bf16.mxu0 0
    %2765 = vmatpush1.bf16.msra.mxu0 %v2743
    %2766 = vmatprep.subr.bf16.mxu0 0
    %2767 = vmatpush1.bf16.msra.mxu0 %v2744
    %2768 = vmatprep.subr.bf16.mxu0 0
    %2769 = vmatpush1.bf16.msra.mxu0 %v2745
    %2770 = vmatprep.subr.bf16.mxu0 0
    %2771 = vmatpush1.bf16.msra.mxu0 0
    %2772 = vmatprep.subr.bf16.mxu0 0
    %2773 = vmatpush1.bf16.msra.mxu0 0
    %2774 = vmatprep.subr.bf16.mxu0 0
    %2775 = vmatpush1.bf16.msra.mxu0 0
    %2776 = vmatprep.subr.bf16.mxu0 0
    %2777 = vmatpush1.bf16.msra.mxu0 0
    %2778 = vmatprep.subr.bf16.mxu0 0
    %2779 = vmatpush1.bf16.msra.mxu0 0
    %2780 = vmatprep.subr.bf16.mxu0 0
    %2781 = vmatpush1.bf16.msra.mxu0 0
    %2782 = vmatprep.subr.bf16.mxu0 0
    %2783 = vmatpush1.bf16.msra.mxu0 0
    %2784 = vmatprep.subr.bf16.mxu0 0
    %2785 = vmatpush1.bf16.msra.mxu0 0
    %2786 = vmatprep.subr.bf16.mxu0 0
    %2787 = vmatpush1.bf16.msra.mxu0 0
    %2788 = vmatprep.subr.bf16.mxu0 0
    %2789 = vmatpush1.bf16.msra.mxu0 0
    %2790 = vmatprep.subr.bf16.mxu0 0
    %2791 = vmatpush1.bf16.msra.mxu0 0
    %2792 = vmatprep.subr.bf16.mxu0 0
    %2793 = vmatpush1.bf16.msra.mxu0 0
    %2794 = vmatprep.mubr.bf16.mxu0 0
    %2795 = vmatmul.mubr.bf16.gmra.mrb[0].mxu0 %v2751
    %v2796 = vpop.f32.mrb[0].mxu0
    %v2797 = vadd.f32 0.0, %v2796
    %v2798 = vpop.f32.mrb[0].mxu0
    %v2799 = vpop.f32.mrb[0].mxu0
    %v2800 = vadd.f32 0.0, %v2799
    %v2801 = vpop.f32.mrb[0].mxu0
    %2802 = vmatprep.mubr.bf16.mxu0 0
    %2803 = vmatmul.mubr.bf16.gmra.mrb[0].mxu0 %v2754
    %v2804 = vpop.f32.mrb[0].mxu0
    %v2805 = vadd.f32 0.0, %v2804
    %v2806 = vpop.f32.mrb[0].mxu0
    %v2807 = vpop.f32.mrb[0].mxu0
    %v2808 = vadd.f32 0.0, %v2807
    %v2809 = vpop.f32.mrb[0].mxu0
    %2810 = vmatprep.mubr.bf16.mxu0 0
    %2811 = vmatmul.mubr.bf16.gmra.mrb[0].mxu0 %v2757
    %v2812 = vpop.f32.mrb[0].mxu0
    %v2813 = vadd.f32 0.0, %v2812
    %v2814 = vpop.f32.mrb[0].mxu0
    %v2815 = vpop.f32.mrb[0].mxu0
    %v2816 = vadd.f32 0.0, %v2815
    %v2817 = vpop.f32.mrb[0].mxu0
    %2818 = vmatprep.mubr.bf16.mxu0 0
    %2819 = vmatmul.mubr.bf16.gmra.mrb[0].mxu0 %v2760
    %v2820 = vpop.f32.mrb[0].mxu0
    %v2821 = vadd.f32 0.0, %v2820
    %v2822 = vpop.f32.mrb[0].mxu0
    %v2823 = vpop.f32.mrb[0].mxu0
    %v2824 = vadd.f32 0.0, %v2823
    %v2825 = vpop.f32.mrb[0].mxu0
    %2826 = vdwg.mxu0
    %v2827 = vadd.f32 %v2535, %v2797
    %v2828 = vadd.f32 %v2538, %v2800
    %v2829 = vadd.f32 %v2543, %v2805
    %v2830 = vadd.f32 %v2546, %v2808
    %v2831 = vadd.f32 %v2551, %v2813
    %v2832 = vadd.f32 %v2554, %v2816
    %v2833 = vadd.f32 %v2559, %v2821
    %v2834 = vadd.f32 %v2562, %v2824
    %2835 = vset.pattern.permute.xlu0 35
    %2836 = vperm.xlu0 %2835, %v1943
    %v2837 = vpop.permute.xlu0 %2836
    %2839 = vset.pattern.permute.xlu0 35
    %2840 = vperm.xlu0 %2839, %v1946
    %v2841 = vpop.permute.xlu0 %2840
    %2843 = vset.pattern.permute.xlu0 35
    %2844 = vperm.xlu0 %2843, %v1951
    %v2845 = vpop.permute.xlu0 %2844
    %2847 = vset.pattern.permute.xlu0 35
    %2848 = vperm.xlu0 %2847, %v1954
    %v2849 = vpop.permute.xlu0 %2848
    %2851 = vset.pattern.permute.xlu0 35
    %2852 = vperm.xlu0 %2851, %v1959
    %v2853 = vpop.permute.xlu0 %2852
    %2855 = vset.pattern.permute.xlu0 35
    %2856 = vperm.xlu0 %2855, %v1962
    %v2857 = vpop.permute.xlu0 %2856
    %2859 = vset.pattern.permute.xlu0 35
    %2860 = vperm.xlu0 %2859, %v1967
    %v2861 = vpop.permute.xlu0 %2860
    %2863 = vset.pattern.permute.xlu0 35
    %2864 = vperm.xlu0 %2863, %v1970
    %v2865 = vpop.permute.xlu0 %2864
    %v2867 = vlaneseq
    %v2868 = vshrl.u32 %v2867, 7
    %v2869 = vsub.s32 3, %v2868
    %v2870 = vrot.slane %v2028, %v2869
    %v2871 = vadd.f32 %v2837, %v2870
    %v2872 = vadd.f32 %v2841, %v2870
    %v2873 = vadd.f32 %v2845, %v2870
    %v2874 = vadd.f32 %v2849, %v2870
    %v2875 = vadd.f32 %v2853, %v2870
    %v2876 = vadd.f32 %v2857, %v2870
    %v2877 = vadd.f32 %v2861, %v2870
    %v2878 = vadd.f32 %v2865, %v2870
    %vm2879 = vcmp.gt.f32.partialorder %v2871, 0.0
    %vm2880 = vcmp.gt.f32.partialorder %v2872, 0.0
    %vm2881 = vcmp.gt.f32.partialorder %v2873, 0.0
    %vm2882 = vcmp.gt.f32.partialorder %v2874, 0.0
    %vm2883 = vcmp.gt.f32.partialorder %v2875, 0.0
    %vm2884 = vcmp.gt.f32.partialorder %v2876, 0.0
    %vm2885 = vcmp.gt.f32.partialorder %v2877, 0.0
    %vm2886 = vcmp.gt.f32.partialorder %v2878, 0.0
    %v2887 = vmul.f32 %v2871, 0.2
    %v2888 = vmul.f32 %v2872, 0.2
    %v2889 = vmul.f32 %v2873, 0.2
    %v2890 = vmul.f32 %v2874, 0.2
    %v2891 = vmul.f32 %v2875, 0.2
    %v2892 = vmul.f32 %v2876, 0.2
    %v2893 = vmul.f32 %v2877, 0.2
    %v2894 = vmul.f32 %v2878, 0.2
    %v2895 = vsel %vm2879, %v2871, %v2887
    %v2896 = vsel %vm2880, %v2872, %v2888
    %v2897 = vsel %vm2881, %v2873, %v2889
    %v2898 = vsel %vm2882, %v2874, %v2890
    %v2899 = vsel %vm2883, %v2875, %v2891
    %v2900 = vsel %vm2884, %v2876, %v2892
    %v2901 = vsel %vm2885, %v2877, %v2893
    %v2902 = vsel %vm2886, %v2878, %v2894
    %v2903 = vadd.f32 %v2895, %v132
    %v2904 = vadd.f32 %v2896, %v133
    %v2905 = vadd.f32 %v2897, %v134
    %v2906 = vadd.f32 %v2898, %v135
    %v2907 = vadd.f32 %v2899, %v136
    %v2908 = vadd.f32 %v2900, %v137
    %v2909 = vadd.f32 %v2901, %v138
    %v2910 = vadd.f32 %v2902, %v139
    %v2911 = vsel %vm1773, %v2903, -inf
    %2912 = vmax.xlane.f32.xlu0 %v2911
    %v2913 = vpop.xlane.xlu0 %2912
    %v2914 = vsel %vm1773, %v2904, -inf
    %2915 = vmax.xlane.f32.xlu0 %v2914
    %v2916 = vpop.xlane.xlu0 %2915
    %v2917 = vsel %vm1773, %v2905, -inf
    %2918 = vmax.xlane.f32.xlu0 %v2917
    %v2919 = vpop.xlane.xlu0 %2918
    %v2920 = vsel %vm1773, %v2906, -inf
    %2921 = vmax.xlane.f32.xlu0 %v2920
    %v2922 = vpop.xlane.xlu0 %2921
    %v2923 = vsel %vm1773, %v2907, -inf
    %2924 = vmax.xlane.f32.xlu0 %v2923
    %v2925 = vpop.xlane.xlu0 %2924
    %v2926 = vsel %vm1773, %v2908, -inf
    %2927 = vmax.xlane.f32.xlu0 %v2926
    %v2928 = vpop.xlane.xlu0 %2927
    %v2929 = vsel %vm1773, %v2909, -inf
    %2930 = vmax.xlane.f32.xlu0 %v2929
    %v2931 = vpop.xlane.xlu0 %2930
    %v2932 = vsel %vm1773, %v2910, -inf
    %2933 = vmax.xlane.f32.xlu0 %v2932
    %v2934 = vpop.xlane.xlu0 %2933
    %v2935 = vsub.f32 %v2903, %v2913
    %v2936 = vsub.f32 %v2904, %v2916
    %v2937 = vsub.f32 %v2905, %v2919
    %v2938 = vsub.f32 %v2906, %v2922
    %v2939 = vsub.f32 %v2907, %v2925
    %v2940 = vsub.f32 %v2908, %v2928
    %v2941 = vsub.f32 %v2909, %v2931
    %v2942 = vsub.f32 %v2910, %v2934
    %v2943 = vmul.f32 %v2935, 1.442695
    %v2944 = vpow.pop %v2943
    %v2945 = vmul.f32 %v2936, 1.442695
    %v2946 = vpow.pop %v2945
    %v2947 = vmul.f32 %v2937, 1.442695
    %v2948 = vpow.pop %v2947
    %v2949 = vmul.f32 %v2938, 1.442695
    %v2950 = vpow.pop %v2949
    %v2951 = vmul.f32 %v2939, 1.442695
    %v2952 = vpow.pop %v2951
    %v2953 = vmul.f32 %v2940, 1.442695
    %v2954 = vpow.pop %v2953
    %v2955 = vmul.f32 %v2941, 1.442695
    %v2956 = vpow.pop %v2955
    %v2957 = vmul.f32 %v2942, 1.442695
    %v2958 = vpow.pop %v2957
    %v2959 = vsel %vm1773, %v2944, 0.0
    %2960 = vadd.xlane.f32.xlu0 %v2959
    %v2961 = vpop.xlane.xlu0 %2960
    %v2962 = vsel %vm1773, %v2946, 0.0
    %2963 = vadd.xlane.f32.xlu0 %v2962
    %v2964 = vpop.xlane.xlu0 %2963
    %v2965 = vsel %vm1773, %v2948, 0.0
    %2966 = vadd.xlane.f32.xlu0 %v2965
    %v2967 = vpop.xlane.xlu0 %2966
    %v2968 = vsel %vm1773, %v2950, 0.0
    %2969 = vadd.xlane.f32.xlu0 %v2968
    %v2970 = vpop.xlane.xlu0 %2969
    %v2971 = vsel %vm1773, %v2952, 0.0
    %2972 = vadd.xlane.f32.xlu0 %v2971
    %v2973 = vpop.xlane.xlu0 %2972
    %v2974 = vsel %vm1773, %v2954, 0.0
    %2975 = vadd.xlane.f32.xlu0 %v2974
    %v2976 = vpop.xlane.xlu0 %2975
    %v2977 = vsel %vm1773, %v2956, 0.0
    %2978 = vadd.xlane.f32.xlu0 %v2977
    %v2979 = vpop.xlane.xlu0 %2978
    %v2980 = vsel %vm1773, %v2958, 0.0
    %2981 = vadd.xlane.f32.xlu0 %v2980
    %v2982 = vpop.xlane.xlu0 %2981
    %v2983 = vrcp.pop %v2961
    %v2984 = vrcp.pop %v2964
    %v2985 = vrcp.pop %v2967
    %v2986 = vrcp.pop %v2970
    %v2987 = vrcp.pop %v2973
    %v2988 = vrcp.pop %v2976
    %v2989 = vrcp.pop %v2979
    %v2990 = vrcp.pop %v2982
    %v2991 = vmul.f32 %v2944, %v2983
    %v2992 = vmul.f32 %v2946, %v2984
    %v2993 = vmul.f32 %v2948, %v2985
    %v2994 = vmul.f32 %v2950, %v2986
    %v2995 = vmul.f32 %v2952, %v2987
    %v2996 = vmul.f32 %v2954, %v2988
    %v2997 = vmul.f32 %v2956, %v2989
    %v2998 = vmul.f32 %v2958, %v2990
    %v2999 = vld [vmem:[%s9 + $0x3] sm:$0x1]
    %v3000 = vlaneseq
    %v3001 = vshrl.u32 %v3000, 7
    %v3002 = vsub.s32 0, %v3001
    %v3003 = vrot.slane %v2999, %v3002
    %v3004 = vmul.f32 %v1943, %v3003
    %v3005 = vmul.f32 %v1946, %v3003
    %v3006 = vmul.f32 %v1951, %v3003
    %v3007 = vmul.f32 %v1954, %v3003
    %v3008 = vmul.f32 %v1959, %v3003
    %v3009 = vmul.f32 %v1962, %v3003
    %v3010 = vmul.f32 %v1967, %v3003
    %v3011 = vmul.f32 %v1970, %v3003
    %v3012 = vpack.c.bf16 %v3005, %v3004
    %v3013 = vpack.c.bf16 %v3007, %v3006
    %v3014 = vpack.c.bf16 %v3009, %v3008
    %v3015 = vpack.c.bf16 %v3011, %v3010
    %v3016 = vpack.c.bf16 %v2992, %v2991
    %v3017 = vpack.c.bf16 %v2994, %v2993
    %v3018 = vpack.c.bf16 %v2996, %v2995
    %v3019 = vpack.c.bf16 %v2998, %v2997
    %v3021 = vsel %vm1773, %v3016, 0
    %v3024 = vsel %vm1773, %v3017, 0
    %v3027 = vsel %vm1773, %v3018, 0
    %v3030 = vsel %vm1773, %v3019, 0
    %3032 = vmatprep.subr.bf16.mxu0 0
    %3033 = vmatpush1.bf16.msra.mxu0 %v3012
    %3034 = vmatprep.subr.bf16.mxu0 0
    %3035 = vmatpush1.bf16.msra.mxu0 %v3013
    %3036 = vmatprep.subr.bf16.mxu0 0
    %3037 = vmatpush1.bf16.msra.mxu0 %v3014
    %3038 = vmatprep.subr.bf16.mxu0 0
    %3039 = vmatpush1.bf16.msra.mxu0 %v3015
    %3040 = vmatprep.subr.bf16.mxu0 0
    %3041 = vmatpush1.bf16.msra.mxu0 0
    %3042 = vmatprep.subr.bf16.mxu0 0
    %3043 = vmatpush1.bf16.msra.mxu0 0
    %3044 = vmatprep.subr.bf16.mxu0 0
    %3045 = vmatpush1.bf16.msra.mxu0 0
    %3046 = vmatprep.subr.bf16.mxu0 0
    %3047 = vmatpush1.bf16.msra.mxu0 0
    %3048 = vmatprep.subr.bf16.mxu0 0
    %3049 = vmatpush1.bf16.msra.mxu0 0
    %3050 = vmatprep.subr.bf16.mxu0 0
    %3051 = vmatpush1.bf16.msra.mxu0 0
    %3052 = vmatprep.subr.bf16.mxu0 0
    %3053 = vmatpush1.bf16.msra.mxu0 0
    %3054 = vmatprep.subr.bf16.mxu0 0
    %3055 = vmatpush1.bf16.msra.mxu0 0
    %3056 = vmatprep.subr.bf16.mxu0 0
    %3057 = vmatpush1.bf16.msra.mxu0 0
    %3058 = vmatprep.subr.bf16.mxu0 0
    %3059 = vmatpush1.bf16.msra.mxu0 0
    %3060 = vmatprep.subr.bf16.mxu0 0
    %3061 = vmatpush1.bf16.msra.mxu0 0
    %3062 = vmatprep.subr.bf16.mxu0 0
    %3063 = vmatpush1.bf16.msra.mxu0 0
    %3064 = vmatprep.mubr.bf16.mxu0 0
    %3065 = vmatmul.mubr.bf16.gmra.mrb[0].mxu0 %v3021
    %v3066 = vpop.f32.mrb[0].mxu0
    %v3067 = vadd.f32 0.0, %v3066
    %v3068 = vpop.f32.mrb[0].mxu0
    %v3069 = vpop.f32.mrb[0].mxu0
    %v3070 = vadd.f32 0.0, %v3069
    %v3071 = vpop.f32.mrb[0].mxu0
    %3072 = vmatprep.mubr.bf16.mxu0 0
    %3073 = vmatmul.mubr.bf16.gmra.mrb[0].mxu0 %v3024
    %v3074 = vpop.f32.mrb[0].mxu0
    %v3075 = vadd.f32 0.0, %v3074
    %v3076 = vpop.f32.mrb[0].mxu0
    %v3077 = vpop.f32.mrb[0].mxu0
    %v3078 = vadd.f32 0.0, %v3077
    %v3079 = vpop.f32.mrb[0].mxu0
    %3080 = vmatprep.mubr.bf16.mxu0 0
    %3081 = vmatmul.mubr.bf16.gmra.mrb[0].mxu0 %v3027
    %v3082 = vpop.f32.mrb[0].mxu0
    %v3083 = vadd.f32 0.0, %v3082
    %v3084 = vpop.f32.mrb[0].mxu0
    %v3085 = vpop.f32.mrb[0].mxu0
    %v3086 = vadd.f32 0.0, %v3085
    %v3087 = vpop.f32.mrb[0].mxu0
    %3088 = vmatprep.mubr.bf16.mxu0 0
    %3089 = vmatmul.mubr.bf16.gmra.mrb[0].mxu0 %v3030
    %v3090 = vpop.f32.mrb[0].mxu0
    %v3091 = vadd.f32 0.0, %v3090
    %v3092 = vpop.f32.mrb[0].mxu0
    %v3093 = vpop.f32.mrb[0].mxu0
    %v3094 = vadd.f32 0.0, %v3093
    %v3095 = vpop.f32.mrb[0].mxu0
    %3096 = vdwg.mxu0
    %v3097 = vadd.f32 %v2827, %v3067
    %v3098 = vadd.f32 %v2828, %v3070
    %v3099 = vadd.f32 %v2829, %v3075
    %v3100 = vadd.f32 %v2830, %v3078
    %v3101 = vadd.f32 %v2831, %v3083
    %v3102 = vadd.f32 %v2832, %v3086
    %v3103 = vadd.f32 %v2833, %v3091
    %v3104 = vadd.f32 %v2834, %v3094
    %v3105 = vld [vmem:[%s10] sm:$0x1]
    %v3107 = vlaneseq
    %v3108 = vshrl.u32 %v3107, 7
    %v3109 = vsub.s32 0, %v3108
    %v3110 = vrot.slane %v3105, %v3109
    %v3112 = vadd.f32 %v3097, %v3110
    %v3113 = vadd.f32 %v3098, %v3110
    %v3114 = vadd.f32 %v3099, %v3110
    %v3115 = vadd.f32 %v3100, %v3110
    %v3116 = vadd.f32 %v3101, %v3110
    %v3117 = vadd.f32 %v3102, %v3110
    %v3118 = vadd.f32 %v3103, %v3110
    %v3119 = vadd.f32 %v3104, %v3110
    %v3120 = vpack.c.bf16 %v3113, %v3112
    %v3121 = vpack.c.bf16 %v3115, %v3114
    %v3122 = vpack.c.bf16 %v3117, %v3116
    %v3123 = vpack.c.bf16 %v3119, %v3118
    %v3124 = vld [vmem:[%s11] sm:$0xf]
    %v3125 = vld [vmem:[%s11 + $0x4] sm:$0xf]
    %v3126 = vld [vmem:[%s11 + $0x8] sm:$0xf]
    %v3127 = vld [vmem:[%s11 + $0xc] sm:$0xf]
    %v3132 = vunpack.c.l.b16 %v3124
    %v3133 = vunpack.c.l.b16 %v3125
    %v3134 = vunpack.c.l.b16 %v3126
    %v3135 = vunpack.c.l.b16 %v3127
    %v3136 = vpack.c.b16 %v3133, %v3132
    %v3137 = vpack.c.b16 %v3135, %v3134
    %v3141 = vsel %vm1895, %v3120, 0
    %v3144 = vsel %vm1895, %v3121, 0
    %v3147 = vsel %vm1895, %v3122, 0
    %v3150 = vsel %vm1895, %v3123, 0
    %3152 = vmatprep.subr.bf16.mxu0 0
    %3153 = vmatpush1.bf16.msra.mxu0 %v3136
    %3154 = vmatprep.subr.bf16.mxu0 0
    %3155 = vmatpush1.bf16.msra.mxu0 %v3137
    %3156 = vmatprep.subr.bf16.mxu0 0
    %3157 = vmatpush1.bf16.msra.mxu0 0
    %3158 = vmatprep.subr.bf16.mxu0 0
    %3159 = vmatpush1.bf16.msra.mxu0 0
    %3160 = vmatprep.subr.bf16.mxu0 0
    %3161 = vmatpush1.bf16.msra.mxu0 0
    %3162 = vmatprep.subr.bf16.mxu0 0
    %3163 = vmatpush1.bf16.msra.mxu0 0
    %3164 = vmatprep.subr.bf16.mxu0 0
    %3165 = vmatpush1.bf16.msra.mxu0 0
    %3166 = vmatprep.subr.bf16.mxu0 0
    %3167 = vmatpush1.bf16.msra.mxu0 0
    %3168 = vmatprep.subr.bf16.mxu0 0
    %3169 = vmatpush1.bf16.msra.mxu0 0
    %3170 = vmatprep.subr.bf16.mxu0 0
    %3171 = vmatpush1.bf16.msra.mxu0 0
    %3172 = vmatprep.subr.bf16.mxu0 0
    %3173 = vmatpush1.bf16.msra.mxu0 0
    %3174 = vmatprep.subr.bf16.mxu0 0
    %3175 = vmatpush1.bf16.msra.mxu0 0
    %3176 = vmatprep.subr.bf16.mxu0 0
    %3177 = vmatpush1.bf16.msra.mxu0 0
    %3178 = vmatprep.subr.bf16.mxu0 0
    %3179 = vmatpush1.bf16.msra.mxu0 0
    %3180 = vmatprep.subr.bf16.mxu0 0
    %3181 = vmatpush1.bf16.msra.mxu0 0
    %3182 = vmatprep.subr.bf16.mxu0 0
    %3183 = vmatpush1.bf16.msra.mxu0 0
    %3184 = vmatprep.mubr.bf16.mxu0 0
    %3185 = vmatmul.mubr.bf16.gmra.mrb[0].mxu0 %v3141
    %v3186 = vpop.f32.mrb[0].mxu0
    %v3187 = vadd.f32 0.0, %v3186
    %v3188 = vpop.f32.mrb[0].mxu0
    %v3189 = vpop.f32.mrb[0].mxu0
    %v3190 = vadd.f32 0.0, %v3189
    %v3191 = vpop.f32.mrb[0].mxu0
    %3192 = vmatprep.mubr.bf16.mxu0 0
    %3193 = vmatmul.mubr.bf16.gmra.mrb[0].mxu0 %v3144
    %v3194 = vpop.f32.mrb[0].mxu0
    %v3195 = vadd.f32 0.0, %v3194
    %v3196 = vpop.f32.mrb[0].mxu0
    %v3197 = vpop.f32.mrb[0].mxu0
    %v3198 = vadd.f32 0.0, %v3197
    %v3199 = vpop.f32.mrb[0].mxu0
    %3200 = vmatprep.mubr.bf16.mxu0 0
    %3201 = vmatmul.mubr.bf16.gmra.mrb[0].mxu0 %v3147
    %v3202 = vpop.f32.mrb[0].mxu0
    %v3203 = vadd.f32 0.0, %v3202
    %v3204 = vpop.f32.mrb[0].mxu0
    %v3205 = vpop.f32.mrb[0].mxu0
    %v3206 = vadd.f32 0.0, %v3205
    %v3207 = vpop.f32.mrb[0].mxu0
    %3208 = vmatprep.mubr.bf16.mxu0 0
    %3209 = vmatmul.mubr.bf16.gmra.mrb[0].mxu0 %v3150
    %v3210 = vpop.f32.mrb[0].mxu0
    %v3211 = vadd.f32 0.0, %v3210
    %v3212 = vpop.f32.mrb[0].mxu0
    %v3213 = vpop.f32.mrb[0].mxu0
    %v3214 = vadd.f32 0.0, %v3213
    %v3215 = vpop.f32.mrb[0].mxu0
    %3216 = vdwg.mxu0
    %v3217 = vpack.c.bf16 %v3190, %v3187
    %v3218 = vpack.c.bf16 %v3198, %v3195
    %v3219 = vpack.c.bf16 %v3206, %v3203
    %v3220 = vpack.c.bf16 %v3214, %v3211
    %v3221 = vld [vmem:[%s12] sm:$0x1]
    %v3223 = vsel %vm1895, %v3221, 0
    %v3226 = vsel %vm1895, %v3217, 0
    %v3229 = vsel %vm1895, %v3218, 0
    %v3232 = vsel %vm1895, %v3219, 0
    %v3235 = vsel %vm1895, %v3220, 0
    %3237 = vmatprep.subr.bf16.mxu0 0
    %3238 = vmatpush1.bf16.xpose.msra.mxu0 %v3226
    %3239 = vmatprep.subr.bf16.mxu0 0
    %3240 = vmatpush1.bf16.xpose.msra.mxu0 %v3229
    %3241 = vmatprep.subr.bf16.mxu0 0
    %3242 = vmatpush1.bf16.xpose.msra.mxu0 %v3232
    %3243 = vmatprep.subr.bf16.mxu0 0
    %3244 = vmatpush1.bf16.xpose.msra.mxu0 %v3235
    %3245 = vmatprep.subr.bf16.mxu0 0
    %3246 = vmatpush1.bf16.xpose.msra.mxu0 0
    %3247 = vmatprep.subr.bf16.mxu0 0
    %3248 = vmatpush1.bf16.xpose.msra.mxu0 0
    %3249 = vmatprep.subr.bf16.mxu0 0
    %3250 = vmatpush1.bf16.xpose.msra.mxu0 0
    %3251 = vmatprep.subr.bf16.mxu0 0
    %3252 = vmatpush1.bf16.xpose.msra.mxu0 0
    %3253 = vmatprep.subr.bf16.mxu0 0
    %3254 = vmatpush1.bf16.xpose.msra.mxu0 0
    %3255 = vmatprep.subr.bf16.mxu0 0
    %3256 = vmatpush1.bf16.xpose.msra.mxu0 0
    %3257 = vmatprep.subr.bf16.mxu0 0
    %3258 = vmatpush1.bf16.xpose.msra.mxu0 0
    %3259 = vmatprep.subr.bf16.mxu0 0
    %3260 = vmatpush1.bf16.xpose.msra.mxu0 0
    %3261 = vmatprep.subr.bf16.mxu0 0
    %3262 = vmatpush1.bf16.xpose.msra.mxu0 0
    %3263 = vmatprep.subr.bf16.mxu0 0
    %3264 = vmatpush1.bf16.xpose.msra.mxu0 0
    %3265 = vmatprep.subr.bf16.mxu0 0
    %3266 = vmatpush1.bf16.xpose.msra.mxu0 0
    %3267 = vmatprep.subr.bf16.mxu0 0
    %3268 = vmatpush1.bf16.xpose.msra.mxu0 0
    %3269 = vmatprep.mubr.bf16.mxu0 0
    %3270 = vmatmul.mubr.bf16.gmra.mrb[0].mxu0 %v3223
    %v3271 = vpop.f32.mrb[0].mxu0
    %v3272 = vadd.f32 0.0, %v3271
    %v3273 = vpop.f32.mrb[0].mxu0
    %v3274 = vpop.f32.mrb[0].mxu0
    %v3275 = vpop.f32.mrb[0].mxu0
    %3276 = vdwg.mxu0
    %3278 = vset.pattern.permute.xlu0 32
    %3279 = vperm.xlu0 %3278, %v3187
    %v3280 = vpop.permute.xlu0 %3279
    %3283 = vset.pattern.permute.xlu0 32
    %3284 = vperm.xlu0 %3283, %v3190
    %v3285 = vpop.permute.xlu0 %3284
    %3288 = vset.pattern.permute.xlu0 32
    %3289 = vperm.xlu0 %3288, %v3195
    %v3290 = vpop.permute.xlu0 %3289
    %3293 = vset.pattern.permute.xlu0 32
    %3294 = vperm.xlu0 %3293, %v3198
    %v3295 = vpop.permute.xlu0 %3294
    %3298 = vset.pattern.permute.xlu0 32
    %3299 = vperm.xlu0 %3298, %v3203
    %v3300 = vpop.permute.xlu0 %3299
    %3303 = vset.pattern.permute.xlu0 32
    %3304 = vperm.xlu0 %3303, %v3206
    %v3305 = vpop.permute.xlu0 %3304
    %3308 = vset.pattern.permute.xlu0 32
    %3309 = vperm.xlu0 %3308, %v3211
    %v3310 = vpop.permute.xlu0 %3309
    %3313 = vset.pattern.permute.xlu0 32
    %3314 = vperm.xlu0 %3313, %v3214
    %v3315 = vpop.permute.xlu0 %3314
    %v3317 = vlaneseq
    %v3318 = vshrl.u32 %v3317, 7
    %v3319 = vsub.s32 0, %v3318
    %v3320 = vrot.slane %v3272, %v3319
    %v3321 = vadd.f32 %v3280, %v3320
    %v3322 = vadd.f32 %v3285, %v3320
    %v3323 = vadd.f32 %v3290, %v3320
    %v3324 = vadd.f32 %v3295, %v3320
    %v3325 = vadd.f32 %v3300, %v3320
    %v3326 = vadd.f32 %v3305, %v3320
    %v3327 = vadd.f32 %v3310, %v3320
    %v3328 = vadd.f32 %v3315, %v3320
    %vm3329 = vcmp.gt.f32.partialorder %v3321, 0.0
    %vm3330 = vcmp.gt.f32.partialorder %v3322, 0.0
    %vm3331 = vcmp.gt.f32.partialorder %v3323, 0.0
    %vm3332 = vcmp.gt.f32.partialorder %v3324, 0.0
    %vm3333 = vcmp.gt.f32.partialorder %v3325, 0.0
    %vm3334 = vcmp.gt.f32.partialorder %v3326, 0.0
    %vm3335 = vcmp.gt.f32.partialorder %v3327, 0.0
    %vm3336 = vcmp.gt.f32.partialorder %v3328, 0.0
    %v3337 = vmul.f32 %v3321, 0.2
    %v3338 = vmul.f32 %v3322, 0.2
    %v3339 = vmul.f32 %v3323, 0.2
    %v3340 = vmul.f32 %v3324, 0.2
    %v3341 = vmul.f32 %v3325, 0.2
    %v3342 = vmul.f32 %v3326, 0.2
    %v3343 = vmul.f32 %v3327, 0.2
    %v3344 = vmul.f32 %v3328, 0.2
    %v3345 = vsel %vm3329, %v3321, %v3337
    %v3346 = vsel %vm3330, %v3322, %v3338
    %v3347 = vsel %vm3331, %v3323, %v3339
    %v3348 = vsel %vm3332, %v3324, %v3340
    %v3349 = vsel %vm3333, %v3325, %v3341
    %v3350 = vsel %vm3334, %v3326, %v3342
    %v3351 = vsel %vm3335, %v3327, %v3343
    %v3352 = vsel %vm3336, %v3328, %v3344
    %v3353 = vadd.f32 %v3345, %v132
    %v3354 = vadd.f32 %v3346, %v133
    %v3355 = vadd.f32 %v3347, %v134
    %v3356 = vadd.f32 %v3348, %v135
    %v3357 = vadd.f32 %v3349, %v136
    %v3358 = vadd.f32 %v3350, %v137
    %v3359 = vadd.f32 %v3351, %v138
    %v3360 = vadd.f32 %v3352, %v139
    %v3361 = vsel %vm1773, %v3353, -inf
    %3362 = vmax.xlane.f32.xlu0 %v3361
    %v3363 = vpop.xlane.xlu0 %3362
    %v3364 = vsel %vm1773, %v3354, -inf
    %3365 = vmax.xlane.f32.xlu0 %v3364
    %v3366 = vpop.xlane.xlu0 %3365
    %v3367 = vsel %vm1773, %v3355, -inf
    %3368 = vmax.xlane.f32.xlu0 %v3367
    %v3369 = vpop.xlane.xlu0 %3368
    %v3370 = vsel %vm1773, %v3356, -inf
    %3371 = vmax.xlane.f32.xlu0 %v3370
    %v3372 = vpop.xlane.xlu0 %3371
    %v3373 = vsel %vm1773, %v3357, -inf
    %3374 = vmax.xlane.f32.xlu0 %v3373
    %v3375 = vpop.xlane.xlu0 %3374
    %v3376 = vsel %vm1773, %v3358, -inf
    %3377 = vmax.xlane.f32.xlu0 %v3376
    %v3378 = vpop.xlane.xlu0 %3377
    %v3379 = vsel %vm1773, %v3359, -inf
    %3380 = vmax.xlane.f32.xlu0 %v3379
    %v3381 = vpop.xlane.xlu0 %3380
    %v3382 = vsel %vm1773, %v3360, -inf
    %3383 = vmax.xlane.f32.xlu0 %v3382
    %v3384 = vpop.xlane.xlu0 %3383
    %v3385 = vsub.f32 %v3353, %v3363
    %v3386 = vsub.f32 %v3354, %v3366
    %v3387 = vsub.f32 %v3355, %v3369
    %v3388 = vsub.f32 %v3356, %v3372
    %v3389 = vsub.f32 %v3357, %v3375
    %v3390 = vsub.f32 %v3358, %v3378
    %v3391 = vsub.f32 %v3359, %v3381
    %v3392 = vsub.f32 %v3360, %v3384
    %v3393 = vmul.f32 %v3385, 1.442695
    %v3394 = vpow.pop %v3393
    %v3395 = vmul.f32 %v3386, 1.442695
    %v3396 = vpow.pop %v3395
    %v3397 = vmul.f32 %v3387, 1.442695
    %v3398 = vpow.pop %v3397
    %v3399 = vmul.f32 %v3388, 1.442695
    %v3400 = vpow.pop %v3399
    %v3401 = vmul.f32 %v3389, 1.442695
    %v3402 = vpow.pop %v3401
    %v3403 = vmul.f32 %v3390, 1.442695
    %v3404 = vpow.pop %v3403
    %v3405 = vmul.f32 %v3391, 1.442695
    %v3406 = vpow.pop %v3405
    %v3407 = vmul.f32 %v3392, 1.442695
    %v3408 = vpow.pop %v3407
    %v3409 = vsel %vm1773, %v3394, 0.0
    %3410 = vadd.xlane.f32.xlu0 %v3409
    %v3411 = vpop.xlane.xlu0 %3410
    %v3412 = vsel %vm1773, %v3396, 0.0
    %3413 = vadd.xlane.f32.xlu0 %v3412
    %v3414 = vpop.xlane.xlu0 %3413
    %v3415 = vsel %vm1773, %v3398, 0.0
    %3416 = vadd.xlane.f32.xlu0 %v3415
    %v3417 = vpop.xlane.xlu0 %3416
    %v3418 = vsel %vm1773, %v3400, 0.0
    %3419 = vadd.xlane.f32.xlu0 %v3418
    %v3420 = vpop.xlane.xlu0 %3419
    %v3421 = vsel %vm1773, %v3402, 0.0
    %3422 = vadd.xlane.f32.xlu0 %v3421
    %v3423 = vpop.xlane.xlu0 %3422
    %v3424 = vsel %vm1773, %v3404, 0.0
    %3425 = vadd.xlane.f32.xlu0 %v3424
    %v3426 = vpop.xlane.xlu0 %3425
    %v3427 = vsel %vm1773, %v3406, 0.0
    %3428 = vadd.xlane.f32.xlu0 %v3427
    %v3429 = vpop.xlane.xlu0 %3428
    %v3430 = vsel %vm1773, %v3408, 0.0
    %3431 = vadd.xlane.f32.xlu0 %v3430
    %v3432 = vpop.xlane.xlu0 %3431
    %v3433 = vrcp.pop %v3411
    %v3434 = vrcp.pop %v3414
    %v3435 = vrcp.pop %v3417
    %v3436 = vrcp.pop %v3420
    %v3437 = vrcp.pop %v3423
    %v3438 = vrcp.pop %v3426
    %v3439 = vrcp.pop %v3429
    %v3440 = vrcp.pop %v3432
    %v3441 = vmul.f32 %v3394, %v3433
    %v3442 = vmul.f32 %v3396, %v3434
    %v3443 = vmul.f32 %v3398, %v3435
    %v3444 = vmul.f32 %v3400, %v3436
    %v3445 = vmul.f32 %v3402, %v3437
    %v3446 = vmul.f32 %v3404, %v3438
    %v3447 = vmul.f32 %v3406, %v3439
    %v3448 = vmul.f32 %v3408, %v3440
    %v3449 = vld [vmem:[%s13] sm:$0x1]
    %v3451 = vlaneseq
    %v3452 = vshrl.u32 %v3451, 7
    %v3453 = vsub.s32 0, %v3452
    %v3454 = vrot.slane %v3449, %v3453
    %v3456 = vmul.f32 %v3187, %v3454
    %v3457 = vmul.f32 %v3190, %v3454
    %v3458 = vmul.f32 %v3195, %v3454
    %v3459 = vmul.f32 %v3198, %v3454
    %v3460 = vmul.f32 %v3203, %v3454
    %v3461 = vmul.f32 %v3206, %v3454
    %v3462 = vmul.f32 %v3211, %v3454
    %v3463 = vmul.f32 %v3214, %v3454
    %v3464 = vpack.c.bf16 %v3457, %v3456
    %v3465 = vpack.c.bf16 %v3459, %v3458
    %v3466 = vpack.c.bf16 %v3461, %v3460
    %v3467 = vpack.c.bf16 %v3463, %v3462
    %v3468 = vpack.c.bf16 %v3442, %v3441
    %v3469 = vpack.c.bf16 %v3444, %v3443
    %v3470 = vpack.c.bf16 %v3446, %v3445
    %v3471 = vpack.c.bf16 %v3448, %v3447
    %v3472 = vld [vmem:[%s14] sm:$0x1]
    %v3474 = vlaneseq
    %v3475 = vshrl.u32 %v3474, 7
    %v3476 = vsub.s32 0, %v3475
    %v3477 = vrot.slane %v3472, %v3476
    %v3480 = vsel %vm1773, %v3468, 0
    %v3483 = vsel %vm1773, %v3469, 0
    %v3486 = vsel %vm1773, %v3470, 0
    %v3489 = vsel %vm1773, %v3471, 0
    %3491 = vmatprep.subr.bf16.mxu0 0
    %3492 = vmatpush1.bf16.msra.mxu0 %v3464
    %3493 = vmatprep.subr.bf16.mxu0 0
    %3494 = vmatpush1.bf16.msra.mxu0 %v3465
    %3495 = vmatprep.subr.bf16.mxu0 0
    %3496 = vmatpush1.bf16.msra.mxu0 %v3466
    %3497 = vmatprep.subr.bf16.mxu0 0
    %3498 = vmatpush1.bf16.msra.mxu0 %v3467
    %3499 = vmatprep.subr.bf16.mxu0 0
    %3500 = vmatpush1.bf16.msra.mxu0 0
    %3501 = vmatprep.subr.bf16.mxu0 0
    %3502 = vmatpush1.bf16.msra.mxu0 0
    %3503 = vmatprep.subr.bf16.mxu0 0
    %3504 = vmatpush1.bf16.msra.mxu0 0
    %3505 = vmatprep.subr.bf16.mxu0 0
    %3506 = vmatpush1.bf16.msra.mxu0 0
    %3507 = vmatprep.subr.bf16.mxu0 0
    %3508 = vmatpush1.bf16.msra.mxu0 0
    %3509 = vmatprep.subr.bf16.mxu0 0
    %3510 = vmatpush1.bf16.msra.mxu0 0
    %3511 = vmatprep.subr.bf16.mxu0 0
    %3512 = vmatpush1.bf16.msra.mxu0 0
    %3513 = vmatprep.subr.bf16.mxu0 0
    %3514 = vmatpush1.bf16.msra.mxu0 0
    %3515 = vmatprep.subr.bf16.mxu0 0
    %3516 = vmatpush1.bf16.msra.mxu0 0
    %3517 = vmatprep.subr.bf16.mxu0 0
    %3518 = vmatpush1.bf16.msra.mxu0 0
    %3519 = vmatprep.subr.bf16.mxu0 0
    %3520 = vmatpush1.bf16.msra.mxu0 0
    %3521 = vmatprep.subr.bf16.mxu0 0
    %3522 = vmatpush1.bf16.msra.mxu0 0
    %3523 = vmatprep.mubr.bf16.mxu0 0
    %3524 = vmatmul.mubr.bf16.gmra.mrb[0].mxu0 %v3480
    %v3525 = vpop.f32.mrb[0].mxu0
    %v3526 = vadd.f32 %v3477, %v3525
    %v3527 = vpop.f32.mrb[0].mxu0
    %v3528 = vpop.f32.mrb[0].mxu0
    %v3529 = vadd.f32 %v3477, %v3528
    %v3530 = vpop.f32.mrb[0].mxu0
    %3531 = vmatprep.mubr.bf16.mxu0 0
    %3532 = vmatmul.mubr.bf16.gmra.mrb[0].mxu0 %v3483
    %v3533 = vpop.f32.mrb[0].mxu0
    %v3534 = vadd.f32 %v3477, %v3533
    %v3535 = vpop.f32.mrb[0].mxu0
    %v3536 = vpop.f32.mrb[0].mxu0
    %v3537 = vadd.f32 %v3477, %v3536
    %v3538 = vpop.f32.mrb[0].mxu0
    %3539 = vmatprep.mubr.bf16.mxu0 0
    %3540 = vmatmul.mubr.bf16.gmra.mrb[0].mxu0 %v3486
    %v3541 = vpop.f32.mrb[0].mxu0
    %v3542 = vadd.f32 %v3477, %v3541
    %v3543 = vpop.f32.mrb[0].mxu0
    %v3544 = vpop.f32.mrb[0].mxu0
    %v3545 = vadd.f32 %v3477, %v3544
    %v3546 = vpop.f32.mrb[0].mxu0
    %3547 = vmatprep.mubr.bf16.mxu0 0
    %3548 = vmatmul.mubr.bf16.gmra.mrb[0].mxu0 %v3489
    %v3549 = vpop.f32.mrb[0].mxu0
    %v3550 = vadd.f32 %v3477, %v3549
    %v3551 = vpop.f32.mrb[0].mxu0
    %v3552 = vpop.f32.mrb[0].mxu0
    %v3553 = vadd.f32 %v3477, %v3552
    %v3554 = vpop.f32.mrb[0].mxu0
    %3555 = vdwg.mxu0
    %v3556 = vld [vmem:[%s15] sm:$0xf]
    %v3557 = vld [vmem:[%s15 + $0x4] sm:$0xf]
    %v3558 = vld [vmem:[%s15 + $0x8] sm:$0xf]
    %v3559 = vld [vmem:[%s15 + $0xc] sm:$0xf]
    %3564 = vrot.lane.b32.xlu0 %v1875, 96
    %v3565 = vpop.permute.xlu0 %3564
    %3566 = vrot.lane.b32.xlu0 %v1876, 96
    %v3567 = vpop.permute.xlu0 %3566
    %3568 = vrot.lane.b32.xlu0 %v1877, 96
    %v3569 = vpop.permute.xlu0 %3568
    %3570 = vrot.lane.b32.xlu0 %v1878, 96
    %v3571 = vpop.permute.xlu0 %3570
    %v3576 = vunpack.c.l.b16 %v3556
    %v3577 = vunpack.c.l.b16 %v3557
    %v3578 = vunpack.c.l.b16 %v3558
    %v3579 = vunpack.c.l.b16 %v3559
    %v3580 = vpack.c.b16 %v3577, %v3576
    %v3581 = vpack.c.b16 %v3579, %v3578
    %v3585 = vsel %vm1895, %v3565, 0
    %v3588 = vsel %vm1895, %v3567, 0
    %v3591 = vsel %vm1895, %v3569, 0
    %v3594 = vsel %vm1895, %v3571, 0
    %3596 = vmatprep.subr.bf16.mxu0 0
    %3597 = vmatpush1.bf16.msra.mxu0 %v3580
    %3598 = vmatprep.subr.bf16.mxu0 0
    %3599 = vmatpush1.bf16.msra.mxu0 %v3581
    %3600 = vmatprep.subr.bf16.mxu0 0
    %3601 = vmatpush1.bf16.msra.mxu0 0
    %3602 = vmatprep.subr.bf16.mxu0 0
    %3603 = vmatpush1.bf16.msra.mxu0 0
    %3604 = vmatprep.subr.bf16.mxu0 0
    %3605 = vmatpush1.bf16.msra.mxu0 0
    %3606 = vmatprep.subr.bf16.mxu0 0
    %3607 = vmatpush1.bf16.msra.mxu0 0
    %3608 = vmatprep.subr.bf16.mxu0 0
    %3609 = vmatpush1.bf16.msra.mxu0 0
    %3610 = vmatprep.subr.bf16.mxu0 0
    %3611 = vmatpush1.bf16.msra.mxu0 0
    %3612 = vmatprep.subr.bf16.mxu0 0
    %3613 = vmatpush1.bf16.msra.mxu0 0
    %3614 = vmatprep.subr.bf16.mxu0 0
    %3615 = vmatpush1.bf16.msra.mxu0 0
    %3616 = vmatprep.subr.bf16.mxu0 0
    %3617 = vmatpush1.bf16.msra.mxu0 0
    %3618 = vmatprep.subr.bf16.mxu0 0
    %3619 = vmatpush1.bf16.msra.mxu0 0
    %3620 = vmatprep.subr.bf16.mxu0 0
    %3621 = vmatpush1.bf16.msra.mxu0 0
    %3622 = vmatprep.subr.bf16.mxu0 0
    %3623 = vmatpush1.bf16.msra.mxu0 0
    %3624 = vmatprep.subr.bf16.mxu0 0
    %3625 = vmatpush1.bf16.msra.mxu0 0
    %3626 = vmatprep.subr.bf16.mxu0 0
    %3627 = vmatpush1.bf16.msra.mxu0 0
    %3628 = vmatprep.mubr.bf16.mxu0 0
    %3629 = vmatmul.mubr.bf16.gmra.mrb[0].mxu0 %v3585
    %v3630 = vpop.f32.mrb[0].mxu0
    %v3631 = vadd.f32 0.0, %v3630
    %v3632 = vpop.f32.mrb[0].mxu0
    %v3633 = vpop.f32.mrb[0].mxu0
    %v3634 = vadd.f32 0.0, %v3633
    %v3635 = vpop.f32.mrb[0].mxu0
    %3636 = vmatprep.mubr.bf16.mxu0 0
    %3637 = vmatmul.mubr.bf16.gmra.mrb[0].mxu0 %v3588
    %v3638 = vpop.f32.mrb[0].mxu0
    %v3639 = vadd.f32 0.0, %v3638
    %v3640 = vpop.f32.mrb[0].mxu0
    %v3641 = vpop.f32.mrb[0].mxu0
    %v3642 = vadd.f32 0.0, %v3641
    %v3643 = vpop.f32.mrb[0].mxu0
    %3644 = vmatprep.mubr.bf16.mxu0 0
    %3645 = vmatmul.mubr.bf16.gmra.mrb[0].mxu0 %v3591
    %v3646 = vpop.f32.mrb[0].mxu0
    %v3647 = vadd.f32 0.0, %v3646
    %v3648 = vpop.f32.mrb[0].mxu0
    %v3649 = vpop.f32.mrb[0].mxu0
    %v3650 = vadd.f32 0.0, %v3649
    %v3651 = vpop.f32.mrb[0].mxu0
    %3652 = vmatprep.mubr.bf16.mxu0 0
    %3653 = vmatmul.mubr.bf16.gmra.mrb[0].mxu0 %v3594
    %v3654 = vpop.f32.mrb[0].mxu0
    %v3655 = vadd.f32 0.0, %v3654
    %v3656 = vpop.f32.mrb[0].mxu0
    %v3657 = vpop.f32.mrb[0].mxu0
    %v3658 = vadd.f32 0.0, %v3657
    %v3659 = vpop.f32.mrb[0].mxu0
    %3660 = vdwg.mxu0
    %v3661 = vpack.c.bf16 %v3634, %v3631
    %v3662 = vpack.c.bf16 %v3642, %v3639
    %v3663 = vpack.c.bf16 %v3650, %v3647
    %v3664 = vpack.c.bf16 %v3658, %v3655
    %v3665 = vld [vmem:[%s16] sm:$0x1]
    %v3667 = vlaneseq
    %v3668 = vshrl.u32 %v3667, 7
    %v3669 = vsub.s32 0, %v3668
    %v3670 = vrot.slane %v3665, %v3669
    %v3680 = vunpack.c.l.b16 %v140
    %v3681 = vunpack.c.l.b16 %v141
    %v3682 = vunpack.c.l.b16 %v142
    %v3683 = vunpack.c.l.b16 %v143
    %v3684 = vunpack.c.l.b16 %v144
    %v3685 = vunpack.c.l.b16 %v145
    %v3686 = vunpack.c.l.b16 %v146
    %v3687 = vunpack.c.l.b16 %v147
    %v3688 = vpack.c.b16 %v3681, %v3680
    %v3689 = vpack.c.b16 %v3683, %v3682
    %v3690 = vpack.c.b16 %v3685, %v3684
    %v3691 = vpack.c.b16 %v3687, %v3686
    %v3693 = vsel %vm1773, %v3688, 0
    %v3696 = vsel %vm1773, %v3689, 0
    %v3699 = vsel %vm1773, %v3690, 0
    %v3702 = vsel %vm1773, %v3691, 0
    %3704 = vmatprep.subr.bf16.mxu0 0
    %3705 = vmatpush1.bf16.msra.mxu0 %v3661
    %3706 = vmatprep.subr.bf16.mxu0 0
    %3707 = vmatpush1.bf16.msra.mxu0 %v3662
    %3708 = vmatprep.subr.bf16.mxu0 0
    %3709 = vmatpush1.bf16.msra.mxu0 %v3663
    %3710 = vmatprep.subr.bf16.mxu0 0
    %3711 = vmatpush1.bf16.msra.mxu0 %v3664
    %3712 = vmatprep.subr.bf16.mxu0 0
    %3713 = vmatpush1.bf16.msra.mxu0 0
    %3714 = vmatprep.subr.bf16.mxu0 0
    %3715 = vmatpush1.bf16.msra.mxu0 0
    %3716 = vmatprep.subr.bf16.mxu0 0
    %3717 = vmatpush1.bf16.msra.mxu0 0
    %3718 = vmatprep.subr.bf16.mxu0 0
    %3719 = vmatpush1.bf16.msra.mxu0 0
    %3720 = vmatprep.subr.bf16.mxu0 0
    %3721 = vmatpush1.bf16.msra.mxu0 0
    %3722 = vmatprep.subr.bf16.mxu0 0
    %3723 = vmatpush1.bf16.msra.mxu0 0
    %3724 = vmatprep.subr.bf16.mxu0 0
    %3725 = vmatpush1.bf16.msra.mxu0 0
    %3726 = vmatprep.subr.bf16.mxu0 0
    %3727 = vmatpush1.bf16.msra.mxu0 0
    %3728 = vmatprep.subr.bf16.mxu0 0
    %3729 = vmatpush1.bf16.msra.mxu0 0
    %3730 = vmatprep.subr.bf16.mxu0 0
    %3731 = vmatpush1.bf16.msra.mxu0 0
    %3732 = vmatprep.subr.bf16.mxu0 0
    %3733 = vmatpush1.bf16.msra.mxu0 0
    %3734 = vmatprep.subr.bf16.mxu0 0
    %3735 = vmatpush1.bf16.msra.mxu0 0
    %3736 = vmatprep.mubr.bf16.mxu0 0
    %3737 = vmatmul.mubr.bf16.gmra.mrb[0].mxu0 %v3693
    %v3738 = vpop.f32.mrb[0].mxu0
    %v3739 = vadd.f32 %v3670, %v3738
    %v3740 = vpop.f32.mrb[0].mxu0
    %v3741 = vpop.f32.mrb[0].mxu0
    %v3742 = vadd.f32 %v3670, %v3741
    %v3743 = vpop.f32.mrb[0].mxu0
    %3744 = vmatprep.mubr.bf16.mxu0 0
    %3745 = vmatmul.mubr.bf16.gmra.mrb[0].mxu0 %v3696
    %v3746 = vpop.f32.mrb[0].mxu0
    %v3747 = vadd.f32 %v3670, %v3746
    %v3748 = vpop.f32.mrb[0].mxu0
    %v3749 = vpop.f32.mrb[0].mxu0
    %v3750 = vadd.f32 %v3670, %v3749
    %v3751 = vpop.f32.mrb[0].mxu0
    %3752 = vmatprep.mubr.bf16.mxu0 0
    %3753 = vmatmul.mubr.bf16.gmra.mrb[0].mxu0 %v3699
    %v3754 = vpop.f32.mrb[0].mxu0
    %v3755 = vadd.f32 %v3670, %v3754
    %v3756 = vpop.f32.mrb[0].mxu0
    %v3757 = vpop.f32.mrb[0].mxu0
    %v3758 = vadd.f32 %v3670, %v3757
    %v3759 = vpop.f32.mrb[0].mxu0
    %3760 = vmatprep.mubr.bf16.mxu0 0
    %3761 = vmatmul.mubr.bf16.gmra.mrb[0].mxu0 %v3702
    %v3762 = vpop.f32.mrb[0].mxu0
    %v3763 = vadd.f32 %v3670, %v3762
    %v3764 = vpop.f32.mrb[0].mxu0
    %v3765 = vpop.f32.mrb[0].mxu0
    %v3766 = vadd.f32 %v3670, %v3765
    %v3767 = vpop.f32.mrb[0].mxu0
    %3768 = vdwg.mxu0
    %v3769 = vpack.c.bf16 %v3742, %v3739
    %v3770 = vpack.c.bf16 %v3750, %v3747
    %v3771 = vpack.c.bf16 %v3758, %v3755
    %v3772 = vpack.c.bf16 %v3766, %v3763
    %v3773 = vld [vmem:[%s17] sm:$0xf]
    %v3774 = vld [vmem:[%s17 + $0x4] sm:$0xf]
    %v3775 = vld [vmem:[%s17 + $0x8] sm:$0xf]
    %v3776 = vld [vmem:[%s17 + $0xc] sm:$0xf]
    %v3781 = vunpack.c.l.b16 %v3773
    %v3782 = vunpack.c.l.b16 %v3774
    %v3783 = vunpack.c.l.b16 %v3775
    %v3784 = vunpack.c.l.b16 %v3776
    %v3785 = vpack.c.b16 %v3782, %v3781
    %v3786 = vpack.c.b16 %v3784, %v3783
    %v3790 = vsel %vm1895, %v3769, 0
    %v3793 = vsel %vm1895, %v3770, 0
    %v3796 = vsel %vm1895, %v3771, 0
    %v3799 = vsel %vm1895, %v3772, 0
    %3801 = vmatprep.subr.bf16.mxu0 0
    %3802 = vmatpush1.bf16.msra.mxu0 %v3785
    %3803 = vmatprep.subr.bf16.mxu0 0
    %3804 = vmatpush1.bf16.msra.mxu0 %v3786
    %3805 = vmatprep.subr.bf16.mxu0 0
    %3806 = vmatpush1.bf16.msra.mxu0 0
    %3807 = vmatprep.subr.bf16.mxu0 0
    %3808 = vmatpush1.bf16.msra.mxu0 0
    %3809 = vmatprep.subr.bf16.mxu0 0
    %3810 = vmatpush1.bf16.msra.mxu0 0
    %3811 = vmatprep.subr.bf16.mxu0 0
    %3812 = vmatpush1.bf16.msra.mxu0 0
    %3813 = vmatprep.subr.bf16.mxu0 0
    %3814 = vmatpush1.bf16.msra.mxu0 0
    %3815 = vmatprep.subr.bf16.mxu0 0
    %3816 = vmatpush1.bf16.msra.mxu0 0
    %3817 = vmatprep.subr.bf16.mxu0 0
    %3818 = vmatpush1.bf16.msra.mxu0 0
    %3819 = vmatprep.subr.bf16.mxu0 0
    %3820 = vmatpush1.bf16.msra.mxu0 0
    %3821 = vmatprep.subr.bf16.mxu0 0
    %3822 = vmatpush1.bf16.msra.mxu0 0
    %3823 = vmatprep.subr.bf16.mxu0 0
    %3824 = vmatpush1.bf16.msra.mxu0 0
    %3825 = vmatprep.subr.bf16.mxu0 0
    %3826 = vmatpush1.bf16.msra.mxu0 0
    %3827 = vmatprep.subr.bf16.mxu0 0
    %3828 = vmatpush1.bf16.msra.mxu0 0
    %3829 = vmatprep.subr.bf16.mxu0 0
    %3830 = vmatpush1.bf16.msra.mxu0 0
    %3831 = vmatprep.subr.bf16.mxu0 0
    %3832 = vmatpush1.bf16.msra.mxu0 0
    %3833 = vmatprep.mubr.bf16.mxu0 0
    %3834 = vmatmul.mubr.bf16.gmra.mrb[0].mxu0 %v3790
    %v3835 = vpop.f32.mrb[0].mxu0
    %v3836 = vadd.f32 0.0, %v3835
    %v3837 = vpop.f32.mrb[0].mxu0
    %v3838 = vpop.f32.mrb[0].mxu0
    %v3839 = vadd.f32 0.0, %v3838
    %v3840 = vpop.f32.mrb[0].mxu0
    %3841 = vmatprep.mubr.bf16.mxu0 0
    %3842 = vmatmul.mubr.bf16.gmra.mrb[0].mxu0 %v3793
    %v3843 = vpop.f32.mrb[0].mxu0
    %v3844 = vadd.f32 0.0, %v3843
    %v3845 = vpop.f32.mrb[0].mxu0
    %v3846 = vpop.f32.mrb[0].mxu0
    %v3847 = vadd.f32 0.0, %v3846
    %v3848 = vpop.f32.mrb[0].mxu0
    %3849 = vmatprep.mubr.bf16.mxu0 0
    %3850 = vmatmul.mubr.bf16.gmra.mrb[0].mxu0 %v3796
    %v3851 = vpop.f32.mrb[0].mxu0
    %v3852 = vadd.f32 0.0, %v3851
    %v3853 = vpop.f32.mrb[0].mxu0
    %v3854 = vpop.f32.mrb[0].mxu0
    %v3855 = vadd.f32 0.0, %v3854
    %v3856 = vpop.f32.mrb[0].mxu0
    %3857 = vmatprep.mubr.bf16.mxu0 0
    %3858 = vmatmul.mubr.bf16.gmra.mrb[0].mxu0 %v3799
    %v3859 = vpop.f32.mrb[0].mxu0
    %v3860 = vadd.f32 0.0, %v3859
    %v3861 = vpop.f32.mrb[0].mxu0
    %v3862 = vpop.f32.mrb[0].mxu0
    %v3863 = vadd.f32 0.0, %v3862
    %v3864 = vpop.f32.mrb[0].mxu0
    %3865 = vdwg.mxu0
    %v3866 = vpack.c.bf16 %v3839, %v3836
    %v3867 = vpack.c.bf16 %v3847, %v3844
    %v3868 = vpack.c.bf16 %v3855, %v3852
    %v3869 = vpack.c.bf16 %v3863, %v3860
    %v3870 = vld [vmem:[%s18] sm:$0x1]
    %v3872 = vlaneseq
    %v3873 = vshrl.u32 %v3872, 7
    %v3874 = vsub.s32 0, %v3873
    %v3875 = vrot.slane %v3870, %v3874
    %3877 = vmatprep.subr.bf16.mxu0 0
    %3878 = vmatpush1.bf16.msra.mxu0 %v3866
    %3879 = vmatprep.subr.bf16.mxu0 0
    %3880 = vmatpush1.bf16.msra.mxu0 %v3867
    %3881 = vmatprep.subr.bf16.mxu0 0
    %3882 = vmatpush1.bf16.msra.mxu0 %v3868
    %3883 = vmatprep.subr.bf16.mxu0 0
    %3884 = vmatpush1.bf16.msra.mxu0 %v3869
    %3885 = vmatprep.subr.bf16.mxu0 0
    %3886 = vmatpush1.bf16.msra.mxu0 0
    %3887 = vmatprep.subr.bf16.mxu0 0
    %3888 = vmatpush1.bf16.msra.mxu0 0
    %3889 = vmatprep.subr.bf16.mxu0 0
    %3890 = vmatpush1.bf16.msra.mxu0 0
    %3891 = vmatprep.subr.bf16.mxu0 0
    %3892 = vmatpush1.bf16.msra.mxu0 0
    %3893 = vmatprep.subr.bf16.mxu0 0
    %3894 = vmatpush1.bf16.msra.mxu0 0
    %3895 = vmatprep.subr.bf16.mxu0 0
    %3896 = vmatpush1.bf16.msra.mxu0 0
    %3897 = vmatprep.subr.bf16.mxu0 0
    %3898 = vmatpush1.bf16.msra.mxu0 0
    %3899 = vmatprep.subr.bf16.mxu0 0
    %3900 = vmatpush1.bf16.msra.mxu0 0
    %3901 = vmatprep.subr.bf16.mxu0 0
    %3902 = vmatpush1.bf16.msra.mxu0 0
    %3903 = vmatprep.subr.bf16.mxu0 0
    %3904 = vmatpush1.bf16.msra.mxu0 0
    %3905 = vmatprep.subr.bf16.mxu0 0
    %3906 = vmatpush1.bf16.msra.mxu0 0
    %3907 = vmatprep.subr.bf16.mxu0 0
    %3908 = vmatpush1.bf16.msra.mxu0 0
    %3909 = vmatprep.mubr.bf16.mxu0 0
    %3910 = vmatmul.mubr.bf16.gmra.mrb[0].mxu0 %v3693
    %v3911 = vpop.f32.mrb[0].mxu0
    %v3912 = vadd.f32 %v3875, %v3911
    %v3913 = vpop.f32.mrb[0].mxu0
    %v3914 = vpop.f32.mrb[0].mxu0
    %v3915 = vadd.f32 %v3875, %v3914
    %v3916 = vpop.f32.mrb[0].mxu0
    %3917 = vmatprep.mubr.bf16.mxu0 0
    %3918 = vmatmul.mubr.bf16.gmra.mrb[0].mxu0 %v3696
    %v3919 = vpop.f32.mrb[0].mxu0
    %v3920 = vadd.f32 %v3875, %v3919
    %v3921 = vpop.f32.mrb[0].mxu0
    %v3922 = vpop.f32.mrb[0].mxu0
    %v3923 = vadd.f32 %v3875, %v3922
    %v3924 = vpop.f32.mrb[0].mxu0
    %3925 = vmatprep.mubr.bf16.mxu0 0
    %3926 = vmatmul.mubr.bf16.gmra.mrb[0].mxu0 %v3699
    %v3927 = vpop.f32.mrb[0].mxu0
    %v3928 = vadd.f32 %v3875, %v3927
    %v3929 = vpop.f32.mrb[0].mxu0
    %v3930 = vpop.f32.mrb[0].mxu0
    %v3931 = vadd.f32 %v3875, %v3930
    %v3932 = vpop.f32.mrb[0].mxu0
    %3933 = vmatprep.mubr.bf16.mxu0 0
    %3934 = vmatmul.mubr.bf16.gmra.mrb[0].mxu0 %v3702
    %v3935 = vpop.f32.mrb[0].mxu0
    %v3936 = vadd.f32 %v3875, %v3935
    %v3937 = vpop.f32.mrb[0].mxu0
    %v3938 = vpop.f32.mrb[0].mxu0
    %v3939 = vadd.f32 %v3875, %v3938
    %v3940 = vpop.f32.mrb[0].mxu0
    %3941 = vdwg.mxu0
    %3950 = vrot.lane.b32.xlu0 %v3912, 32
    %v3951 = vpop.permute.xlu0 %3950
    %3952 = vrot.lane.b32.xlu0 %v3915, 32
    %v3953 = vpop.permute.xlu0 %3952
    %3954 = vrot.lane.b32.xlu0 %v3920, 32
    %v3955 = vpop.permute.xlu0 %3954
    %3956 = vrot.lane.b32.xlu0 %v3923, 32
    %v3957 = vpop.permute.xlu0 %3956
    %3958 = vrot.lane.b32.xlu0 %v3928, 32
    %v3959 = vpop.permute.xlu0 %3958
    %3960 = vrot.lane.b32.xlu0 %v3931, 32
    %v3961 = vpop.permute.xlu0 %3960
    %3962 = vrot.lane.b32.xlu0 %v3936, 32
    %v3963 = vpop.permute.xlu0 %3962
    %3964 = vrot.lane.b32.xlu0 %v3939, 32
    %v3965 = vpop.permute.xlu0 %3964
    %v3974 = vsel %vm1895, %v3526, %v3951
    %v3975 = vsel %vm1895, %v3529, %v3953
    %v3976 = vsel %vm1895, %v3534, %v3955
    %v3977 = vsel %vm1895, %v3537, %v3957
    %v3978 = vsel %vm1895, %v3542, %v3959
    %v3979 = vsel %vm1895, %v3545, %v3961
    %v3980 = vsel %vm1895, %v3550, %v3963
    %v3981 = vsel %vm1895, %v3553, %v3965
    %v3982 = vpack.c.bf16 %v3975, %v3974
    %v3983 = vpack.c.bf16 %v3977, %v3976
    %v3984 = vpack.c.bf16 %v3979, %v3978
    %v3985 = vpack.c.bf16 %v3981, %v3980
    %v3986 = vld [vmem:[%s19] sm:$0xf]
    %v3987 = vld [vmem:[%s19 + $0x4] sm:$0xf]
    %v3988 = vld [vmem:[%s19 + $0x8] sm:$0xf]
    %v3989 = vld [vmem:[%s19 + $0xc] sm:$0xf]
    %v3990 = vld [vmem:[%s19 + $0x10] sm:$0xf]
    %v3991 = vld [vmem:[%s19 + $0x14] sm:$0xf]
    %v3992 = vld [vmem:[%s19 + $0x18] sm:$0xf]
    %v3993 = vld [vmem:[%s19 + $0x1c] sm:$0xf]
    %v3994 = vld [vmem:[%s20] sm:$0x1]
    %v3996 = vlaneseq
    %v3997 = vshrl.u32 %v3996, 7
    %v3998 = vsub.s32 0, %v3997
    %v3999 = vrot.slane %v3994, %v3998
    %v4009 = vunpack.c.l.b16 %v3986
    %v4010 = vunpack.c.l.b16 %v3987
    %v4011 = vunpack.c.l.b16 %v3988
    %v4012 = vunpack.c.l.b16 %v3989
    %v4013 = vunpack.c.l.b16 %v3990
    %v4014 = vunpack.c.l.b16 %v3991
    %v4015 = vunpack.c.l.b16 %v3992
    %v4016 = vunpack.c.l.b16 %v3993
    %v4017 = vpack.c.b16 %v4010, %v4009
    %v4018 = vpack.c.b16 %v4012, %v4011
    %v4019 = vpack.c.b16 %v4014, %v4013
    %v4020 = vpack.c.b16 %v4016, %v4015
    %v4026 = vsel %vm1773, %v3982, 0
    %v4029 = vsel %vm1773, %v3983, 0
    %v4032 = vsel %vm1773, %v3984, 0
    %v4035 = vsel %vm1773, %v3985, 0
    %4037 = vmatprep.subr.bf16.mxu0 0
    %4038 = vmatpush1.bf16.msra.mxu0 %v4017
    %4039 = vmatprep.subr.bf16.mxu0 0
    %4040 = vmatpush1.bf16.msra.mxu0 %v4018
    %4041 = vmatprep.subr.bf16.mxu0 0
    %4042 = vmatpush1.bf16.msra.mxu0 %v4019
    %4043 = vmatprep.subr.bf16.mxu0 0
    %4044 = vmatpush1.bf16.msra.mxu0 %v4020
    %4045 = vmatprep.subr.bf16.mxu0 0
    %4046 = vmatpush1.bf16.msra.mxu0 0
    %4047 = vmatprep.subr.bf16.mxu0 0
    %4048 = vmatpush1.bf16.msra.mxu0 0
    %4049 = vmatprep.subr.bf16.mxu0 0
    %4050 = vmatpush1.bf16.msra.mxu0 0
    %4051 = vmatprep.subr.bf16.mxu0 0
    %4052 = vmatpush1.bf16.msra.mxu0 0
    %4053 = vmatprep.subr.bf16.mxu0 0
    %4054 = vmatpush1.bf16.msra.mxu0 0
    %4055 = vmatprep.subr.bf16.mxu0 0
    %4056 = vmatpush1.bf16.msra.mxu0 0
    %4057 = vmatprep.subr.bf16.mxu0 0
    %4058 = vmatpush1.bf16.msra.mxu0 0
    %4059 = vmatprep.subr.bf16.mxu0 0
    %4060 = vmatpush1.bf16.msra.mxu0 0
    %4061 = vmatprep.subr.bf16.mxu0 0
    %4062 = vmatpush1.bf16.msra.mxu0 0
    %4063 = vmatprep.subr.bf16.mxu0 0
    %4064 = vmatpush1.bf16.msra.mxu0 0
    %4065 = vmatprep.subr.bf16.mxu0 0
    %4066 = vmatpush1.bf16.msra.mxu0 0
    %4067 = vmatprep.subr.bf16.mxu0 0
    %4068 = vmatpush1.bf16.msra.mxu0 0
    %4069 = vmatprep.mubr.bf16.mxu0 0
    %4070 = vmatmul.mubr.bf16.gmra.mrb[0].mxu0 %v4026
    %v4071 = vpop.f32.mrb[0].mxu0
    %v4072 = vadd.f32 %v3999, %v4071
    %v4073 = vpop.f32.mrb[0].mxu0
    %v4074 = vpop.f32.mrb[0].mxu0
    %v4075 = vadd.f32 %v3999, %v4074
    %v4076 = vpop.f32.mrb[0].mxu0
    %4077 = vmatprep.mubr.bf16.mxu0 0
    %4078 = vmatmul.mubr.bf16.gmra.mrb[0].mxu0 %v4029
    %v4079 = vpop.f32.mrb[0].mxu0
    %v4080 = vadd.f32 %v3999, %v4079
    %v4081 = vpop.f32.mrb[0].mxu0
    %v4082 = vpop.f32.mrb[0].mxu0
    %v4083 = vadd.f32 %v3999, %v4082
    %v4084 = vpop.f32.mrb[0].mxu0
    %4085 = vmatprep.mubr.bf16.mxu0 0
    %4086 = vmatmul.mubr.bf16.gmra.mrb[0].mxu0 %v4032
    %v4087 = vpop.f32.mrb[0].mxu0
    %v4088 = vadd.f32 %v3999, %v4087
    %v4089 = vpop.f32.mrb[0].mxu0
    %v4090 = vpop.f32.mrb[0].mxu0
    %v4091 = vadd.f32 %v3999, %v4090
    %v4092 = vpop.f32.mrb[0].mxu0
    %4093 = vmatprep.mubr.bf16.mxu0 0
    %4094 = vmatmul.mubr.bf16.gmra.mrb[0].mxu0 %v4035
    %v4095 = vpop.f32.mrb[0].mxu0
    %v4096 = vadd.f32 %v3999, %v4095
    %v4097 = vpop.f32.mrb[0].mxu0
    %v4098 = vpop.f32.mrb[0].mxu0
    %v4099 = vadd.f32 %v3999, %v4098
    %v4100 = vpop.f32.mrb[0].mxu0
    %4101 = vdwg.mxu0
    %vm4102 = vcmp.gt.f32.partialorder %v4072, 0.0
    %vm4103 = vcmp.gt.f32.partialorder %v4075, 0.0
    %vm4104 = vcmp.gt.f32.partialorder %v4080, 0.0
    %vm4105 = vcmp.gt.f32.partialorder %v4083, 0.0
    %vm4106 = vcmp.gt.f32.partialorder %v4088, 0.0
    %vm4107 = vcmp.gt.f32.partialorder %v4091, 0.0
    %vm4108 = vcmp.gt.f32.partialorder %v4096, 0.0
    %vm4109 = vcmp.gt.f32.partialorder %v4099, 0.0
    %v4110 = vmul.f32 %v4072, 0.01
    %v4111 = vmul.f32 %v4075, 0.01
    %v4112 = vmul.f32 %v4080, 0.01
    %v4113 = vmul.f32 %v4083, 0.01
    %v4114 = vmul.f32 %v4088, 0.01
    %v4115 = vmul.f32 %v4091, 0.01
    %v4116 = vmul.f32 %v4096, 0.01
    %v4117 = vmul.f32 %v4099, 0.01
    %v4118 = vsel %vm4102, %v4072, %v4110
    %v4119 = vsel %vm4103, %v4075, %v4111
    %v4120 = vsel %vm4104, %v4080, %v4112
    %v4121 = vsel %vm4105, %v4083, %v4113
    %v4122 = vsel %vm4106, %v4088, %v4114
    %v4123 = vsel %vm4107, %v4091, %v4115
    %v4124 = vsel %vm4108, %v4096, %v4116
    %v4125 = vsel %vm4109, %v4099, %v4117
    %v4126 = vld [vmem:[%s21] sm:$0xf]
    %v4127 = vpack.c.bf16 %v4119, %v4118
    %v4128 = vpack.c.bf16 %v4121, %v4120
    %v4129 = vpack.c.bf16 %v4123, %v4122
    %v4130 = vpack.c.bf16 %v4125, %v4124
    %v4131 = vpack.c.bf16 0.0, 0.0
    %v4132 = vld [vmem:[%s22] sm:$0xff]
    %4134 = vset.pattern.permute.xlu0 0
    %4135 = vperm.xlu0 %4134, %v4132
    %v4136 = vpop.permute.xlu0 %4135
    %v4139 = vsel %vm1773, %v4126, 0
    %v4142 = vsel %vm1773, %v4127, 0
    %v4145 = vsel %vm1773, %v4128, 0
    %v4148 = vsel %vm1773, %v4129, 0
    %v4151 = vsel %vm1773, %v4130, 0
    %v4154 = vsel %vm1773, %v4131, 0
    %4156 = vmatprep.subr.bf16.mxu0 0
    %4157 = vmatpush1.bf16.xpose.msra.mxu0 %v4142
    %4158 = vmatprep.subr.bf16.mxu0 0
    %4159 = vmatpush1.bf16.xpose.msra.mxu0 %v4145
    %4160 = vmatprep.subr.bf16.mxu0 0
    %4161 = vmatpush1.bf16.xpose.msra.mxu0 %v4148
    %4162 = vmatprep.subr.bf16.mxu0 0
    %4163 = vmatpush1.bf16.xpose.msra.mxu0 %v4151
    %4164 = vmatprep.subr.bf16.mxu0 0
    %4165 = vmatpush1.bf16.xpose.msra.mxu0 %v4154
    %4166 = vmatprep.subr.bf16.mxu0 0
    %4167 = vmatpush1.bf16.xpose.msra.mxu0 %v4154
    %4168 = vmatprep.subr.bf16.mxu0 0
    %4169 = vmatpush1.bf16.xpose.msra.mxu0 %v4154
    %4170 = vmatprep.subr.bf16.mxu0 0
    %4171 = vmatpush1.bf16.xpose.msra.mxu0 %v4154
    %4172 = vmatprep.subr.bf16.mxu0 0
    %4173 = vmatpush1.bf16.xpose.msra.mxu0 0
    %4174 = vmatprep.subr.bf16.mxu0 0
    %4175 = vmatpush1.bf16.xpose.msra.mxu0 0
    %4176 = vmatprep.subr.bf16.mxu0 0
    %4177 = vmatpush1.bf16.xpose.msra.mxu0 0
    %4178 = vmatprep.subr.bf16.mxu0 0
    %4179 = vmatpush1.bf16.xpose.msra.mxu0 0
    %4180 = vmatprep.subr.bf16.mxu0 0
    %4181 = vmatpush1.bf16.xpose.msra.mxu0 0
    %4182 = vmatprep.subr.bf16.mxu0 0
    %4183 = vmatpush1.bf16.xpose.msra.mxu0 0
    %4184 = vmatprep.subr.bf16.mxu0 0
    %4185 = vmatpush1.bf16.xpose.msra.mxu0 0
    %4186 = vmatprep.subr.bf16.mxu0 0
    %4187 = vmatpush1.bf16.xpose.msra.mxu0 0
    %4188 = vmatprep.mubr.bf16.mxu0 0
    %4189 = vmatmul.mubr.bf16.gmra.mrb[0].mxu0 %v4139
    %v4190 = vpop.f32.mrb[0].mxu0
    %v4191 = vadd.f32 %v4136, %v4190
    %v4192 = vpop.f32.mrb[0].mxu0
    %v4193 = vpop.f32.mrb[0].mxu0
    %v4194 = vpop.f32.mrb[0].mxu0
    %4195 = vdwg.mxu0
    %4196 = vst [vmem:[#allocation2] sm:$0xff] %v4191
    // Predicated region
    $region94: #{tpu_custom_call.1} parent=1 // pred_check
      _
    $region95: #{tpu_custom_call.1} parent=1 // pred_check_branch
      %4198 = sbr.rel (0) target = $region97
    $region96: #{tpu_custom_call.1} parent=1 // pred_region
      %s4200 = ssub.s32 128, 128
      %4201 = vsyncadd [#allocation3], %s4200
      %s4203 = sshll.u32 [#allocation2], 4
      %s4204 = int_to_ptr.vmem [resolvable:$true] %s4203
      %4206 = dma.vmem_to_hbm [thread:$0]  %s4204, 128, %s23, [#allocation3]
    $region97: #{tpu_custom_call.1} parent=1 // pred_fallthru
      _
    // Predicated region
    $region98: #{tpu_custom_call.1} parent=1 // pred_check
      _
    $region99: #{tpu_custom_call.1} parent=1 // pred_check_branch
      %4208 = sbr.rel (0) target = $region101
    $region100: #{tpu_custom_call.1} parent=1 // pred_region
      %4209 = dma.done [#allocation3], 128
    $region101: #{tpu_custom_call.1} parent=1 // pred_fallthru
      _
    %4210 = vsyncpa [#allocation3], 1

</llo_original>
